<compile_context>
chip_gen: v7x
topology: tpu7x:2x2x1
jax: 0.10.0
libtpu: 0.0.40
codegen_flags: <defaults>
</compile_context>

<pallas_src>
import functools

import jax
import jax.numpy as jnp
from jax import lax
from jax.experimental import pallas as pl
from jax.experimental.pallas import tpu as pltpu

FC_DIM = 2048
BN_EPS = 1e-5
LRELU_SLOPE = 0.02


def _bn_lrelu(y, gamma, beta):
    """BatchNorm1d (batch stats, biased var, one pass) + LeakyReLU(0.02)."""
    mean = jnp.mean(y, axis=0, keepdims=True)
    mean_sq = jnp.mean(y * y, axis=0, keepdims=True)
    var = mean_sq - mean * mean
    yhat = (y - mean) * lax.rsqrt(var + BN_EPS) * gamma + beta
    return jnp.where(yhat >= 0, yhat, LRELU_SLOPE * yhat)


# ---------------------------------------------------------------------------
# Fused kernel: the whole network in one pallas_call.
#   grid = (FC_DIM // tile_n,)  over layer-2 output-feature tiles.
# ---------------------------------------------------------------------------
def _disc_fused_kernel(
    x_ref,      # (B, nz)        full, resident across grid
    w1_ref,     # (nz, FC_DIM)   full, resident across grid
    g1_ref,     # (1, FC_DIM)
    be1_ref,    # (1, FC_DIM)
    w2_ref,     # (FC_DIM, TN)   streamed tile
    g2_ref,     # (1, TN)
    be2_ref,    # (1, TN)
    w3_ref,     # (1, TN)        row-slice of the final projection
    b3_ref,     # (1, 1)
    o_ref,      # (B, 1)         resident accumulator (same block every step)
    h1_ref,     # VMEM scratch (B, FC_DIM): layer-1 activations
):
    j = pl.program_id(0)

    @pl.when(j == 0)
    def _():
        # Layer 1 (tiny: nz x 2048 weight), computed once, kept in VMEM scratch.
        y1 = jnp.dot(x_ref[...], w1_ref[...], preferred_element_type=jnp.float32)
        h1_ref[...] = _bn_lrelu(y1, g1_ref[...], be1_ref[...])
        # Initialize the output accumulator with the final-layer bias.
        o_ref[...] = jnp.zeros_like(o_ref) + b3_ref[...]

    # Layer 2 tile: Linear(2048 -> TN) + BN + LeakyReLU.
    y2 = jnp.dot(h1_ref[...], w2_ref[...], preferred_element_type=jnp.float32)
    h2 = _bn_lrelu(y2, g2_ref[...], be2_ref[...])

    # Layer 3 partial (2048 -> 1) on the VPU/XLU: no MXU lane padding for N=1.
    o_ref[...] += jnp.sum(h2 * w3_ref[...], axis=1, keepdims=True)


def disc_high_fc_pallas(x, params, *, tile_n=512):
    B, nz = x.shape
    N = FC_DIM
    assert N % tile_n == 0
    num_tiles = N // tile_n

    return pl.pallas_call(
        _disc_fused_kernel,
        out_shape=jax.ShapeDtypeStruct((B, 1), jnp.float32),
        grid_spec=pltpu.PrefetchScalarGridSpec(
            num_scalar_prefetch=0,
            grid=(num_tiles,),
            in_specs=[
                pl.BlockSpec((B, nz), lambda j: (0, 0)),        # x   (resident)
                pl.BlockSpec((nz, N), lambda j: (0, 0)),        # w1  (resident)
                pl.BlockSpec((1, N), lambda j: (0, 0)),         # gamma1
                pl.BlockSpec((1, N), lambda j: (0, 0)),         # beta1
                pl.BlockSpec((N, tile_n), lambda j: (0, j)),    # w2 tile (streamed)
                pl.BlockSpec((1, tile_n), lambda j: (0, j)),    # gamma2 tile
                pl.BlockSpec((1, tile_n), lambda j: (0, j)),    # beta2 tile
                pl.BlockSpec((1, tile_n), lambda j: (0, j)),    # w3 row tile
                pl.BlockSpec((1, 1), lambda j: (0, 0)),         # b3
            ],
            # Same output block every step => accumulator resident in VMEM,
            # written back to HBM once after the last grid step.
            out_specs=pl.BlockSpec((B, 1), lambda j: (0, 0)),
            scratch_shapes=[pltpu.VMEM((B, N), jnp.float32)],   # h1
        ),
        compiler_params=pltpu.CompilerParams(
            # Reduction over the grid axis (output accumulator) => "arbitrary".
            dimension_semantics=("arbitrary",),
            vmem_limit_bytes=32 << 20,   # actual footprint ~10 MiB at tile_n=512
        ),
    )(
        x,
        params["w1"], params["g1"], params["be1"],
        params["w2"], params["g2"], params["be2"],
        params["w3_row"], params["b3"],
    )


@functools.partial(jax.jit, static_argnames=("batch_size", "tile_n"))
def disc_high_fc_forward(z, params, *, batch_size, tile_n=512):
    x = z.reshape(batch_size, -1).astype(jnp.float32)   # z.view(B, -1)
    return disc_high_fc_pallas(x, params, tile_n=tile_n)


# ---------------------------------------------------------------------------
# Parameter construction (deterministic, mimics PyTorch default init scheme).
# b1/b2 exist (and are used by the reference) but are NOT needed by the kernel:
# they cancel exactly inside the following BatchNorm.
# ---------------------------------------------------------------------------
def init_params(key, nz):
    def lin_init(k, fan_in, fan_out):
        kw, kb = jax.random.split(k)
        bound = 1.0 / jnp.sqrt(fan_in)
        w = jax.random.uniform(kw, (fan_in, fan_out), jnp.float32, -bound, bound)
        b = jax.random.uniform(kb, (1, fan_out), jnp.float32, -bound, bound)
        return w, b

    k1, k2, k3 = jax.random.split(key, 3)
    w1, b1 = lin_init(k1, nz, FC_DIM)
    w2, b2 = lin_init(k2, FC_DIM, FC_DIM)
    w3, b3 = lin_init(k3, FC_DIM, 1)
    # BatchNorm1d default affine init: gamma = 1, beta = 0
    g1 = jnp.ones((1, FC_DIM), jnp.float32)
    be1 = jnp.zeros((1, FC_DIM), jnp.float32)
    g2 = jnp.ones((1, FC_DIM), jnp.float32)
    be2 = jnp.zeros((1, FC_DIM), jnp.float32)
    return dict(
        w1=w1, b1=b1, g1=g1, be1=be1,
        w2=w2, b2=b2, g2=g2, be2=be2,
        w3_row=w3.T,          # (1, FC_DIM) row layout for the VPU reduce
        b3=b3,                # (1, 1)
    )


# ---------------------------------------------------------------------------
# Pure-JAX reference (includes the pre-BN biases, two-pass variance).
# ---------------------------------------------------------------------------
def reference_forward(z, params, batch_size):
    x = z.reshape(batch_size, -1).astype(jnp.float32)

    def block(x, w, b, g, be):
        y = x @ w + b
        m = jnp.mean(y, axis=0, keepdims=True)
        v = jnp.mean(jnp.square(y - m), axis=0, keepdims=True)  # biased var
        yh = (y - m) * lax.rsqrt(v + BN_EPS) * g + be
        return jnp.where(yh >= 0, yh, LRELU_SLOPE * yh)

    h1 = block(x, params["w1"], params["b1"], params["g1"], params["be1"])
    h2 = block(h1, params["w2"], params["b2"], params["g2"], params["be2"])
    return h2 @ params["w3_row"].T + params["b3"]


if __name__ == "__main__":
    B, NZ = 4, 64  # small batch / latent dim; FC_DIM stays 2048 per the module
    key = jax.random.PRNGKey(0)
    kz, kp = jax.random.split(key)
    z = jax.random.normal(kz, (B, NZ, 1, 1), jnp.float32)  # latent-shaped input
    params = init_params(kp, NZ)

    out = disc_high_fc_forward(z, params, batch_size=B)
    out = jax.block_until_ready(out)
    assert out.shape == (B, 1), out.shape

    ref = reference_forward(z, params, B)
    # Float-noise-only differences (chunked final reduce, one-pass var, MXU path).
    assert jnp.allclose(out, ref, atol=1e-3, rtol=1e-3), (out, ref)

    print("KERNEL_OK")
</pallas_src>

<mosaic_0001>
module attributes {stable_mosaic.version = 11 : i64} {
  func.func @_disc_fused_kernel(%arg0: i32, %arg1: memref<4x64xf32, #tpu.memory_space<vmem>>, %arg2: memref<64x2048xf32, #tpu.memory_space<vmem>>, %arg3: memref<1x2048xf32, #tpu.memory_space<vmem>>, %arg4: memref<1x2048xf32, #tpu.memory_space<vmem>>, %arg5: memref<2048x512xf32, #tpu.memory_space<vmem>>, %arg6: memref<1x512xf32, #tpu.memory_space<vmem>>, %arg7: memref<1x512xf32, #tpu.memory_space<vmem>>, %arg8: memref<1x512xf32, #tpu.memory_space<vmem>>, %arg9: memref<1x1xf32, #tpu.memory_space<vmem>>, %arg10: memref<4x1xf32, #tpu.memory_space<vmem>>, %arg11: memref<4x2048xf32, #tpu.memory_space<vmem>>) attributes {dimension_semantics = [#tpu.dimension_semantics<arbitrary>], iteration_bounds = array<i64: 4>, scalar_prefetch = 0 : i64, scratch_operands = 1 : i64, tpu.core_type = #tpu.core_type<tc>, window_params = [{pipeline_mode = #tpu.pipeline_mode<synchronous>, transform_indices = @transform_0, window_bounds = array<i64: 4, 64>}, {pipeline_mode = #tpu.pipeline_mode<synchronous>, transform_indices = @transform_1, window_bounds = array<i64: 64, 2048>}, {pipeline_mode = #tpu.pipeline_mode<synchronous>, transform_indices = @transform_2, window_bounds = array<i64: 1, 2048>}, {pipeline_mode = #tpu.pipeline_mode<synchronous>, transform_indices = @transform_3, window_bounds = array<i64: 1, 2048>}, {transform_indices = @transform_4, window_bounds = array<i64: 2048, 512>}, {transform_indices = @transform_5, window_bounds = array<i64: 1, 512>}, {transform_indices = @transform_6, window_bounds = array<i64: 1, 512>}, {transform_indices = @transform_7, window_bounds = array<i64: 1, 512>}, {pipeline_mode = #tpu.pipeline_mode<synchronous>, transform_indices = @transform_8, window_bounds = array<i64: 1, 1>}, {pipeline_mode = #tpu.pipeline_mode<synchronous>, transform_indices = @transform_9, window_bounds = array<i64: 4, 1>}]} {
    %c0_i32 = arith.constant 0 : i32
    %0 = arith.cmpi eq, %arg0, %c0_i32 : i32
    %1 = arith.extui %0 : i1 to i32
    %c0_i32_0 = arith.constant 0 : i32
    %2 = arith.cmpi ne, %1, %c0_i32_0 : i32
    scf.if %2 {
      %c0_22 = arith.constant 0 : index
      %c0_23 = arith.constant 0 : index
      %43 = vector.load %arg1[%c0_22, %c0_23] : memref<4x64xf32, #tpu.memory_space<vmem>>, vector<4x64xf32>
      %c0_24 = arith.constant 0 : index
      %c0_25 = arith.constant 0 : index
      %44 = vector.load %arg2[%c0_24, %c0_25] : memref<64x2048xf32, #tpu.memory_space<vmem>>, vector<64x2048xf32>
      %cst_26 = arith.constant dense<0.000000e+00> : vector<4x2048xf32>
      %45 = tpu.matmul %43, %44, %cst_26 {dimension_numbers = #tpu.dot_dimension_numbers<[1], [0], [0], [1], [0, 0, 1, 1], [], []>} : vector<4x64xf32>, vector<64x2048xf32>, vector<4x2048xf32> -> vector<4x2048xf32>
      %c0_27 = arith.constant 0 : index
      %c0_28 = arith.constant 0 : index
      %46 = vector.load %arg3[%c0_27, %c0_28] : memref<1x2048xf32, #tpu.memory_space<vmem>>, vector<1x2048xf32>
      %c0_29 = arith.constant 0 : index
      %c0_30 = arith.constant 0 : index
      %47 = vector.load %arg4[%c0_29, %c0_30] : memref<1x2048xf32, #tpu.memory_space<vmem>>, vector<1x2048xf32>
      %cst_31 = arith.constant dense<0.000000e+00> : vector<2048xf32>
      %48 = vector.multi_reduction <add>, %45, %cst_31 [0] : vector<4x2048xf32> to vector<2048xf32>
      %49 = vector.shape_cast %48 : vector<2048xf32> to vector<1x2048xf32>
      %cst_32 = arith.constant 4.000000e+00 : f32
      %50 = vector.broadcast %cst_32 : f32 to vector<1x2048xf32>
      %51 = arith.divf %49, %50 : vector<1x2048xf32>
      %52 = arith.mulf %45, %45 : vector<4x2048xf32>
      %cst_33 = arith.constant dense<0.000000e+00> : vector<2048xf32>
      %53 = vector.multi_reduction <add>, %52, %cst_33 [0] : vector<4x2048xf32> to vector<2048xf32>
      %54 = vector.shape_cast %53 : vector<2048xf32> to vector<1x2048xf32>
      %cst_34 = arith.constant 4.000000e+00 : f32
      %55 = vector.broadcast %cst_34 : f32 to vector<1x2048xf32>
      %56 = arith.divf %54, %55 : vector<1x2048xf32>
      %57 = arith.mulf %51, %51 : vector<1x2048xf32>
      %58 = arith.subf %56, %57 : vector<1x2048xf32>
      %59 = vector.broadcast %51 : vector<1x2048xf32> to vector<4x2048xf32>
      %60 = arith.subf %45, %59 : vector<4x2048xf32>
      %cst_35 = arith.constant 9.99999974E-6 : f32
      %61 = vector.broadcast %cst_35 : f32 to vector<1x2048xf32>
      %62 = arith.addf %58, %61 : vector<1x2048xf32>
      %63 = math.rsqrt %62 : vector<1x2048xf32>
      %64 = vector.broadcast %63 : vector<1x2048xf32> to vector<4x2048xf32>
      %65 = arith.mulf %60, %64 : vector<4x2048xf32>
      %66 = vector.broadcast %46 : vector<1x2048xf32> to vector<4x2048xf32>
      %67 = arith.mulf %65, %66 : vector<4x2048xf32>
      %68 = vector.broadcast %47 : vector<1x2048xf32> to vector<4x2048xf32>
      %69 = arith.addf %67, %68 : vector<4x2048xf32>
      %cst_36 = arith.constant 0.000000e+00 : f32
      %70 = vector.broadcast %cst_36 : f32 to vector<4x2048xf32>
      %71 = arith.cmpf oge, %69, %70 : vector<4x2048xf32>
      %cst_37 = arith.constant 2.000000e-02 : f32
      %72 = vector.broadcast %cst_37 : f32 to vector<4x2048xf32>
      %73 = arith.mulf %72, %69 : vector<4x2048xf32>
      %74 = arith.select %71, %69, %73 : vector<4x2048xi1>, vector<4x2048xf32>
      %c0_38 = arith.constant 0 : index
      %c0_39 = arith.constant 0 : index
      %75 = vector.load %arg11[%c0_38, %c0_39] : memref<4x2048xf32, #tpu.memory_space<vmem>>, vector<4x2048xf32>
      tpu.vector_store %arg11[%c0_38, %c0_39], %74 {strides = array<i32>} : memref<4x2048xf32, #tpu.memory_space<vmem>>, vector<4x2048xf32>,
      %cst_40 = arith.constant 0.000000e+00 : f32
      %76 = vector.broadcast %cst_40 : f32 to vector<4x1xf32>
      %c0_41 = arith.constant 0 : index
      %c0_42 = arith.constant 0 : index
      %77 = vector.load %arg9[%c0_41, %c0_42] : memref<1x1xf32, #tpu.memory_space<vmem>>, vector<1x1xf32>
      %78 = vector.broadcast %77 : vector<1x1xf32> to vector<4x1xf32>
      %79 = arith.addf %76, %78 : vector<4x1xf32>
      %c0_43 = arith.constant 0 : index
      %c0_44 = arith.constant 0 : index
      %80 = vector.load %arg10[%c0_43, %c0_44] : memref<4x1xf32, #tpu.memory_space<vmem>>, vector<4x1xf32>
      tpu.vector_store %arg10[%c0_43, %c0_44], %79 {strides = array<i32>} : memref<4x1xf32, #tpu.memory_space<vmem>>, vector<4x1xf32>,
    } else {
    }
    %c0 = arith.constant 0 : index
    %c0_1 = arith.constant 0 : index
    %3 = vector.load %arg11[%c0, %c0_1] : memref<4x2048xf32, #tpu.memory_space<vmem>>, vector<4x2048xf32>
    %c0_2 = arith.constant 0 : index
    %c0_3 = arith.constant 0 : index
    %4 = vector.load %arg5[%c0_2, %c0_3] : memref<2048x512xf32, #tpu.memory_space<vmem>>, vector<2048x512xf32>
    %cst = arith.constant dense<0.000000e+00> : vector<4x512xf32>
    %5 = tpu.matmul %3, %4, %cst {dimension_numbers = #tpu.dot_dimension_numbers<[1], [0], [0], [1], [0, 0, 1, 1], [], []>} : vector<4x2048xf32>, vector<2048x512xf32>, vector<4x512xf32> -> vector<4x512xf32>
    %c0_4 = arith.constant 0 : index
    %c0_5 = arith.constant 0 : index
    %6 = vector.load %arg6[%c0_4, %c0_5] : memref<1x512xf32, #tpu.memory_space<vmem>>, vector<1x512xf32>
    %c0_6 = arith.constant 0 : index
    %c0_7 = arith.constant 0 : index
    %7 = vector.load %arg7[%c0_6, %c0_7] : memref<1x512xf32, #tpu.memory_space<vmem>>, vector<1x512xf32>
    %cst_8 = arith.constant dense<0.000000e+00> : vector<512xf32>
    %8 = vector.multi_reduction <add>, %5, %cst_8 [0] : vector<4x512xf32> to vector<512xf32>
    %9 = vector.shape_cast %8 : vector<512xf32> to vector<1x512xf32>
    %cst_9 = arith.constant 4.000000e+00 : f32
    %10 = vector.broadcast %cst_9 : f32 to vector<1x512xf32>
    %11 = arith.divf %9, %10 : vector<1x512xf32>
    %12 = arith.mulf %5, %5 : vector<4x512xf32>
    %cst_10 = arith.constant dense<0.000000e+00> : vector<512xf32>
    %13 = vector.multi_reduction <add>, %12, %cst_10 [0] : vector<4x512xf32> to vector<512xf32>
    %14 = vector.shape_cast %13 : vector<512xf32> to vector<1x512xf32>
    %cst_11 = arith.constant 4.000000e+00 : f32
    %15 = vector.broadcast %cst_11 : f32 to vector<1x512xf32>
    %16 = arith.divf %14, %15 : vector<1x512xf32>
    %17 = arith.mulf %11, %11 : vector<1x512xf32>
    %18 = arith.subf %16, %17 : vector<1x512xf32>
    %19 = vector.broadcast %11 : vector<1x512xf32> to vector<4x512xf32>
    %20 = arith.subf %5, %19 : vector<4x512xf32>
    %cst_12 = arith.constant 9.99999974E-6 : f32
    %21 = vector.broadcast %cst_12 : f32 to vector<1x512xf32>
    %22 = arith.addf %18, %21 : vector<1x512xf32>
    %23 = math.rsqrt %22 : vector<1x512xf32>
    %24 = vector.broadcast %23 : vector<1x512xf32> to vector<4x512xf32>
    %25 = arith.mulf %20, %24 : vector<4x512xf32>
    %26 = vector.broadcast %6 : vector<1x512xf32> to vector<4x512xf32>
    %27 = arith.mulf %25, %26 : vector<4x512xf32>
    %28 = vector.broadcast %7 : vector<1x512xf32> to vector<4x512xf32>
    %29 = arith.addf %27, %28 : vector<4x512xf32>
    %cst_13 = arith.constant 0.000000e+00 : f32
    %30 = vector.broadcast %cst_13 : f32 to vector<4x512xf32>
    %31 = arith.cmpf oge, %29, %30 : vector<4x512xf32>
    %cst_14 = arith.constant 2.000000e-02 : f32
    %32 = vector.broadcast %cst_14 : f32 to vector<4x512xf32>
    %33 = arith.mulf %32, %29 : vector<4x512xf32>
    %34 = arith.select %31, %29, %33 : vector<4x512xi1>, vector<4x512xf32>
    %c0_15 = arith.constant 0 : index
    %c0_16 = arith.constant 0 : index
    %35 = vector.load %arg10[%c0_15, %c0_16] : memref<4x1xf32, #tpu.memory_space<vmem>>, vector<4x1xf32>
    %c0_17 = arith.constant 0 : index
    %c0_18 = arith.constant 0 : index
    %36 = vector.load %arg8[%c0_17, %c0_18] : memref<1x512xf32, #tpu.memory_space<vmem>>, vector<1x512xf32>
    %37 = vector.broadcast %36 : vector<1x512xf32> to vector<4x512xf32>
    %38 = arith.mulf %34, %37 : vector<4x512xf32>
    %cst_19 = arith.constant dense<0.000000e+00> : vector<4xf32>
    %39 = vector.multi_reduction <add>, %38, %cst_19 [1] : vector<4x512xf32> to vector<4xf32>
    %40 = vector.shape_cast %39 : vector<4xf32> to vector<4x1xf32>
    %41 = arith.addf %35, %40 : vector<4x1xf32>
    %c0_20 = arith.constant 0 : index
    %c0_21 = arith.constant 0 : index
    %42 = vector.load %arg10[%c0_20, %c0_21] : memref<4x1xf32, #tpu.memory_space<vmem>>, vector<4x1xf32>
    tpu.vector_store %arg10[%c0_20, %c0_21], %41 {strides = array<i32>} : memref<4x1xf32, #tpu.memory_space<vmem>>, vector<4x1xf32>,
    return
  }
  func.func @transform_0(%arg0: i32) -> (i32, i32) {
    %c0_i32 = arith.constant 0 : i32
    %c0_i32_0 = arith.constant 0 : i32
    %c0_i32_1 = arith.constant 0 : i32
    return %c0_i32, %c0_i32_0 : i32, i32
  }
  func.func @transform_1(%arg0: i32) -> (i32, i32) {
    %c0_i32 = arith.constant 0 : i32
    %c0_i32_0 = arith.constant 0 : i32
    %c0_i32_1 = arith.constant 0 : i32
    return %c0_i32, %c0_i32_0 : i32, i32
  }
  func.func @transform_2(%arg0: i32) -> (i32, i32) {
    %c0_i32 = arith.constant 0 : i32
    %c0_i32_0 = arith.constant 0 : i32
    %c0_i32_1 = arith.constant 0 : i32
    return %c0_i32, %c0_i32_0 : i32, i32
  }
  func.func @transform_3(%arg0: i32) -> (i32, i32) {
    %c0_i32 = arith.constant 0 : i32
    %c0_i32_0 = arith.constant 0 : i32
    %c0_i32_1 = arith.constant 0 : i32
    return %c0_i32, %c0_i32_0 : i32, i32
  }
  func.func @transform_4(%arg0: i32) -> (i32, i32) {
    %c0_i32 = arith.constant 0 : i32
    %c0_i32_0 = arith.constant 0 : i32
    return %c0_i32, %arg0 : i32, i32
  }
  func.func @transform_5(%arg0: i32) -> (i32, i32) {
    %c0_i32 = arith.constant 0 : i32
    %c0_i32_0 = arith.constant 0 : i32
    return %c0_i32, %arg0 : i32, i32
  }
  func.func @transform_6(%arg0: i32) -> (i32, i32) {
    %c0_i32 = arith.constant 0 : i32
    %c0_i32_0 = arith.constant 0 : i32
    return %c0_i32, %arg0 : i32, i32
  }
  func.func @transform_7(%arg0: i32) -> (i32, i32) {
    %c0_i32 = arith.constant 0 : i32
    %c0_i32_0 = arith.constant 0 : i32
    return %c0_i32, %arg0 : i32, i32
  }
  func.func @transform_8(%arg0: i32) -> (i32, i32) {
    %c0_i32 = arith.constant 0 : i32
    %c0_i32_0 = arith.constant 0 : i32
    %c0_i32_1 = arith.constant 0 : i32
    return %c0_i32, %c0_i32_0 : i32, i32
  }
  func.func @transform_9(%arg0: i32) -> (i32, i32) {
    %c0_i32 = arith.constant 0 : i32
    %c0_i32_0 = arith.constant 0 : i32
    %c0_i32_1 = arith.constant 0 : i32
    return %c0_i32, %c0_i32_0 : i32, i32
  }
}

</mosaic_0001>

<llo_original>
// kernel: disc_high_fc_forward.1
$region0: #{disc_high_fc_forward.1}
  #allocation0 [shape = 'u32[]', space=smem, size = 0x4, offset = 0x4, fixed_abs, tag = 'smem constant byte address 0x4 - core index']
  #allocation1 [shape = 'u32[144,128]{1,0:T(1,128)}', space=vmem, size = 0x12000, scoped, tag = 'internal scratch']
  #allocation2 [shape = 'f32[4,2048]{1,0:T(4,128)}', space=vmem, size = 0x8000, scoped, tag = 'scratch operand']
  #allocation3 [shape = 'f32[1,1]{1,0:T(1,128)S(1)}', space=vmem, size = 0x200, scoped, tag = 'scoped memory for disc_high_fc_forward.1']
  %s0 = inlined_call_operand.hbm [shape: f32[4,64], index: 0, kind: input, shape index: {}]
  %s1 = inlined_call_operand.hbm [shape: f32[64,2048], index: 1, kind: input, shape index: {}]
  %s2 = inlined_call_operand.hbm [shape: f32[1,2048], index: 2, kind: input, shape index: {}]
  %s3 = inlined_call_operand.hbm [shape: f32[1,2048], index: 3, kind: input, shape index: {}]
  %s4 = inlined_call_operand.hbm [shape: f32[2048,2048], index: 4, kind: input, shape index: {}]
  %s5 = inlined_call_operand.hbm [shape: f32[1,2048], index: 5, kind: input, shape index: {}]
  %s6 = inlined_call_operand.hbm [shape: f32[1,2048], index: 6, kind: input, shape index: {}]
  %s7 = inlined_call_operand.hbm [shape: f32[1,2048], index: 7, kind: input, shape index: {}]
  %s8 = inlined_call_operand.<no memory space> [shape: f32[1,1], index: 8, kind: input, shape index: {}]
  %s9 = inlined_call_operand.vmem [shape: f32[4,1], index: 9, kind: output, shape index: {}]
  %s10 = sld [smem:[#allocation0]]
  $region105: #{disc_high_fc_forward.1} parent=0
    _
  %s12 = ssub.s32 1, %s10
  %s13 = scalar_select 0, %s12, %s10
  %v14 = vstv %s8
  %15 = vst [vmem:[#allocation3] sm:$0x1] %v14
  $region1: #{disc_high_fc_forward.1} parent=0
    #allocation4 [shape = 'u8[2048]{0}', space=vmem, size = 0x800, scoped, tag = 'input window, operand 0, single buffered']
    #allocation5 [shape = 's32[2]{0}', space=sflag, size = 0x8, scoped, tag = 'scoped memory for disc_high_fc_forward.1']
    #allocation6 [shape = 'u8[524288]{0}', space=vmem, size = 0x80000, scoped, tag = 'input window, operand 1, single buffered']
    #allocation7 [shape = 's32[1]{0}', space=sflag, size = 0x4, scoped, tag = 'scoped memory for disc_high_fc_forward.1']
    #allocation8 [shape = 'u8[8192]{0}', space=vmem, size = 0x2000, scoped, tag = 'input window, operand 2, single buffered']
    #allocation9 [shape = 'u8[8192]{0}', space=vmem, size = 0x2000, scoped, tag = 'input window, operand 3, single buffered']
    #allocation10 [shape = 's32[1]{0}', space=sflag, size = 0x4, scoped, tag = 'scoped memory for disc_high_fc_forward.1']
    #allocation11 [shape = 'u8[8388608]{0}', space=vmem, size = 0x800000, scoped, tag = 'input window, operand 4']
    #allocation12 [shape = 'u8[4096]{0}', space=vmem, size = 0x1000, scoped, tag = 'input window, operand 5']
    #allocation13 [shape = 'u8[4096]{0}', space=vmem, size = 0x1000, scoped, tag = 'input window, operand 6']
    #allocation14 [shape = 'u8[4096]{0}', space=vmem, size = 0x1000, scoped, tag = 'input window, operand 7']
    %16 = vsyncpa [#allocation5], 0
    %17 = vsyncpa [#allocation7], 0
    %18 = vsyncpa [#allocation10], 0
    loop: start=0, step=1, limit=6
    $region2: #{disc_high_fc_forward.1} parent=1 // loop_pre_header
      _
    $region3: #{disc_high_fc_forward.1} parent=1 // loop_header
      %s20 = sphi 0, %s24
      %p21 = scmp.ge.s32.totalorder %s20, 6
      %s28 = sphi 0, %s28
      %s30 = sphi 0, %s28
      %s31 = sphi 0, %s30
      %s45 = sphi 0, %s31
      %s49 = sphi 0, %s49
      %s51 = sphi 0, %s49
      %s52 = sphi 0, %s51
      %s66 = sphi 0, %s52
      %s70 = sphi 0, %s70
      %s72 = sphi 0, %s70
      %s73 = sphi 0, %s72
      %s87 = sphi 0, %s73
      %s91 = sphi 0, %s91
      %s93 = sphi 0, %s91
      %s94 = sphi 0, %s93
      %s108 = sphi 0, %s94
      %s114 = sphi 0, %s116
      %s117 = sphi 0, %s114
      %s118 = sphi 0, %s117
      %s134 = sphi 0, %s118
      %s140 = sphi 0, %s142
      %s143 = sphi 0, %s140
      %s144 = sphi 0, %s143
      %s160 = sphi 0, %s144
      %s166 = sphi 0, %s168
      %s169 = sphi 0, %s166
      %s170 = sphi 0, %s169
      %s186 = sphi 0, %s170
      %s192 = sphi 0, %s194
      %s195 = sphi 0, %s192
      %s196 = sphi 0, %s195
      %s212 = sphi 0, %s196
      %s216 = sphi 0, %s216
      %s218 = sphi 0, %s216
      %s219 = sphi 0, %s218
      %s233 = sphi 0, %s219
      %s237 = sphi 0, %s237
      %s239 = sphi 0, %s237
      %s240 = sphi 0, %s239
      %s254 = sphi 0, %s240
    $region4: #{disc_high_fc_forward.1} parent=1 // loop_header_branch
      %23 = sbr.rel (%p21) target = $region8
    $region5: #{disc_high_fc_forward.1} parent=1 // loop_body
      %s25 = ssub.s32 %s20, 1
      %s26 = ssub.s32 %s20, 2
      %s27 = sadd.s32 %s20, 1
      %s29 = sadd.s32 %s28, 1
      %p32 = scmp.eq.s32.totalorder %s20, 3
      %p33 = scmp.ne.s32.totalorder %s28, %s30
      %p34 = scmp.eq.s32.totalorder %s20, 0
      %p35 = por %p33, %p34
      %p36 = scmp.ne.s32.totalorder %s28, %s30
      %p37 = scmp.eq.s32.totalorder %s25, 3
      %p38 = por %p36, %p37
      %p39 = scmp.ne.s32.totalorder %s30, %s31
      %p40 = scmp.eq.s32.totalorder %s25, 0
      %p41 = por %p39, %p40
      %p42 = scmp.ne.s32.totalorder %s30, %s31
      %p43 = scmp.eq.s32.totalorder %s26, 3
      %p44 = por %p42, %p43
      %p46 = scmp.ne.s32.totalorder %s31, %s45
      %p47 = scmp.eq.s32.totalorder %s26, 0
      %p48 = por %p46, %p47
      %s50 = sadd.s32 %s49, 1
      %p53 = scmp.eq.s32.totalorder %s20, 3
      %p54 = scmp.ne.s32.totalorder %s49, %s51
      %p55 = scmp.eq.s32.totalorder %s20, 0
      %p56 = por %p54, %p55
      %p57 = scmp.ne.s32.totalorder %s49, %s51
      %p58 = scmp.eq.s32.totalorder %s25, 3
      %p59 = por %p57, %p58
      %p60 = scmp.ne.s32.totalorder %s51, %s52
      %p61 = scmp.eq.s32.totalorder %s25, 0
      %p62 = por %p60, %p61
      %p63 = scmp.ne.s32.totalorder %s51, %s52
      %p64 = scmp.eq.s32.totalorder %s26, 3
      %p65 = por %p63, %p64
      %p67 = scmp.ne.s32.totalorder %s52, %s66
      %p68 = scmp.eq.s32.totalorder %s26, 0
      %p69 = por %p67, %p68
      %s71 = sadd.s32 %s70, 1
      %p74 = scmp.eq.s32.totalorder %s20, 3
      %p75 = scmp.ne.s32.totalorder %s70, %s72
      %p76 = scmp.eq.s32.totalorder %s20, 0
      %p77 = por %p75, %p76
      %p78 = scmp.ne.s32.totalorder %s70, %s72
      %p79 = scmp.eq.s32.totalorder %s25, 3
      %p80 = por %p78, %p79
      %p81 = scmp.ne.s32.totalorder %s72, %s73
      %p82 = scmp.eq.s32.totalorder %s25, 0
      %p83 = por %p81, %p82
      %p84 = scmp.ne.s32.totalorder %s72, %s73
      %p85 = scmp.eq.s32.totalorder %s26, 3
      %p86 = por %p84, %p85
      %p88 = scmp.ne.s32.totalorder %s73, %s87
      %p89 = scmp.eq.s32.totalorder %s26, 0
      %p90 = por %p88, %p89
      %s92 = sadd.s32 %s91, 1
      %p95 = scmp.eq.s32.totalorder %s20, 3
      %p96 = scmp.ne.s32.totalorder %s91, %s93
      %p97 = scmp.eq.s32.totalorder %s20, 0
      %p98 = por %p96, %p97
      %p99 = scmp.ne.s32.totalorder %s91, %s93
      %p100 = scmp.eq.s32.totalorder %s25, 3
      %p101 = por %p99, %p100
      %p102 = scmp.ne.s32.totalorder %s93, %s94
      %p103 = scmp.eq.s32.totalorder %s25, 0
      %p104 = por %p102, %p103
      %p105 = scmp.ne.s32.totalorder %s93, %s94
      %p106 = scmp.eq.s32.totalorder %s26, 3
      %p107 = por %p105, %p106
      %p109 = scmp.ne.s32.totalorder %s94, %s108
      %p110 = scmp.eq.s32.totalorder %s26, 0
      %p111 = por %p109, %p110
      %s112 = ssub.s32 %s20, %s27
      %p113 = scmp.eq.s32.totalorder %s112, 0
      %s115 = sadd.s32 %s114, 1
      %s116 = scalar_select %p113, %s114, %s115
      %p119 = pneg %p113
      %p120 = scmp.eq.s32.totalorder %s20, 3
      %p121 = por %p119, %p120
      %p122 = scmp.ne.s32.totalorder %s114, %s117
      %p123 = scmp.eq.s32.totalorder %s20, 0
      %p124 = por %p122, %p123
      %p125 = scmp.ne.s32.totalorder %s114, %s117
      %p126 = scmp.eq.s32.totalorder %s25, 3
      %p127 = por %p125, %p126
      %p128 = scmp.ne.s32.totalorder %s117, %s118
      %p129 = scmp.eq.s32.totalorder %s25, 0
      %p130 = por %p128, %p129
      %p131 = scmp.ne.s32.totalorder %s117, %s118
      %p132 = scmp.eq.s32.totalorder %s26, 3
      %p133 = por %p131, %p132
      %p135 = scmp.ne.s32.totalorder %s118, %s134
      %p136 = scmp.eq.s32.totalorder %s26, 0
      %p137 = por %p135, %p136
      %s138 = ssub.s32 %s20, %s27
      %p139 = scmp.eq.s32.totalorder %s138, 0
      %s141 = sadd.s32 %s140, 1
      %s142 = scalar_select %p139, %s140, %s141
      %p145 = pneg %p139
      %p146 = scmp.eq.s32.totalorder %s20, 3
      %p147 = por %p145, %p146
      %p148 = scmp.ne.s32.totalorder %s140, %s143
      %p149 = scmp.eq.s32.totalorder %s20, 0
      %p150 = por %p148, %p149
      %p151 = scmp.ne.s32.totalorder %s140, %s143
      %p152 = scmp.eq.s32.totalorder %s25, 3
      %p153 = por %p151, %p152
      %p154 = scmp.ne.s32.totalorder %s143, %s144
      %p155 = scmp.eq.s32.totalorder %s25, 0
      %p156 = por %p154, %p155
      %p157 = scmp.ne.s32.totalorder %s143, %s144
      %p158 = scmp.eq.s32.totalorder %s26, 3
      %p159 = por %p157, %p158
      %p161 = scmp.ne.s32.totalorder %s144, %s160
      %p162 = scmp.eq.s32.totalorder %s26, 0
      %p163 = por %p161, %p162
      %s164 = ssub.s32 %s20, %s27
      %p165 = scmp.eq.s32.totalorder %s164, 0
      %s167 = sadd.s32 %s166, 1
      %s168 = scalar_select %p165, %s166, %s167
      %p171 = pneg %p165
      %p172 = scmp.eq.s32.totalorder %s20, 3
      %p173 = por %p171, %p172
      %p174 = scmp.ne.s32.totalorder %s166, %s169
      %p175 = scmp.eq.s32.totalorder %s20, 0
      %p176 = por %p174, %p175
      %p177 = scmp.ne.s32.totalorder %s166, %s169
      %p178 = scmp.eq.s32.totalorder %s25, 3
      %p179 = por %p177, %p178
      %p180 = scmp.ne.s32.totalorder %s169, %s170
      %p181 = scmp.eq.s32.totalorder %s25, 0
      %p182 = por %p180, %p181
      %p183 = scmp.ne.s32.totalorder %s169, %s170
      %p184 = scmp.eq.s32.totalorder %s26, 3
      %p185 = por %p183, %p184
      %p187 = scmp.ne.s32.totalorder %s170, %s186
      %p188 = scmp.eq.s32.totalorder %s26, 0
      %p189 = por %p187, %p188
      %s190 = ssub.s32 %s20, %s27
      %p191 = scmp.eq.s32.totalorder %s190, 0
      %s193 = sadd.s32 %s192, 1
      %s194 = scalar_select %p191, %s192, %s193
      %p197 = pneg %p191
      %p198 = scmp.eq.s32.totalorder %s20, 3
      %p199 = por %p197, %p198
      %p200 = scmp.ne.s32.totalorder %s192, %s195
      %p201 = scmp.eq.s32.totalorder %s20, 0
      %p202 = por %p200, %p201
      %p203 = scmp.ne.s32.totalorder %s192, %s195
      %p204 = scmp.eq.s32.totalorder %s25, 3
      %p205 = por %p203, %p204
      %p206 = scmp.ne.s32.totalorder %s195, %s196
      %p207 = scmp.eq.s32.totalorder %s25, 0
      %p208 = por %p206, %p207
      %p209 = scmp.ne.s32.totalorder %s195, %s196
      %p210 = scmp.eq.s32.totalorder %s26, 3
      %p211 = por %p209, %p210
      %p213 = scmp.ne.s32.totalorder %s196, %s212
      %p214 = scmp.eq.s32.totalorder %s26, 0
      %p215 = por %p213, %p214
      %s217 = sadd.s32 %s216, 1
      %p220 = scmp.eq.s32.totalorder %s20, 3
      %p221 = scmp.ne.s32.totalorder %s216, %s218
      %p222 = scmp.eq.s32.totalorder %s20, 0
      %p223 = por %p221, %p222
      %p224 = scmp.ne.s32.totalorder %s216, %s218
      %p225 = scmp.eq.s32.totalorder %s25, 3
      %p226 = por %p224, %p225
      %p227 = scmp.ne.s32.totalorder %s218, %s219
      %p228 = scmp.eq.s32.totalorder %s25, 0
      %p229 = por %p227, %p228
      %p230 = scmp.ne.s32.totalorder %s218, %s219
      %p231 = scmp.eq.s32.totalorder %s26, 3
      %p232 = por %p230, %p231
      %p234 = scmp.ne.s32.totalorder %s219, %s233
      %p235 = scmp.eq.s32.totalorder %s26, 0
      %p236 = por %p234, %p235
      %s238 = sadd.s32 %s237, 1
      %p241 = scmp.eq.s32.totalorder %s20, 3
      %p242 = scmp.ne.s32.totalorder %s237, %s239
      %p243 = scmp.eq.s32.totalorder %s20, 0
      %p244 = por %p242, %p243
      %p245 = scmp.ne.s32.totalorder %s237, %s239
      %p246 = scmp.eq.s32.totalorder %s25, 3
      %p247 = por %p245, %p246
      %p248 = scmp.ne.s32.totalorder %s239, %s240
      %p249 = scmp.eq.s32.totalorder %s25, 0
      %p250 = por %p248, %p249
      %p251 = scmp.ne.s32.totalorder %s239, %s240
      %p252 = scmp.eq.s32.totalorder %s26, 3
      %p253 = por %p251, %p252
      %p255 = scmp.ne.s32.totalorder %s240, %s254
      %p256 = scmp.eq.s32.totalorder %s26, 0
      %p257 = por %p255, %p256
      %p258 = scmp.le.s32.totalorder 1, %s20
      %p259 = scmp.lt.s32.totalorder %s20, 5
      %p260 = pnand %p258, %p259
      %p261 = pneg %p260
      // Predicated region
      $region9: #{disc_high_fc_forward.1} parent=5 // pred_check
        _
      $region10: #{disc_high_fc_forward.1} parent=5 // pred_check_branch
        %263 = sbr.rel (%p260) target = $region12
      $region11: #{disc_high_fc_forward.1} parent=5 // pred_region
        %s264 = ssub.s32 %s20, 1
        // Predicated region
        $region13: #{disc_high_fc_forward.1} parent=11 // pred_check
          %p265 = pneg %p41
        $region14: #{disc_high_fc_forward.1} parent=11 // pred_check_branch
          %267 = sbr.rel (%p265) target = $region16
        $region15: #{disc_high_fc_forward.1} parent=11 // pred_region
          %s269 = ssub.s32 64, 64
          %270 = vsyncadd [#allocation5], %s269
          %s272 = sshll.u32 [#allocation4], 4
          %s273 = int_to_ptr.vmem [resolvable:$true] %s272
          %275 = dma.hbm_to_vmem [thread:$0]  %s0, 64, %s273, [#allocation5]
        $region16: #{disc_high_fc_forward.1} parent=11 // pred_fallthru
          _
        // Predicated region
        $region17: #{disc_high_fc_forward.1} parent=11 // pred_check
          %p276 = pneg %p62
        $region18: #{disc_high_fc_forward.1} parent=11 // pred_check_branch
          %278 = sbr.rel (%p276) target = $region20
        $region19: #{disc_high_fc_forward.1} parent=11 // pred_region
          %s280 = ssub.s32 16384, 16384
          %281 = vsyncadd [#allocation7], %s280
          %s282 = sshll.u32 [#allocation6], 4
          %s283 = int_to_ptr.vmem [resolvable:$true] %s282
          %288 = dma.hbm_to_vmem [thread:$0]  %s1, 16384, %s283, [#allocation7], 2048, 2048, 128
        $region20: #{disc_high_fc_forward.1} parent=11 // pred_fallthru
          _
        // Predicated region
        $region21: #{disc_high_fc_forward.1} parent=11 // pred_check
          %p289 = pneg %p83
        $region22: #{disc_high_fc_forward.1} parent=11 // pred_check_branch
          %291 = sbr.rel (%p289) target = $region24
        $region23: #{disc_high_fc_forward.1} parent=11 // pred_region
          %s293 = ssub.s32 256, 256
          %294 = vsyncadd [#allocation7], %s293
          %s296 = sshll.u32 [#allocation8], 4
          %s297 = int_to_ptr.vmem [resolvable:$true] %s296
          %299 = dma.hbm_to_vmem [thread:$0]  %s2, 256, %s297, [#allocation7]
        $region24: #{disc_high_fc_forward.1} parent=11 // pred_fallthru
          _
        // Predicated region
        $region25: #{disc_high_fc_forward.1} parent=11 // pred_check
          %p300 = pneg %p104
        $region26: #{disc_high_fc_forward.1} parent=11 // pred_check_branch
          %302 = sbr.rel (%p300) target = $region28
        $region27: #{disc_high_fc_forward.1} parent=11 // pred_region
          %s304 = ssub.s32 256, 256
          %305 = vsyncadd [#allocation10], %s304
          %s307 = sshll.u32 [#allocation9], 4
          %s308 = int_to_ptr.vmem [resolvable:$true] %s307
          %310 = dma.hbm_to_vmem [thread:$0]  %s3, 256, %s308, [#allocation10]
        $region28: #{disc_high_fc_forward.1} parent=11 // pred_fallthru
          _
        // Predicated region
        $region29: #{disc_high_fc_forward.1} parent=11 // pred_check
          %p311 = pneg %p229
        $region30: #{disc_high_fc_forward.1} parent=11 // pred_check_branch
          %313 = sbr.rel (%p311) target = $region32
        $region31: #{disc_high_fc_forward.1} parent=11 // pred_region
          _
        $region32: #{disc_high_fc_forward.1} parent=11 // pred_fallthru
          _
      $region12: #{disc_high_fc_forward.1} parent=5 // pred_fallthru
        _
      %p314 = scmp.lt.s32.totalorder %s20, 4
      // Predicated region
      $region33: #{disc_high_fc_forward.1} parent=5 // pred_check
        %p315 = pneg %p314
      $region34: #{disc_high_fc_forward.1} parent=5 // pred_check_branch
        %317 = sbr.rel (%p315) target = $region36
      $region35: #{disc_high_fc_forward.1} parent=5 // pred_region
        // Predicated region
        $region37: #{disc_high_fc_forward.1} parent=35 // pred_check
          %p318 = pneg %p124
        $region38: #{disc_high_fc_forward.1} parent=35 // pred_check_branch
          %320 = sbr.rel (%p318) target = $region40
        $region39: #{disc_high_fc_forward.1} parent=35 // pred_region
          %s321 = sand.u32 %s20, 1
          %s322 = scalar_lea.sflag [#allocation5], %s321
          %s323 = sand.u32 %s114, 1
          %s324 = smul.addr %s323, 8192
          %s325 = scalar_lea.vmem [#allocation11], %s324
          %s326 = smul.u32 4, %s20
          %s328 = ssub.s32 131072, 131072
          %329 = vsyncadd %s322, %s328
          %s330 = smul.addr %s326, 128
          %s331 = scalar_lea.hbm %s4, %s330
          %s332 = sshll.u32 %s325, 4
          %s333 = int_to_ptr.vmem [resolvable:$true] %s332
          %338 = dma.hbm_to_vmem [thread:$0]  %s331, 131072, %s333, %s322, 2048, 512, 32
        $region40: #{disc_high_fc_forward.1} parent=35 // pred_fallthru
          _
        // Predicated region
        $region41: #{disc_high_fc_forward.1} parent=35 // pred_check
          %p339 = pneg %p150
        $region42: #{disc_high_fc_forward.1} parent=35 // pred_check_branch
          %341 = sbr.rel (%p339) target = $region44
        $region43: #{disc_high_fc_forward.1} parent=35 // pred_region
          %s342 = sand.u32 %s20, 1
          %s343 = scalar_lea.sflag [#allocation5], %s342
          %s344 = sand.u32 %s140, 1
          %s345 = smul.addr %s344, 4
          %s346 = scalar_lea.vmem [#allocation12], %s345
          %s347 = smul.u32 4, %s20
          %s349 = ssub.s32 64, 64
          %350 = vsyncadd %s343, %s349
          %s351 = smul.addr %s347, 16
          %s352 = scalar_lea.hbm %s5, %s351
          %s354 = sshll.u32 %s346, 4
          %s355 = int_to_ptr.vmem [resolvable:$true] %s354
          %357 = dma.hbm_to_vmem [thread:$0]  %s352, 64, %s355, %s343
        $region44: #{disc_high_fc_forward.1} parent=35 // pred_fallthru
          _
        // Predicated region
        $region45: #{disc_high_fc_forward.1} parent=35 // pred_check
          %p358 = pneg %p176
        $region46: #{disc_high_fc_forward.1} parent=35 // pred_check_branch
          %360 = sbr.rel (%p358) target = $region48
        $region47: #{disc_high_fc_forward.1} parent=35 // pred_region
          %s361 = sand.u32 %s20, 1
          %s362 = scalar_lea.sflag [#allocation5], %s361
          %s363 = sand.u32 %s166, 1
          %s364 = smul.addr %s363, 4
          %s365 = scalar_lea.vmem [#allocation13], %s364
          %s366 = smul.u32 4, %s20
          %s368 = ssub.s32 64, 64
          %369 = vsyncadd %s362, %s368
          %s370 = smul.addr %s366, 16
          %s371 = scalar_lea.hbm %s6, %s370
          %s373 = sshll.u32 %s365, 4
          %s374 = int_to_ptr.vmem [resolvable:$true] %s373
          %376 = dma.hbm_to_vmem [thread:$0]  %s371, 64, %s374, %s362
        $region48: #{disc_high_fc_forward.1} parent=35 // pred_fallthru
          _
        // Predicated region
        $region49: #{disc_high_fc_forward.1} parent=35 // pred_check
          %p377 = pneg %p202
        $region50: #{disc_high_fc_forward.1} parent=35 // pred_check_branch
          %379 = sbr.rel (%p377) target = $region52
        $region51: #{disc_high_fc_forward.1} parent=35 // pred_region
          %s380 = sand.u32 %s20, 1
          %s381 = scalar_lea.sflag [#allocation5], %s380
          %s382 = sand.u32 %s192, 1
          %s383 = smul.addr %s382, 4
          %s384 = scalar_lea.vmem [#allocation14], %s383
          %s385 = smul.u32 4, %s20
          %s387 = ssub.s32 64, 64
          %388 = vsyncadd %s381, %s387
          %s389 = smul.addr %s385, 16
          %s390 = scalar_lea.hbm %s7, %s389
          %s392 = sshll.u32 %s384, 4
          %s393 = int_to_ptr.vmem [resolvable:$true] %s392
          %395 = dma.hbm_to_vmem [thread:$0]  %s390, 64, %s393, %s381
        $region52: #{disc_high_fc_forward.1} parent=35 // pred_fallthru
          _
      $region36: #{disc_high_fc_forward.1} parent=5 // pred_fallthru
        _
      %p396 = scmp.le.s32.totalorder 1, %s20
      %p397 = scmp.lt.s32.totalorder %s20, 5
      %p398 = pnand %p396, %p397
      %p399 = pneg %p398
      // Predicated region
      $region53: #{disc_high_fc_forward.1} parent=5 // pred_check
        _
      $region54: #{disc_high_fc_forward.1} parent=5 // pred_check_branch
        %401 = sbr.rel (%p398) target = $region56
      $region55: #{disc_high_fc_forward.1} parent=5 // pred_region
        %s402 = ssub.s32 %s20, 1
        // Predicated region
        $region57: #{disc_high_fc_forward.1} parent=55 // pred_check
          %p403 = pneg %p41
        $region58: #{disc_high_fc_forward.1} parent=55 // pred_check_branch
          %405 = sbr.rel (%p403) target = $region60
        $region59: #{disc_high_fc_forward.1} parent=55 // pred_region
          %406 = dma.done [#allocation5], 64
        $region60: #{disc_high_fc_forward.1} parent=55 // pred_fallthru
          _
        // Predicated region
        $region61: #{disc_high_fc_forward.1} parent=55 // pred_check
          %p407 = pneg %p62
        $region62: #{disc_high_fc_forward.1} parent=55 // pred_check_branch
          %409 = sbr.rel (%p407) target = $region64
        $region63: #{disc_high_fc_forward.1} parent=55 // pred_region
          %410 = dma.done [#allocation7], 16384
        $region64: #{disc_high_fc_forward.1} parent=55 // pred_fallthru
          _
        // Predicated region
        $region65: #{disc_high_fc_forward.1} parent=55 // pred_check
          %p411 = pneg %p83
        $region66: #{disc_high_fc_forward.1} parent=55 // pred_check_branch
          %413 = sbr.rel (%p411) target = $region68
        $region67: #{disc_high_fc_forward.1} parent=55 // pred_region
          %414 = dma.done [#allocation7], 256
        $region68: #{disc_high_fc_forward.1} parent=55 // pred_fallthru
          _
        // Predicated region
        $region69: #{disc_high_fc_forward.1} parent=55 // pred_check
          %p415 = pneg %p104
        $region70: #{disc_high_fc_forward.1} parent=55 // pred_check_branch
          %417 = sbr.rel (%p415) target = $region72
        $region71: #{disc_high_fc_forward.1} parent=55 // pred_region
          %418 = dma.done [#allocation10], 256
        $region72: #{disc_high_fc_forward.1} parent=55 // pred_fallthru
          _
        %s419 = sand.u32 %s25, 1
        %s420 = scalar_lea.sflag [#allocation5], %s419
        %s421 = sand.u32 %s117, 1
        %s422 = smul.addr %s421, 8192
        %s423 = scalar_lea.vmem [#allocation11], %s422
        // Predicated region
        $region73: #{disc_high_fc_forward.1} parent=55 // pred_check
          %p424 = pneg %p130
        $region74: #{disc_high_fc_forward.1} parent=55 // pred_check_branch
          %426 = sbr.rel (%p424) target = $region76
        $region75: #{disc_high_fc_forward.1} parent=55 // pred_region
          %427 = dma.done %s420, 131072
        $region76: #{disc_high_fc_forward.1} parent=55 // pred_fallthru
          _
        %s428 = sand.u32 %s25, 1
        %s429 = scalar_lea.sflag [#allocation5], %s428
        %s430 = sand.u32 %s143, 1
        %s431 = smul.addr %s430, 4
        %s432 = scalar_lea.vmem [#allocation12], %s431
        // Predicated region
        $region77: #{disc_high_fc_forward.1} parent=55 // pred_check
          %p433 = pneg %p156
        $region78: #{disc_high_fc_forward.1} parent=55 // pred_check_branch
          %435 = sbr.rel (%p433) target = $region80
        $region79: #{disc_high_fc_forward.1} parent=55 // pred_region
          %436 = dma.done %s429, 64
        $region80: #{disc_high_fc_forward.1} parent=55 // pred_fallthru
          _
        %s437 = sand.u32 %s25, 1
        %s438 = scalar_lea.sflag [#allocation5], %s437
        %s439 = sand.u32 %s169, 1
        %s440 = smul.addr %s439, 4
        %s441 = scalar_lea.vmem [#allocation13], %s440
        // Predicated region
        $region81: #{disc_high_fc_forward.1} parent=55 // pred_check
          %p442 = pneg %p182
        $region82: #{disc_high_fc_forward.1} parent=55 // pred_check_branch
          %444 = sbr.rel (%p442) target = $region84
        $region83: #{disc_high_fc_forward.1} parent=55 // pred_region
          %445 = dma.done %s438, 64
        $region84: #{disc_high_fc_forward.1} parent=55 // pred_fallthru
          _
        %s446 = sand.u32 %s25, 1
        %s447 = scalar_lea.sflag [#allocation5], %s446
        %s448 = sand.u32 %s195, 1
        %s449 = smul.addr %s448, 4
        %s450 = scalar_lea.vmem [#allocation14], %s449
        // Predicated region
        $region85: #{disc_high_fc_forward.1} parent=55 // pred_check
          %p451 = pneg %p208
        $region86: #{disc_high_fc_forward.1} parent=55 // pred_check_branch
          %453 = sbr.rel (%p451) target = $region88
        $region87: #{disc_high_fc_forward.1} parent=55 // pred_region
          %454 = dma.done %s447, 64
        $region88: #{disc_high_fc_forward.1} parent=55 // pred_fallthru
          _
        %p455 = pneg %p41
        %p456 = pneg %p38
        %p457 = pneg %p62
        %p458 = pneg %p59
        %p459 = pneg %p83
        %p460 = pneg %p80
        %p461 = pneg %p104
        %p462 = pneg %p101
        %s463 = sand.u32 %s25, 1
        %s464 = scalar_lea.sflag [#allocation5], %s463
        %s465 = sand.u32 %s117, 1
        %s466 = smul.addr %s465, 8192
        %s467 = scalar_lea.vmem [#allocation11], %s466
        %p468 = pneg %p130
        %p469 = pneg %p127
        %s470 = sand.u32 %s25, 1
        %s471 = scalar_lea.sflag [#allocation5], %s470
        %s472 = sand.u32 %s143, 1
        %s473 = smul.addr %s472, 4
        %s474 = scalar_lea.vmem [#allocation12], %s473
        %p475 = pneg %p156
        %p476 = pneg %p153
        %s477 = sand.u32 %s25, 1
        %s478 = scalar_lea.sflag [#allocation5], %s477
        %s479 = sand.u32 %s169, 1
        %s480 = smul.addr %s479, 4
        %s481 = scalar_lea.vmem [#allocation13], %s480
        %p482 = pneg %p182
        %p483 = pneg %p179
        %s484 = sand.u32 %s25, 1
        %s485 = scalar_lea.sflag [#allocation5], %s484
        %s486 = sand.u32 %s195, 1
        %s487 = smul.addr %s486, 4
        %s488 = scalar_lea.vmem [#allocation14], %s487
        %p489 = pneg %p208
        %p490 = pneg %p205
        %p491 = pneg %p229
        %p492 = pneg %p226
        %p493 = pneg %p250
        %p494 = pneg %p247
        %s495 = smul.u32 4, %s25
        %s496 = smul.u32 4, %s25
        %s497 = smul.u32 4, %s25
        %s498 = smul.u32 4, %s25
        %p499 = scmp.eq.s32.totalorder %s25, 0
        // Predicated region
        $region89: #{disc_high_fc_forward.1} parent=55 // pred_check
          %p500 = pneg %p499
        $region90: #{disc_high_fc_forward.1} parent=55 // pred_check_branch
          %502 = sbr.rel (%p500) target = $region92
        $region91: #{disc_high_fc_forward.1} parent=55 // pred_region
          %v503 = vld [vmem:[#allocation4] sm:$0xf]
          %v504 = vld [vmem:[#allocation6] sm:$0xff]
          %v505 = vld [vmem:[#allocation6 + $0x8] sm:$0xff]
          %v506 = vld [vmem:[#allocation6 + $0x10] sm:$0xff]
          %v507 = vld [vmem:[#allocation6 + $0x18] sm:$0xff]
          %v508 = vld [vmem:[#allocation6 + $0x20] sm:$0xff]
          %v509 = vld [vmem:[#allocation6 + $0x28] sm:$0xff]
          %v510 = vld [vmem:[#allocation6 + $0x30] sm:$0xff]
          %v511 = vld [vmem:[#allocation6 + $0x38] sm:$0xff]
          %v512 = vld [vmem:[#allocation6 + $0x40] sm:$0xff]
          %v513 = vld [vmem:[#allocation6 + $0x48] sm:$0xff]
          %v514 = vld [vmem:[#allocation6 + $0x50] sm:$0xff]
          %v515 = vld [vmem:[#allocation6 + $0x58] sm:$0xff]
          %v516 = vld [vmem:[#allocation6 + $0x60] sm:$0xff]
          %v517 = vld [vmem:[#allocation6 + $0x68] sm:$0xff]
          %v518 = vld [vmem:[#allocation6 + $0x70] sm:$0xff]
          %v519 = vld [vmem:[#allocation6 + $0x78] sm:$0xff]
          %v520 = vld [vmem:[#allocation6 + $0x80] sm:$0xff]
          %v521 = vld [vmem:[#allocation6 + $0x88] sm:$0xff]
          %v522 = vld [vmem:[#allocation6 + $0x90] sm:$0xff]
          %v523 = vld [vmem:[#allocation6 + $0x98] sm:$0xff]
          %v524 = vld [vmem:[#allocation6 + $0xa0] sm:$0xff]
          %v525 = vld [vmem:[#allocation6 + $0xa8] sm:$0xff]
          %v526 = vld [vmem:[#allocation6 + $0xb0] sm:$0xff]
          %v527 = vld [vmem:[#allocation6 + $0xb8] sm:$0xff]
          %v528 = vld [vmem:[#allocation6 + $0xc0] sm:$0xff]
          %v529 = vld [vmem:[#allocation6 + $0xc8] sm:$0xff]
          %v530 = vld [vmem:[#allocation6 + $0xd0] sm:$0xff]
          %v531 = vld [vmem:[#allocation6 + $0xd8] sm:$0xff]
          %v532 = vld [vmem:[#allocation6 + $0xe0] sm:$0xff]
          %v533 = vld [vmem:[#allocation6 + $0xe8] sm:$0xff]
          %v534 = vld [vmem:[#allocation6 + $0xf0] sm:$0xff]
          %v535 = vld [vmem:[#allocation6 + $0xf8] sm:$0xff]
          %v536 = vld [vmem:[#allocation6 + $0x100] sm:$0xff]
          %v537 = vld [vmem:[#allocation6 + $0x108] sm:$0xff]
          %v538 = vld [vmem:[#allocation6 + $0x110] sm:$0xff]
          %v539 = vld [vmem:[#allocation6 + $0x118] sm:$0xff]
          %v540 = vld [vmem:[#allocation6 + $0x120] sm:$0xff]
          %v541 = vld [vmem:[#allocation6 + $0x128] sm:$0xff]
          %v542 = vld [vmem:[#allocation6 + $0x130] sm:$0xff]
          %v543 = vld [vmem:[#allocation6 + $0x138] sm:$0xff]
          %v544 = vld [vmem:[#allocation6 + $0x140] sm:$0xff]
          %v545 = vld [vmem:[#allocation6 + $0x148] sm:$0xff]
          %v546 = vld [vmem:[#allocation6 + $0x150] sm:$0xff]
          %v547 = vld [vmem:[#allocation6 + $0x158] sm:$0xff]
          %v548 = vld [vmem:[#allocation6 + $0x160] sm:$0xff]
          %v549 = vld [vmem:[#allocation6 + $0x168] sm:$0xff]
          %v550 = vld [vmem:[#allocation6 + $0x170] sm:$0xff]
          %v551 = vld [vmem:[#allocation6 + $0x178] sm:$0xff]
          %v552 = vld [vmem:[#allocation6 + $0x180] sm:$0xff]
          %v553 = vld [vmem:[#allocation6 + $0x188] sm:$0xff]
          %v554 = vld [vmem:[#allocation6 + $0x190] sm:$0xff]
          %v555 = vld [vmem:[#allocation6 + $0x198] sm:$0xff]
          %v556 = vld [vmem:[#allocation6 + $0x1a0] sm:$0xff]
          %v557 = vld [vmem:[#allocation6 + $0x1a8] sm:$0xff]
          %v558 = vld [vmem:[#allocation6 + $0x1b0] sm:$0xff]
          %v559 = vld [vmem:[#allocation6 + $0x1b8] sm:$0xff]
          %v560 = vld [vmem:[#allocation6 + $0x1c0] sm:$0xff]
          %v561 = vld [vmem:[#allocation6 + $0x1c8] sm:$0xff]
          %v562 = vld [vmem:[#allocation6 + $0x1d0] sm:$0xff]
          %v563 = vld [vmem:[#allocation6 + $0x1d8] sm:$0xff]
          %v564 = vld [vmem:[#allocation6 + $0x1e0] sm:$0xff]
          %v565 = vld [vmem:[#allocation6 + $0x1e8] sm:$0xff]
          %v566 = vld [vmem:[#allocation6 + $0x1f0] sm:$0xff]
          %v567 = vld [vmem:[#allocation6 + $0x1f8] sm:$0xff]
          %v568 = vld [vmem:[#allocation6 + $0x200] sm:$0xff]
          %v569 = vld [vmem:[#allocation6 + $0x208] sm:$0xff]
          %v570 = vld [vmem:[#allocation6 + $0x210] sm:$0xff]
          %v571 = vld [vmem:[#allocation6 + $0x218] sm:$0xff]
          %v572 = vld [vmem:[#allocation6 + $0x220] sm:$0xff]
          %v573 = vld [vmem:[#allocation6 + $0x228] sm:$0xff]
          %v574 = vld [vmem:[#allocation6 + $0x230] sm:$0xff]
          %v575 = vld [vmem:[#allocation6 + $0x238] sm:$0xff]
          %v576 = vld [vmem:[#allocation6 + $0x240] sm:$0xff]
          %v577 = vld [vmem:[#allocation6 + $0x248] sm:$0xff]
          %v578 = vld [vmem:[#allocation6 + $0x250] sm:$0xff]
          %v579 = vld [vmem:[#allocation6 + $0x258] sm:$0xff]
          %v580 = vld [vmem:[#allocation6 + $0x260] sm:$0xff]
          %v581 = vld [vmem:[#allocation6 + $0x268] sm:$0xff]
          %v582 = vld [vmem:[#allocation6 + $0x270] sm:$0xff]
          %v583 = vld [vmem:[#allocation6 + $0x278] sm:$0xff]
          %v584 = vld [vmem:[#allocation6 + $0x280] sm:$0xff]
          %v585 = vld [vmem:[#allocation6 + $0x288] sm:$0xff]
          %v586 = vld [vmem:[#allocation6 + $0x290] sm:$0xff]
          %v587 = vld [vmem:[#allocation6 + $0x298] sm:$0xff]
          %v588 = vld [vmem:[#allocation6 + $0x2a0] sm:$0xff]
          %v589 = vld [vmem:[#allocation6 + $0x2a8] sm:$0xff]
          %v590 = vld [vmem:[#allocation6 + $0x2b0] sm:$0xff]
          %v591 = vld [vmem:[#allocation6 + $0x2b8] sm:$0xff]
          %v592 = vld [vmem:[#allocation6 + $0x2c0] sm:$0xff]
          %v593 = vld [vmem:[#allocation6 + $0x2c8] sm:$0xff]
          %v594 = vld [vmem:[#allocation6 + $0x2d0] sm:$0xff]
          %v595 = vld [vmem:[#allocation6 + $0x2d8] sm:$0xff]
          %v596 = vld [vmem:[#allocation6 + $0x2e0] sm:$0xff]
          %v597 = vld [vmem:[#allocation6 + $0x2e8] sm:$0xff]
          %v598 = vld [vmem:[#allocation6 + $0x2f0] sm:$0xff]
          %v599 = vld [vmem:[#allocation6 + $0x2f8] sm:$0xff]
          %v600 = vld [vmem:[#allocation6 + $0x300] sm:$0xff]
          %v601 = vld [vmem:[#allocation6 + $0x308] sm:$0xff]
          %v602 = vld [vmem:[#allocation6 + $0x310] sm:$0xff]
          %v603 = vld [vmem:[#allocation6 + $0x318] sm:$0xff]
          %v604 = vld [vmem:[#allocation6 + $0x320] sm:$0xff]
          %v605 = vld [vmem:[#allocation6 + $0x328] sm:$0xff]
          %v606 = vld [vmem:[#allocation6 + $0x330] sm:$0xff]
          %v607 = vld [vmem:[#allocation6 + $0x338] sm:$0xff]
          %v608 = vld [vmem:[#allocation6 + $0x340] sm:$0xff]
          %v609 = vld [vmem:[#allocation6 + $0x348] sm:$0xff]
          %v610 = vld [vmem:[#allocation6 + $0x350] sm:$0xff]
          %v611 = vld [vmem:[#allocation6 + $0x358] sm:$0xff]
          %v612 = vld [vmem:[#allocation6 + $0x360] sm:$0xff]
          %v613 = vld [vmem:[#allocation6 + $0x368] sm:$0xff]
          %v614 = vld [vmem:[#allocation6 + $0x370] sm:$0xff]
          %v615 = vld [vmem:[#allocation6 + $0x378] sm:$0xff]
          %v616 = vld [vmem:[#allocation6 + $0x380] sm:$0xff]
          %v617 = vld [vmem:[#allocation6 + $0x388] sm:$0xff]
          %v618 = vld [vmem:[#allocation6 + $0x390] sm:$0xff]
          %v619 = vld [vmem:[#allocation6 + $0x398] sm:$0xff]
          %v620 = vld [vmem:[#allocation6 + $0x3a0] sm:$0xff]
          %v621 = vld [vmem:[#allocation6 + $0x3a8] sm:$0xff]
          %v622 = vld [vmem:[#allocation6 + $0x3b0] sm:$0xff]
          %v623 = vld [vmem:[#allocation6 + $0x3b8] sm:$0xff]
          %v624 = vld [vmem:[#allocation6 + $0x3c0] sm:$0xff]
          %v625 = vld [vmem:[#allocation6 + $0x3c8] sm:$0xff]
          %v626 = vld [vmem:[#allocation6 + $0x3d0] sm:$0xff]
          %v627 = vld [vmem:[#allocation6 + $0x3d8] sm:$0xff]
          %v628 = vld [vmem:[#allocation6 + $0x3e0] sm:$0xff]
          %v629 = vld [vmem:[#allocation6 + $0x3e8] sm:$0xff]
          %v630 = vld [vmem:[#allocation6 + $0x3f0] sm:$0xff]
          %v631 = vld [vmem:[#allocation6 + $0x3f8] sm:$0xff]
          %vm632 = vcmask 523264
          %v634 = vsel %vm632, %v503, 0
          %636 = vmatprep.subr.mxu0 %v505
          %637 = vmatpush1.msra.mxu0 %v504
          %638 = vmatprep.subr.mxu0 %v521
          %639 = vmatpush1.msra.mxu0 %v520
          %640 = vmatprep.subr.mxu0 %v537
          %641 = vmatpush1.msra.mxu0 %v536
          %642 = vmatprep.subr.mxu0 %v553
          %643 = vmatpush1.msra.mxu0 %v552
          %644 = vmatprep.subr.mxu0 %v569
          %645 = vmatpush1.msra.mxu0 %v568
          %646 = vmatprep.subr.mxu0 %v585
          %647 = vmatpush1.msra.mxu0 %v584
          %648 = vmatprep.subr.mxu0 %v601
          %649 = vmatpush1.msra.mxu0 %v600
          %650 = vmatprep.subr.mxu0 %v617
          %651 = vmatpush1.msra.mxu0 %v616
          %652 = vmatprep.subr.mxu0 0.0
          %653 = vmatpush1.msra.mxu0 0.0
          %654 = vmatprep.subr.mxu0 0.0
          %655 = vmatpush1.msra.mxu0 0.0
          %656 = vmatprep.subr.mxu0 0.0
          %657 = vmatpush1.msra.mxu0 0.0
          %658 = vmatprep.subr.mxu0 0.0
          %659 = vmatpush1.msra.mxu0 0.0
          %660 = vmatprep.subr.mxu0 0.0
          %661 = vmatpush1.msra.mxu0 0.0
          %662 = vmatprep.subr.mxu0 0.0
          %663 = vmatpush1.msra.mxu0 0.0
          %664 = vmatprep.subr.mxu0 0.0
          %665 = vmatpush1.msra.mxu0 0.0
          %666 = vmatprep.subr.mxu0 0.0
          %667 = vmatpush1.msra.mxu0 0.0
          %668 = vmatprep.subr.mxu0 0.0
          %669 = vmatpush1.msra.mxu0 0.0
          %670 = vmatprep.subr.mxu0 0.0
          %671 = vmatpush1.msra.mxu0 0.0
          %672 = vmatprep.subr.mxu0 0.0
          %673 = vmatpush1.msra.mxu0 0.0
          %674 = vmatprep.subr.mxu0 0.0
          %675 = vmatpush1.msra.mxu0 0.0
          %676 = vmatprep.subr.mxu0 0.0
          %677 = vmatpush1.msra.mxu0 0.0
          %678 = vmatprep.subr.mxu0 0.0
          %679 = vmatpush1.msra.mxu0 0.0
          %680 = vmatprep.subr.mxu0 0.0
          %681 = vmatpush1.msra.mxu0 0.0
          %682 = vmatprep.subr.mxu0 0.0
          %683 = vmatpush1.msra.mxu0 0.0
          %684 = vmatprep.subr.mxu0 0.0
          %685 = vmatpush1.msra.mxu0 0.0
          %686 = vmatprep.subr.mxu0 0.0
          %687 = vmatpush1.msra.mxu0 0.0
          %688 = vmatprep.subr.mxu0 0.0
          %689 = vmatpush1.msra.mxu0 0.0
          %690 = vmatprep.subr.mxu0 0.0
          %691 = vmatpush1.msra.mxu0 0.0
          %692 = vmatprep.subr.mxu0 0.0
          %693 = vmatpush1.msra.mxu0 0.0
          %694 = vmatprep.subr.mxu0 0.0
          %695 = vmatpush1.msra.mxu0 0.0
          %696 = vmatprep.subr.mxu0 0.0
          %697 = vmatpush1.msra.mxu0 0.0
          %698 = vmatprep.subr.mxu0 0.0
          %699 = vmatpush1.msra.mxu0 0.0
          %700 = vmatprep.mubr.f32.mxu0 0.0
          %701 = vmatmul.mubr.f32.gmra.mrb[0].mxu0 %v634
          %v702 = vpop.f32.mrb[0].mxu0
          %v703 = vadd.f32 0.0, %v702
          %v704 = vpop.f32.mrb[0].mxu0
          %v705 = vadd.f32 0.0, %v704
          %706 = vdwg.mxu0
          %707 = vmatprep.subr.mxu0 %v507
          %708 = vmatpush1.msra.mxu0 %v506
          %709 = vmatprep.subr.mxu0 %v523
          %710 = vmatpush1.msra.mxu0 %v522
          %711 = vmatprep.subr.mxu0 %v539
          %712 = vmatpush1.msra.mxu0 %v538
          %713 = vmatprep.subr.mxu0 %v555
          %714 = vmatpush1.msra.mxu0 %v554
          %715 = vmatprep.subr.mxu0 %v571
          %716 = vmatpush1.msra.mxu0 %v570
          %717 = vmatprep.subr.mxu0 %v587
          %718 = vmatpush1.msra.mxu0 %v586
          %719 = vmatprep.subr.mxu0 %v603
          %720 = vmatpush1.msra.mxu0 %v602
          %721 = vmatprep.subr.mxu0 %v619
          %722 = vmatpush1.msra.mxu0 %v618
          %723 = vmatprep.subr.mxu0 0.0
          %724 = vmatpush1.msra.mxu0 0.0
          %725 = vmatprep.subr.mxu0 0.0
          %726 = vmatpush1.msra.mxu0 0.0
          %727 = vmatprep.subr.mxu0 0.0
          %728 = vmatpush1.msra.mxu0 0.0
          %729 = vmatprep.subr.mxu0 0.0
          %730 = vmatpush1.msra.mxu0 0.0
          %731 = vmatprep.subr.mxu0 0.0
          %732 = vmatpush1.msra.mxu0 0.0
          %733 = vmatprep.subr.mxu0 0.0
          %734 = vmatpush1.msra.mxu0 0.0
          %735 = vmatprep.subr.mxu0 0.0
          %736 = vmatpush1.msra.mxu0 0.0
          %737 = vmatprep.subr.mxu0 0.0
          %738 = vmatpush1.msra.mxu0 0.0
          %739 = vmatprep.subr.mxu0 0.0
          %740 = vmatpush1.msra.mxu0 0.0
          %741 = vmatprep.subr.mxu0 0.0
          %742 = vmatpush1.msra.mxu0 0.0
          %743 = vmatprep.subr.mxu0 0.0
          %744 = vmatpush1.msra.mxu0 0.0
          %745 = vmatprep.subr.mxu0 0.0
          %746 = vmatpush1.msra.mxu0 0.0
          %747 = vmatprep.subr.mxu0 0.0
          %748 = vmatpush1.msra.mxu0 0.0
          %749 = vmatprep.subr.mxu0 0.0
          %750 = vmatpush1.msra.mxu0 0.0
          %751 = vmatprep.subr.mxu0 0.0
          %752 = vmatpush1.msra.mxu0 0.0
          %753 = vmatprep.subr.mxu0 0.0
          %754 = vmatpush1.msra.mxu0 0.0
          %755 = vmatprep.subr.mxu0 0.0
          %756 = vmatpush1.msra.mxu0 0.0
          %757 = vmatprep.subr.mxu0 0.0
          %758 = vmatpush1.msra.mxu0 0.0
          %759 = vmatprep.subr.mxu0 0.0
          %760 = vmatpush1.msra.mxu0 0.0
          %761 = vmatprep.subr.mxu0 0.0
          %762 = vmatpush1.msra.mxu0 0.0
          %763 = vmatprep.subr.mxu0 0.0
          %764 = vmatpush1.msra.mxu0 0.0
          %765 = vmatprep.subr.mxu0 0.0
          %766 = vmatpush1.msra.mxu0 0.0
          %767 = vmatprep.subr.mxu0 0.0
          %768 = vmatpush1.msra.mxu0 0.0
          %769 = vmatprep.subr.mxu0 0.0
          %770 = vmatpush1.msra.mxu0 0.0
          %771 = vmatprep.mubr.f32.mxu0 0.0
          %772 = vmatmul.mubr.f32.gmra.mrb[0].mxu0 %v634
          %v773 = vpop.f32.mrb[0].mxu0
          %v774 = vadd.f32 0.0, %v773
          %v775 = vpop.f32.mrb[0].mxu0
          %v776 = vadd.f32 0.0, %v775
          %777 = vdwg.mxu0
          %778 = vmatprep.subr.mxu0 %v509
          %779 = vmatpush1.msra.mxu0 %v508
          %780 = vmatprep.subr.mxu0 %v525
          %781 = vmatpush1.msra.mxu0 %v524
          %782 = vmatprep.subr.mxu0 %v541
          %783 = vmatpush1.msra.mxu0 %v540
          %784 = vmatprep.subr.mxu0 %v557
          %785 = vmatpush1.msra.mxu0 %v556
          %786 = vmatprep.subr.mxu0 %v573
          %787 = vmatpush1.msra.mxu0 %v572
          %788 = vmatprep.subr.mxu0 %v589
          %789 = vmatpush1.msra.mxu0 %v588
          %790 = vmatprep.subr.mxu0 %v605
          %791 = vmatpush1.msra.mxu0 %v604
          %792 = vmatprep.subr.mxu0 %v621
          %793 = vmatpush1.msra.mxu0 %v620
          %794 = vmatprep.subr.mxu0 0.0
          %795 = vmatpush1.msra.mxu0 0.0
          %796 = vmatprep.subr.mxu0 0.0
          %797 = vmatpush1.msra.mxu0 0.0
          %798 = vmatprep.subr.mxu0 0.0
          %799 = vmatpush1.msra.mxu0 0.0
          %800 = vmatprep.subr.mxu0 0.0
          %801 = vmatpush1.msra.mxu0 0.0
          %802 = vmatprep.subr.mxu0 0.0
          %803 = vmatpush1.msra.mxu0 0.0
          %804 = vmatprep.subr.mxu0 0.0
          %805 = vmatpush1.msra.mxu0 0.0
          %806 = vmatprep.subr.mxu0 0.0
          %807 = vmatpush1.msra.mxu0 0.0
          %808 = vmatprep.subr.mxu0 0.0
          %809 = vmatpush1.msra.mxu0 0.0
          %810 = vmatprep.subr.mxu0 0.0
          %811 = vmatpush1.msra.mxu0 0.0
          %812 = vmatprep.subr.mxu0 0.0
          %813 = vmatpush1.msra.mxu0 0.0
          %814 = vmatprep.subr.mxu0 0.0
          %815 = vmatpush1.msra.mxu0 0.0
          %816 = vmatprep.subr.mxu0 0.0
          %817 = vmatpush1.msra.mxu0 0.0
          %818 = vmatprep.subr.mxu0 0.0
          %819 = vmatpush1.msra.mxu0 0.0
          %820 = vmatprep.subr.mxu0 0.0
          %821 = vmatpush1.msra.mxu0 0.0
          %822 = vmatprep.subr.mxu0 0.0
          %823 = vmatpush1.msra.mxu0 0.0
          %824 = vmatprep.subr.mxu0 0.0
          %825 = vmatpush1.msra.mxu0 0.0
          %826 = vmatprep.subr.mxu0 0.0
          %827 = vmatpush1.msra.mxu0 0.0
          %828 = vmatprep.subr.mxu0 0.0
          %829 = vmatpush1.msra.mxu0 0.0
          %830 = vmatprep.subr.mxu0 0.0
          %831 = vmatpush1.msra.mxu0 0.0
          %832 = vmatprep.subr.mxu0 0.0
          %833 = vmatpush1.msra.mxu0 0.0
          %834 = vmatprep.subr.mxu0 0.0
          %835 = vmatpush1.msra.mxu0 0.0
          %836 = vmatprep.subr.mxu0 0.0
          %837 = vmatpush1.msra.mxu0 0.0
          %838 = vmatprep.subr.mxu0 0.0
          %839 = vmatpush1.msra.mxu0 0.0
          %840 = vmatprep.subr.mxu0 0.0
          %841 = vmatpush1.msra.mxu0 0.0
          %842 = vmatprep.mubr.f32.mxu0 0.0
          %843 = vmatmul.mubr.f32.gmra.mrb[0].mxu0 %v634
          %v844 = vpop.f32.mrb[0].mxu0
          %v845 = vadd.f32 0.0, %v844
          %v846 = vpop.f32.mrb[0].mxu0
          %v847 = vadd.f32 0.0, %v846
          %848 = vdwg.mxu0
          %849 = vmatprep.subr.mxu0 %v511
          %850 = vmatpush1.msra.mxu0 %v510
          %851 = vmatprep.subr.mxu0 %v527
          %852 = vmatpush1.msra.mxu0 %v526
          %853 = vmatprep.subr.mxu0 %v543
          %854 = vmatpush1.msra.mxu0 %v542
          %855 = vmatprep.subr.mxu0 %v559
          %856 = vmatpush1.msra.mxu0 %v558
          %857 = vmatprep.subr.mxu0 %v575
          %858 = vmatpush1.msra.mxu0 %v574
          %859 = vmatprep.subr.mxu0 %v591
          %860 = vmatpush1.msra.mxu0 %v590
          %861 = vmatprep.subr.mxu0 %v607
          %862 = vmatpush1.msra.mxu0 %v606
          %863 = vmatprep.subr.mxu0 %v623
          %864 = vmatpush1.msra.mxu0 %v622
          %865 = vmatprep.subr.mxu0 0.0
          %866 = vmatpush1.msra.mxu0 0.0
          %867 = vmatprep.subr.mxu0 0.0
          %868 = vmatpush1.msra.mxu0 0.0
          %869 = vmatprep.subr.mxu0 0.0
          %870 = vmatpush1.msra.mxu0 0.0
          %871 = vmatprep.subr.mxu0 0.0
          %872 = vmatpush1.msra.mxu0 0.0
          %873 = vmatprep.subr.mxu0 0.0
          %874 = vmatpush1.msra.mxu0 0.0
          %875 = vmatprep.subr.mxu0 0.0
          %876 = vmatpush1.msra.mxu0 0.0
          %877 = vmatprep.subr.mxu0 0.0
          %878 = vmatpush1.msra.mxu0 0.0
          %879 = vmatprep.subr.mxu0 0.0
          %880 = vmatpush1.msra.mxu0 0.0
          %881 = vmatprep.subr.mxu0 0.0
          %882 = vmatpush1.msra.mxu0 0.0
          %883 = vmatprep.subr.mxu0 0.0
          %884 = vmatpush1.msra.mxu0 0.0
          %885 = vmatprep.subr.mxu0 0.0
          %886 = vmatpush1.msra.mxu0 0.0
          %887 = vmatprep.subr.mxu0 0.0
          %888 = vmatpush1.msra.mxu0 0.0
          %889 = vmatprep.subr.mxu0 0.0
          %890 = vmatpush1.msra.mxu0 0.0
          %891 = vmatprep.subr.mxu0 0.0
          %892 = vmatpush1.msra.mxu0 0.0
          %893 = vmatprep.subr.mxu0 0.0
          %894 = vmatpush1.msra.mxu0 0.0
          %895 = vmatprep.subr.mxu0 0.0
          %896 = vmatpush1.msra.mxu0 0.0
          %897 = vmatprep.subr.mxu0 0.0
          %898 = vmatpush1.msra.mxu0 0.0
          %899 = vmatprep.subr.mxu0 0.0
          %900 = vmatpush1.msra.mxu0 0.0
          %901 = vmatprep.subr.mxu0 0.0
          %902 = vmatpush1.msra.mxu0 0.0
          %903 = vmatprep.subr.mxu0 0.0
          %904 = vmatpush1.msra.mxu0 0.0
          %905 = vmatprep.subr.mxu0 0.0
          %906 = vmatpush1.msra.mxu0 0.0
          %907 = vmatprep.subr.mxu0 0.0
          %908 = vmatpush1.msra.mxu0 0.0
          %909 = vmatprep.subr.mxu0 0.0
          %910 = vmatpush1.msra.mxu0 0.0
          %911 = vmatprep.subr.mxu0 0.0
          %912 = vmatpush1.msra.mxu0 0.0
          %913 = vmatprep.mubr.f32.mxu0 0.0
          %914 = vmatmul.mubr.f32.gmra.mrb[0].mxu0 %v634
          %v915 = vpop.f32.mrb[0].mxu0
          %v916 = vadd.f32 0.0, %v915
          %v917 = vpop.f32.mrb[0].mxu0
          %v918 = vadd.f32 0.0, %v917
          %919 = vdwg.mxu0
          %920 = vmatprep.subr.mxu0 %v513
          %921 = vmatpush1.msra.mxu0 %v512
          %922 = vmatprep.subr.mxu0 %v529
          %923 = vmatpush1.msra.mxu0 %v528
          %924 = vmatprep.subr.mxu0 %v545
          %925 = vmatpush1.msra.mxu0 %v544
          %926 = vmatprep.subr.mxu0 %v561
          %927 = vmatpush1.msra.mxu0 %v560
          %928 = vmatprep.subr.mxu0 %v577
          %929 = vmatpush1.msra.mxu0 %v576
          %930 = vmatprep.subr.mxu0 %v593
          %931 = vmatpush1.msra.mxu0 %v592
          %932 = vmatprep.subr.mxu0 %v609
          %933 = vmatpush1.msra.mxu0 %v608
          %934 = vmatprep.subr.mxu0 %v625
          %935 = vmatpush1.msra.mxu0 %v624
          %936 = vmatprep.subr.mxu0 0.0
          %937 = vmatpush1.msra.mxu0 0.0
          %938 = vmatprep.subr.mxu0 0.0
          %939 = vmatpush1.msra.mxu0 0.0
          %940 = vmatprep.subr.mxu0 0.0
          %941 = vmatpush1.msra.mxu0 0.0
          %942 = vmatprep.subr.mxu0 0.0
          %943 = vmatpush1.msra.mxu0 0.0
          %944 = vmatprep.subr.mxu0 0.0
          %945 = vmatpush1.msra.mxu0 0.0
          %946 = vmatprep.subr.mxu0 0.0
          %947 = vmatpush1.msra.mxu0 0.0
          %948 = vmatprep.subr.mxu0 0.0
          %949 = vmatpush1.msra.mxu0 0.0
          %950 = vmatprep.subr.mxu0 0.0
          %951 = vmatpush1.msra.mxu0 0.0
          %952 = vmatprep.subr.mxu0 0.0
          %953 = vmatpush1.msra.mxu0 0.0
          %954 = vmatprep.subr.mxu0 0.0
          %955 = vmatpush1.msra.mxu0 0.0
          %956 = vmatprep.subr.mxu0 0.0
          %957 = vmatpush1.msra.mxu0 0.0
          %958 = vmatprep.subr.mxu0 0.0
          %959 = vmatpush1.msra.mxu0 0.0
          %960 = vmatprep.subr.mxu0 0.0
          %961 = vmatpush1.msra.mxu0 0.0
          %962 = vmatprep.subr.mxu0 0.0
          %963 = vmatpush1.msra.mxu0 0.0
          %964 = vmatprep.subr.mxu0 0.0
          %965 = vmatpush1.msra.mxu0 0.0
          %966 = vmatprep.subr.mxu0 0.0
          %967 = vmatpush1.msra.mxu0 0.0
          %968 = vmatprep.subr.mxu0 0.0
          %969 = vmatpush1.msra.mxu0 0.0
          %970 = vmatprep.subr.mxu0 0.0
          %971 = vmatpush1.msra.mxu0 0.0
          %972 = vmatprep.subr.mxu0 0.0
          %973 = vmatpush1.msra.mxu0 0.0
          %974 = vmatprep.subr.mxu0 0.0
          %975 = vmatpush1.msra.mxu0 0.0
          %976 = vmatprep.subr.mxu0 0.0
          %977 = vmatpush1.msra.mxu0 0.0
          %978 = vmatprep.subr.mxu0 0.0
          %979 = vmatpush1.msra.mxu0 0.0
          %980 = vmatprep.subr.mxu0 0.0
          %981 = vmatpush1.msra.mxu0 0.0
          %982 = vmatprep.subr.mxu0 0.0
          %983 = vmatpush1.msra.mxu0 0.0
          %984 = vmatprep.mubr.f32.mxu0 0.0
          %985 = vmatmul.mubr.f32.gmra.mrb[0].mxu0 %v634
          %v986 = vpop.f32.mrb[0].mxu0
          %v987 = vadd.f32 0.0, %v986
          %v988 = vpop.f32.mrb[0].mxu0
          %v989 = vadd.f32 0.0, %v988
          %990 = vdwg.mxu0
          %991 = vmatprep.subr.mxu0 %v515
          %992 = vmatpush1.msra.mxu0 %v514
          %993 = vmatprep.subr.mxu0 %v531
          %994 = vmatpush1.msra.mxu0 %v530
          %995 = vmatprep.subr.mxu0 %v547
          %996 = vmatpush1.msra.mxu0 %v546
          %997 = vmatprep.subr.mxu0 %v563
          %998 = vmatpush1.msra.mxu0 %v562
          %999 = vmatprep.subr.mxu0 %v579
          %1000 = vmatpush1.msra.mxu0 %v578
          %1001 = vmatprep.subr.mxu0 %v595
          %1002 = vmatpush1.msra.mxu0 %v594
          %1003 = vmatprep.subr.mxu0 %v611
          %1004 = vmatpush1.msra.mxu0 %v610
          %1005 = vmatprep.subr.mxu0 %v627
          %1006 = vmatpush1.msra.mxu0 %v626
          %1007 = vmatprep.subr.mxu0 0.0
          %1008 = vmatpush1.msra.mxu0 0.0
          %1009 = vmatprep.subr.mxu0 0.0
          %1010 = vmatpush1.msra.mxu0 0.0
          %1011 = vmatprep.subr.mxu0 0.0
          %1012 = vmatpush1.msra.mxu0 0.0
          %1013 = vmatprep.subr.mxu0 0.0
          %1014 = vmatpush1.msra.mxu0 0.0
          %1015 = vmatprep.subr.mxu0 0.0
          %1016 = vmatpush1.msra.mxu0 0.0
          %1017 = vmatprep.subr.mxu0 0.0
          %1018 = vmatpush1.msra.mxu0 0.0
          %1019 = vmatprep.subr.mxu0 0.0
          %1020 = vmatpush1.msra.mxu0 0.0
          %1021 = vmatprep.subr.mxu0 0.0
          %1022 = vmatpush1.msra.mxu0 0.0
          %1023 = vmatprep.subr.mxu0 0.0
          %1024 = vmatpush1.msra.mxu0 0.0
          %1025 = vmatprep.subr.mxu0 0.0
          %1026 = vmatpush1.msra.mxu0 0.0
          %1027 = vmatprep.subr.mxu0 0.0
          %1028 = vmatpush1.msra.mxu0 0.0
          %1029 = vmatprep.subr.mxu0 0.0
          %1030 = vmatpush1.msra.mxu0 0.0
          %1031 = vmatprep.subr.mxu0 0.0
          %1032 = vmatpush1.msra.mxu0 0.0
          %1033 = vmatprep.subr.mxu0 0.0
          %1034 = vmatpush1.msra.mxu0 0.0
          %1035 = vmatprep.subr.mxu0 0.0
          %1036 = vmatpush1.msra.mxu0 0.0
          %1037 = vmatprep.subr.mxu0 0.0
          %1038 = vmatpush1.msra.mxu0 0.0
          %1039 = vmatprep.subr.mxu0 0.0
          %1040 = vmatpush1.msra.mxu0 0.0
          %1041 = vmatprep.subr.mxu0 0.0
          %1042 = vmatpush1.msra.mxu0 0.0
          %1043 = vmatprep.subr.mxu0 0.0
          %1044 = vmatpush1.msra.mxu0 0.0
          %1045 = vmatprep.subr.mxu0 0.0
          %1046 = vmatpush1.msra.mxu0 0.0
          %1047 = vmatprep.subr.mxu0 0.0
          %1048 = vmatpush1.msra.mxu0 0.0
          %1049 = vmatprep.subr.mxu0 0.0
          %1050 = vmatpush1.msra.mxu0 0.0
          %1051 = vmatprep.subr.mxu0 0.0
          %1052 = vmatpush1.msra.mxu0 0.0
          %1053 = vmatprep.subr.mxu0 0.0
          %1054 = vmatpush1.msra.mxu0 0.0
          %1055 = vmatprep.mubr.f32.mxu0 0.0
          %1056 = vmatmul.mubr.f32.gmra.mrb[0].mxu0 %v634
          %v1057 = vpop.f32.mrb[0].mxu0
          %v1058 = vadd.f32 0.0, %v1057
          %v1059 = vpop.f32.mrb[0].mxu0
          %v1060 = vadd.f32 0.0, %v1059
          %1061 = vdwg.mxu0
          %1062 = vmatprep.subr.mxu0 %v517
          %1063 = vmatpush1.msra.mxu0 %v516
          %1064 = vmatprep.subr.mxu0 %v533
          %1065 = vmatpush1.msra.mxu0 %v532
          %1066 = vmatprep.subr.mxu0 %v549
          %1067 = vmatpush1.msra.mxu0 %v548
          %1068 = vmatprep.subr.mxu0 %v565
          %1069 = vmatpush1.msra.mxu0 %v564
          %1070 = vmatprep.subr.mxu0 %v581
          %1071 = vmatpush1.msra.mxu0 %v580
          %1072 = vmatprep.subr.mxu0 %v597
          %1073 = vmatpush1.msra.mxu0 %v596
          %1074 = vmatprep.subr.mxu0 %v613
          %1075 = vmatpush1.msra.mxu0 %v612
          %1076 = vmatprep.subr.mxu0 %v629
          %1077 = vmatpush1.msra.mxu0 %v628
          %1078 = vmatprep.subr.mxu0 0.0
          %1079 = vmatpush1.msra.mxu0 0.0
          %1080 = vmatprep.subr.mxu0 0.0
          %1081 = vmatpush1.msra.mxu0 0.0
          %1082 = vmatprep.subr.mxu0 0.0
          %1083 = vmatpush1.msra.mxu0 0.0
          %1084 = vmatprep.subr.mxu0 0.0
          %1085 = vmatpush1.msra.mxu0 0.0
          %1086 = vmatprep.subr.mxu0 0.0
          %1087 = vmatpush1.msra.mxu0 0.0
          %1088 = vmatprep.subr.mxu0 0.0
          %1089 = vmatpush1.msra.mxu0 0.0
          %1090 = vmatprep.subr.mxu0 0.0
          %1091 = vmatpush1.msra.mxu0 0.0
          %1092 = vmatprep.subr.mxu0 0.0
          %1093 = vmatpush1.msra.mxu0 0.0
          %1094 = vmatprep.subr.mxu0 0.0
          %1095 = vmatpush1.msra.mxu0 0.0
          %1096 = vmatprep.subr.mxu0 0.0
          %1097 = vmatpush1.msra.mxu0 0.0
          %1098 = vmatprep.subr.mxu0 0.0
          %1099 = vmatpush1.msra.mxu0 0.0
          %1100 = vmatprep.subr.mxu0 0.0
          %1101 = vmatpush1.msra.mxu0 0.0
          %1102 = vmatprep.subr.mxu0 0.0
          %1103 = vmatpush1.msra.mxu0 0.0
          %1104 = vmatprep.subr.mxu0 0.0
          %1105 = vmatpush1.msra.mxu0 0.0
          %1106 = vmatprep.subr.mxu0 0.0
          %1107 = vmatpush1.msra.mxu0 0.0
          %1108 = vmatprep.subr.mxu0 0.0
          %1109 = vmatpush1.msra.mxu0 0.0
          %1110 = vmatprep.subr.mxu0 0.0
          %1111 = vmatpush1.msra.mxu0 0.0
          %1112 = vmatprep.subr.mxu0 0.0
          %1113 = vmatpush1.msra.mxu0 0.0
          %1114 = vmatprep.subr.mxu0 0.0
          %1115 = vmatpush1.msra.mxu0 0.0
          %1116 = vmatprep.subr.mxu0 0.0
          %1117 = vmatpush1.msra.mxu0 0.0
          %1118 = vmatprep.subr.mxu0 0.0
          %1119 = vmatpush1.msra.mxu0 0.0
          %1120 = vmatprep.subr.mxu0 0.0
          %1121 = vmatpush1.msra.mxu0 0.0
          %1122 = vmatprep.subr.mxu0 0.0
          %1123 = vmatpush1.msra.mxu0 0.0
          %1124 = vmatprep.subr.mxu0 0.0
          %1125 = vmatpush1.msra.mxu0 0.0
          %1126 = vmatprep.mubr.f32.mxu0 0.0
          %1127 = vmatmul.mubr.f32.gmra.mrb[0].mxu0 %v634
          %v1128 = vpop.f32.mrb[0].mxu0
          %v1129 = vadd.f32 0.0, %v1128
          %v1130 = vpop.f32.mrb[0].mxu0
          %v1131 = vadd.f32 0.0, %v1130
          %1132 = vdwg.mxu0
          %1133 = vmatprep.subr.mxu0 %v519
          %1134 = vmatpush1.msra.mxu0 %v518
          %1135 = vmatprep.subr.mxu0 %v535
          %1136 = vmatpush1.msra.mxu0 %v534
          %1137 = vmatprep.subr.mxu0 %v551
          %1138 = vmatpush1.msra.mxu0 %v550
          %1139 = vmatprep.subr.mxu0 %v567
          %1140 = vmatpush1.msra.mxu0 %v566
          %1141 = vmatprep.subr.mxu0 %v583
          %1142 = vmatpush1.msra.mxu0 %v582
          %1143 = vmatprep.subr.mxu0 %v599
          %1144 = vmatpush1.msra.mxu0 %v598
          %1145 = vmatprep.subr.mxu0 %v615
          %1146 = vmatpush1.msra.mxu0 %v614
          %1147 = vmatprep.subr.mxu0 %v631
          %1148 = vmatpush1.msra.mxu0 %v630
          %1149 = vmatprep.subr.mxu0 0.0
          %1150 = vmatpush1.msra.mxu0 0.0
          %1151 = vmatprep.subr.mxu0 0.0
          %1152 = vmatpush1.msra.mxu0 0.0
          %1153 = vmatprep.subr.mxu0 0.0
          %1154 = vmatpush1.msra.mxu0 0.0
          %1155 = vmatprep.subr.mxu0 0.0
          %1156 = vmatpush1.msra.mxu0 0.0
          %1157 = vmatprep.subr.mxu0 0.0
          %1158 = vmatpush1.msra.mxu0 0.0
          %1159 = vmatprep.subr.mxu0 0.0
          %1160 = vmatpush1.msra.mxu0 0.0
          %1161 = vmatprep.subr.mxu0 0.0
          %1162 = vmatpush1.msra.mxu0 0.0
          %1163 = vmatprep.subr.mxu0 0.0
          %1164 = vmatpush1.msra.mxu0 0.0
          %1165 = vmatprep.subr.mxu0 0.0
          %1166 = vmatpush1.msra.mxu0 0.0
          %1167 = vmatprep.subr.mxu0 0.0
          %1168 = vmatpush1.msra.mxu0 0.0
          %1169 = vmatprep.subr.mxu0 0.0
          %1170 = vmatpush1.msra.mxu0 0.0
          %1171 = vmatprep.subr.mxu0 0.0
          %1172 = vmatpush1.msra.mxu0 0.0
          %1173 = vmatprep.subr.mxu0 0.0
          %1174 = vmatpush1.msra.mxu0 0.0
          %1175 = vmatprep.subr.mxu0 0.0
          %1176 = vmatpush1.msra.mxu0 0.0
          %1177 = vmatprep.subr.mxu0 0.0
          %1178 = vmatpush1.msra.mxu0 0.0
          %1179 = vmatprep.subr.mxu0 0.0
          %1180 = vmatpush1.msra.mxu0 0.0
          %1181 = vmatprep.subr.mxu0 0.0
          %1182 = vmatpush1.msra.mxu0 0.0
          %1183 = vmatprep.subr.mxu0 0.0
          %1184 = vmatpush1.msra.mxu0 0.0
          %1185 = vmatprep.subr.mxu0 0.0
          %1186 = vmatpush1.msra.mxu0 0.0
          %1187 = vmatprep.subr.mxu0 0.0
          %1188 = vmatpush1.msra.mxu0 0.0
          %1189 = vmatprep.subr.mxu0 0.0
          %1190 = vmatpush1.msra.mxu0 0.0
          %1191 = vmatprep.subr.mxu0 0.0
          %1192 = vmatpush1.msra.mxu0 0.0
          %1193 = vmatprep.subr.mxu0 0.0
          %1194 = vmatpush1.msra.mxu0 0.0
          %1195 = vmatprep.subr.mxu0 0.0
          %1196 = vmatpush1.msra.mxu0 0.0
          %1197 = vmatprep.mubr.f32.mxu0 0.0
          %1198 = vmatmul.mubr.f32.gmra.mrb[0].mxu0 %v634
          %v1199 = vpop.f32.mrb[0].mxu0
          %v1200 = vadd.f32 0.0, %v1199
          %v1201 = vpop.f32.mrb[0].mxu0
          %v1202 = vadd.f32 0.0, %v1201
          %1203 = vdwg.mxu0
          %v1204 = vld [vmem:[#allocation8] sm:$0xff]
          %v1205 = vld [vmem:[#allocation8 + $0x8] sm:$0xff]
          %v1206 = vld [vmem:[#allocation9] sm:$0xff]
          %v1207 = vld [vmem:[#allocation9 + $0x8] sm:$0xff]
          %vm1208 = vcmask 1043456
          %v1209 = vsel %vm1208, %v703, 0.0
          %v1210 = vrot.slane %v1209, 4
          %v1211 = vadd.f32 %v1209, %v1210
          %v1212 = vrot.slane %v1211, 2
          %v1213 = vadd.f32 %v1211, %v1212
          %v1214 = vrot.slane %v1213, 1
          %v1215 = vadd.f32 %v1213, %v1214
          %v1216 = vsel %vm1208, %v705, 0.0
          %v1217 = vrot.slane %v1216, 4
          %v1218 = vadd.f32 %v1216, %v1217
          %v1219 = vrot.slane %v1218, 2
          %v1220 = vadd.f32 %v1218, %v1219
          %v1221 = vrot.slane %v1220, 1
          %v1222 = vadd.f32 %v1220, %v1221
          %v1223 = vsel %vm1208, %v774, 0.0
          %v1224 = vrot.slane %v1223, 4
          %v1225 = vadd.f32 %v1223, %v1224
          %v1226 = vrot.slane %v1225, 2
          %v1227 = vadd.f32 %v1225, %v1226
          %v1228 = vrot.slane %v1227, 1
          %v1229 = vadd.f32 %v1227, %v1228
          %v1230 = vsel %vm1208, %v776, 0.0
          %v1231 = vrot.slane %v1230, 4
          %v1232 = vadd.f32 %v1230, %v1231
          %v1233 = vrot.slane %v1232, 2
          %v1234 = vadd.f32 %v1232, %v1233
          %v1235 = vrot.slane %v1234, 1
          %v1236 = vadd.f32 %v1234, %v1235
          %v1237 = vsel %vm1208, %v845, 0.0
          %v1238 = vrot.slane %v1237, 4
          %v1239 = vadd.f32 %v1237, %v1238
          %v1240 = vrot.slane %v1239, 2
          %v1241 = vadd.f32 %v1239, %v1240
          %v1242 = vrot.slane %v1241, 1
          %v1243 = vadd.f32 %v1241, %v1242
          %v1244 = vsel %vm1208, %v847, 0.0
          %v1245 = vrot.slane %v1244, 4
          %v1246 = vadd.f32 %v1244, %v1245
          %v1247 = vrot.slane %v1246, 2
          %v1248 = vadd.f32 %v1246, %v1247
          %v1249 = vrot.slane %v1248, 1
          %v1250 = vadd.f32 %v1248, %v1249
          %v1251 = vsel %vm1208, %v916, 0.0
          %v1252 = vrot.slane %v1251, 4
          %v1253 = vadd.f32 %v1251, %v1252
          %v1254 = vrot.slane %v1253, 2
          %v1255 = vadd.f32 %v1253, %v1254
          %v1256 = vrot.slane %v1255, 1
          %v1257 = vadd.f32 %v1255, %v1256
          %v1258 = vsel %vm1208, %v918, 0.0
          %v1259 = vrot.slane %v1258, 4
          %v1260 = vadd.f32 %v1258, %v1259
          %v1261 = vrot.slane %v1260, 2
          %v1262 = vadd.f32 %v1260, %v1261
          %v1263 = vrot.slane %v1262, 1
          %v1264 = vadd.f32 %v1262, %v1263
          %v1265 = vsel %vm1208, %v987, 0.0
          %v1266 = vrot.slane %v1265, 4
          %v1267 = vadd.f32 %v1265, %v1266
          %v1268 = vrot.slane %v1267, 2
          %v1269 = vadd.f32 %v1267, %v1268
          %v1270 = vrot.slane %v1269, 1
          %v1271 = vadd.f32 %v1269, %v1270
          %v1272 = vsel %vm1208, %v989, 0.0
          %v1273 = vrot.slane %v1272, 4
          %v1274 = vadd.f32 %v1272, %v1273
          %v1275 = vrot.slane %v1274, 2
          %v1276 = vadd.f32 %v1274, %v1275
          %v1277 = vrot.slane %v1276, 1
          %v1278 = vadd.f32 %v1276, %v1277
          %v1279 = vsel %vm1208, %v1058, 0.0
          %v1280 = vrot.slane %v1279, 4
          %v1281 = vadd.f32 %v1279, %v1280
          %v1282 = vrot.slane %v1281, 2
          %v1283 = vadd.f32 %v1281, %v1282
          %v1284 = vrot.slane %v1283, 1
          %v1285 = vadd.f32 %v1283, %v1284
          %v1286 = vsel %vm1208, %v1060, 0.0
          %v1287 = vrot.slane %v1286, 4
          %v1288 = vadd.f32 %v1286, %v1287
          %v1289 = vrot.slane %v1288, 2
          %v1290 = vadd.f32 %v1288, %v1289
          %v1291 = vrot.slane %v1290, 1
          %v1292 = vadd.f32 %v1290, %v1291
          %v1293 = vsel %vm1208, %v1129, 0.0
          %v1294 = vrot.slane %v1293, 4
          %v1295 = vadd.f32 %v1293, %v1294
          %v1296 = vrot.slane %v1295, 2
          %v1297 = vadd.f32 %v1295, %v1296
          %v1298 = vrot.slane %v1297, 1
          %v1299 = vadd.f32 %v1297, %v1298
          %v1300 = vsel %vm1208, %v1131, 0.0
          %v1301 = vrot.slane %v1300, 4
          %v1302 = vadd.f32 %v1300, %v1301
          %v1303 = vrot.slane %v1302, 2
          %v1304 = vadd.f32 %v1302, %v1303
          %v1305 = vrot.slane %v1304, 1
          %v1306 = vadd.f32 %v1304, %v1305
          %v1307 = vsel %vm1208, %v1200, 0.0
          %v1308 = vrot.slane %v1307, 4
          %v1309 = vadd.f32 %v1307, %v1308
          %v1310 = vrot.slane %v1309, 2
          %v1311 = vadd.f32 %v1309, %v1310
          %v1312 = vrot.slane %v1311, 1
          %v1313 = vadd.f32 %v1311, %v1312
          %v1314 = vsel %vm1208, %v1202, 0.0
          %v1315 = vrot.slane %v1314, 4
          %v1316 = vadd.f32 %v1314, %v1315
          %v1317 = vrot.slane %v1316, 2
          %v1318 = vadd.f32 %v1316, %v1317
          %v1319 = vrot.slane %v1318, 1
          %v1320 = vadd.f32 %v1318, %v1319
          %v1321 = vrcp.pop 4.0
          %v1322 = vmul.f32 %v1215, %v1321
          %v1323 = vmul.f32 %v1222, %v1321
          %v1324 = vmul.f32 %v1229, %v1321
          %v1325 = vmul.f32 %v1236, %v1321
          %v1326 = vmul.f32 %v1243, %v1321
          %v1327 = vmul.f32 %v1250, %v1321
          %v1328 = vmul.f32 %v1257, %v1321
          %v1329 = vmul.f32 %v1264, %v1321
          %v1330 = vmul.f32 %v1271, %v1321
          %v1331 = vmul.f32 %v1278, %v1321
          %v1332 = vmul.f32 %v1285, %v1321
          %v1333 = vmul.f32 %v1292, %v1321
          %v1334 = vmul.f32 %v1299, %v1321
          %v1335 = vmul.f32 %v1306, %v1321
          %v1336 = vmul.f32 %v1313, %v1321
          %v1337 = vmul.f32 %v1320, %v1321
          %v1338 = vmul.f32 %v703, %v703
          %v1339 = vmul.f32 %v705, %v705
          %v1340 = vmul.f32 %v774, %v774
          %v1341 = vmul.f32 %v776, %v776
          %v1342 = vmul.f32 %v845, %v845
          %v1343 = vmul.f32 %v847, %v847
          %v1344 = vmul.f32 %v916, %v916
          %v1345 = vmul.f32 %v918, %v918
          %v1346 = vmul.f32 %v987, %v987
          %v1347 = vmul.f32 %v989, %v989
          %v1348 = vmul.f32 %v1058, %v1058
          %v1349 = vmul.f32 %v1060, %v1060
          %v1350 = vmul.f32 %v1129, %v1129
          %v1351 = vmul.f32 %v1131, %v1131
          %v1352 = vmul.f32 %v1200, %v1200
          %v1353 = vmul.f32 %v1202, %v1202
          %v1354 = vsel %vm1208, %v1338, 0.0
          %v1355 = vrot.slane %v1354, 4
          %v1356 = vadd.f32 %v1354, %v1355
          %v1357 = vrot.slane %v1356, 2
          %v1358 = vadd.f32 %v1356, %v1357
          %v1359 = vrot.slane %v1358, 1
          %v1360 = vadd.f32 %v1358, %v1359
          %v1361 = vsel %vm1208, %v1339, 0.0
          %v1362 = vrot.slane %v1361, 4
          %v1363 = vadd.f32 %v1361, %v1362
          %v1364 = vrot.slane %v1363, 2
          %v1365 = vadd.f32 %v1363, %v1364
          %v1366 = vrot.slane %v1365, 1
          %v1367 = vadd.f32 %v1365, %v1366
          %v1368 = vsel %vm1208, %v1340, 0.0
          %v1369 = vrot.slane %v1368, 4
          %v1370 = vadd.f32 %v1368, %v1369
          %v1371 = vrot.slane %v1370, 2
          %v1372 = vadd.f32 %v1370, %v1371
          %v1373 = vrot.slane %v1372, 1
          %v1374 = vadd.f32 %v1372, %v1373
          %v1375 = vsel %vm1208, %v1341, 0.0
          %v1376 = vrot.slane %v1375, 4
          %v1377 = vadd.f32 %v1375, %v1376
          %v1378 = vrot.slane %v1377, 2
          %v1379 = vadd.f32 %v1377, %v1378
          %v1380 = vrot.slane %v1379, 1
          %v1381 = vadd.f32 %v1379, %v1380
          %v1382 = vsel %vm1208, %v1342, 0.0
          %v1383 = vrot.slane %v1382, 4
          %v1384 = vadd.f32 %v1382, %v1383
          %v1385 = vrot.slane %v1384, 2
          %v1386 = vadd.f32 %v1384, %v1385
          %v1387 = vrot.slane %v1386, 1
          %v1388 = vadd.f32 %v1386, %v1387
          %v1389 = vsel %vm1208, %v1343, 0.0
          %v1390 = vrot.slane %v1389, 4
          %v1391 = vadd.f32 %v1389, %v1390
          %v1392 = vrot.slane %v1391, 2
          %v1393 = vadd.f32 %v1391, %v1392
          %v1394 = vrot.slane %v1393, 1
          %v1395 = vadd.f32 %v1393, %v1394
          %v1396 = vsel %vm1208, %v1344, 0.0
          %v1397 = vrot.slane %v1396, 4
          %v1398 = vadd.f32 %v1396, %v1397
          %v1399 = vrot.slane %v1398, 2
          %v1400 = vadd.f32 %v1398, %v1399
          %v1401 = vrot.slane %v1400, 1
          %v1402 = vadd.f32 %v1400, %v1401
          %v1403 = vsel %vm1208, %v1345, 0.0
          %v1404 = vrot.slane %v1403, 4
          %v1405 = vadd.f32 %v1403, %v1404
          %v1406 = vrot.slane %v1405, 2
          %v1407 = vadd.f32 %v1405, %v1406
          %v1408 = vrot.slane %v1407, 1
          %v1409 = vadd.f32 %v1407, %v1408
          %v1410 = vsel %vm1208, %v1346, 0.0
          %v1411 = vrot.slane %v1410, 4
          %v1412 = vadd.f32 %v1410, %v1411
          %v1413 = vrot.slane %v1412, 2
          %v1414 = vadd.f32 %v1412, %v1413
          %v1415 = vrot.slane %v1414, 1
          %v1416 = vadd.f32 %v1414, %v1415
          %v1417 = vsel %vm1208, %v1347, 0.0
          %v1418 = vrot.slane %v1417, 4
          %v1419 = vadd.f32 %v1417, %v1418
          %v1420 = vrot.slane %v1419, 2
          %v1421 = vadd.f32 %v1419, %v1420
          %v1422 = vrot.slane %v1421, 1
          %v1423 = vadd.f32 %v1421, %v1422
          %v1424 = vsel %vm1208, %v1348, 0.0
          %v1425 = vrot.slane %v1424, 4
          %v1426 = vadd.f32 %v1424, %v1425
          %v1427 = vrot.slane %v1426, 2
          %v1428 = vadd.f32 %v1426, %v1427
          %v1429 = vrot.slane %v1428, 1
          %v1430 = vadd.f32 %v1428, %v1429
          %v1431 = vsel %vm1208, %v1349, 0.0
          %v1432 = vrot.slane %v1431, 4
          %v1433 = vadd.f32 %v1431, %v1432
          %v1434 = vrot.slane %v1433, 2
          %v1435 = vadd.f32 %v1433, %v1434
          %v1436 = vrot.slane %v1435, 1
          %v1437 = vadd.f32 %v1435, %v1436
          %v1438 = vsel %vm1208, %v1350, 0.0
          %v1439 = vrot.slane %v1438, 4
          %v1440 = vadd.f32 %v1438, %v1439
          %v1441 = vrot.slane %v1440, 2
          %v1442 = vadd.f32 %v1440, %v1441
          %v1443 = vrot.slane %v1442, 1
          %v1444 = vadd.f32 %v1442, %v1443
          %v1445 = vsel %vm1208, %v1351, 0.0
          %v1446 = vrot.slane %v1445, 4
          %v1447 = vadd.f32 %v1445, %v1446
          %v1448 = vrot.slane %v1447, 2
          %v1449 = vadd.f32 %v1447, %v1448
          %v1450 = vrot.slane %v1449, 1
          %v1451 = vadd.f32 %v1449, %v1450
          %v1452 = vsel %vm1208, %v1352, 0.0
          %v1453 = vrot.slane %v1452, 4
          %v1454 = vadd.f32 %v1452, %v1453
          %v1455 = vrot.slane %v1454, 2
          %v1456 = vadd.f32 %v1454, %v1455
          %v1457 = vrot.slane %v1456, 1
          %v1458 = vadd.f32 %v1456, %v1457
          %v1459 = vsel %vm1208, %v1353, 0.0
          %v1460 = vrot.slane %v1459, 4
          %v1461 = vadd.f32 %v1459, %v1460
          %v1462 = vrot.slane %v1461, 2
          %v1463 = vadd.f32 %v1461, %v1462
          %v1464 = vrot.slane %v1463, 1
          %v1465 = vadd.f32 %v1463, %v1464
          %v1466 = vmul.f32 %v1360, %v1321
          %v1467 = vmul.f32 %v1367, %v1321
          %v1468 = vmul.f32 %v1374, %v1321
          %v1469 = vmul.f32 %v1381, %v1321
          %v1470 = vmul.f32 %v1388, %v1321
          %v1471 = vmul.f32 %v1395, %v1321
          %v1472 = vmul.f32 %v1402, %v1321
          %v1473 = vmul.f32 %v1409, %v1321
          %v1474 = vmul.f32 %v1416, %v1321
          %v1475 = vmul.f32 %v1423, %v1321
          %v1476 = vmul.f32 %v1430, %v1321
          %v1477 = vmul.f32 %v1437, %v1321
          %v1478 = vmul.f32 %v1444, %v1321
          %v1479 = vmul.f32 %v1451, %v1321
          %v1480 = vmul.f32 %v1458, %v1321
          %v1481 = vmul.f32 %v1465, %v1321
          %v1482 = vmul.f32 %v1322, %v1322
          %v1483 = vmul.f32 %v1323, %v1323
          %v1484 = vmul.f32 %v1324, %v1324
          %v1485 = vmul.f32 %v1325, %v1325
          %v1486 = vmul.f32 %v1326, %v1326
          %v1487 = vmul.f32 %v1327, %v1327
          %v1488 = vmul.f32 %v1328, %v1328
          %v1489 = vmul.f32 %v1329, %v1329
          %v1490 = vmul.f32 %v1330, %v1330
          %v1491 = vmul.f32 %v1331, %v1331
          %v1492 = vmul.f32 %v1332, %v1332
          %v1493 = vmul.f32 %v1333, %v1333
          %v1494 = vmul.f32 %v1334, %v1334
          %v1495 = vmul.f32 %v1335, %v1335
          %v1496 = vmul.f32 %v1336, %v1336
          %v1497 = vmul.f32 %v1337, %v1337
          %v1498 = vsub.f32 %v1466, %v1482
          %v1499 = vsub.f32 %v1467, %v1483
          %v1500 = vsub.f32 %v1468, %v1484
          %v1501 = vsub.f32 %v1469, %v1485
          %v1502 = vsub.f32 %v1470, %v1486
          %v1503 = vsub.f32 %v1471, %v1487
          %v1504 = vsub.f32 %v1472, %v1488
          %v1505 = vsub.f32 %v1473, %v1489
          %v1506 = vsub.f32 %v1474, %v1490
          %v1507 = vsub.f32 %v1475, %v1491
          %v1508 = vsub.f32 %v1476, %v1492
          %v1509 = vsub.f32 %v1477, %v1493
          %v1510 = vsub.f32 %v1478, %v1494
          %v1511 = vsub.f32 %v1479, %v1495
          %v1512 = vsub.f32 %v1480, %v1496
          %v1513 = vsub.f32 %v1481, %v1497
          %v1514 = vsub.f32 %v703, %v1322
          %v1515 = vsub.f32 %v705, %v1323
          %v1516 = vsub.f32 %v774, %v1324
          %v1517 = vsub.f32 %v776, %v1325
          %v1518 = vsub.f32 %v845, %v1326
          %v1519 = vsub.f32 %v847, %v1327
          %v1520 = vsub.f32 %v916, %v1328
          %v1521 = vsub.f32 %v918, %v1329
          %v1522 = vsub.f32 %v987, %v1330
          %v1523 = vsub.f32 %v989, %v1331
          %v1524 = vsub.f32 %v1058, %v1332
          %v1525 = vsub.f32 %v1060, %v1333
          %v1526 = vsub.f32 %v1129, %v1334
          %v1527 = vsub.f32 %v1131, %v1335
          %v1528 = vsub.f32 %v1200, %v1336
          %v1529 = vsub.f32 %v1202, %v1337
          %v1530 = vadd.f32 %v1498, 1e-05
          %v1531 = vadd.f32 %v1499, 1e-05
          %v1532 = vadd.f32 %v1500, 1e-05
          %v1533 = vadd.f32 %v1501, 1e-05
          %v1534 = vadd.f32 %v1502, 1e-05
          %v1535 = vadd.f32 %v1503, 1e-05
          %v1536 = vadd.f32 %v1504, 1e-05
          %v1537 = vadd.f32 %v1505, 1e-05
          %v1538 = vadd.f32 %v1506, 1e-05
          %v1539 = vadd.f32 %v1507, 1e-05
          %v1540 = vadd.f32 %v1508, 1e-05
          %v1541 = vadd.f32 %v1509, 1e-05
          %v1542 = vadd.f32 %v1510, 1e-05
          %v1543 = vadd.f32 %v1511, 1e-05
          %v1544 = vadd.f32 %v1512, 1e-05
          %v1545 = vadd.f32 %v1513, 1e-05
          %v1546 = vrsqrt.pop %v1530
          %v1547 = vrsqrt.pop %v1531
          %v1548 = vrsqrt.pop %v1532
          %v1549 = vrsqrt.pop %v1533
          %v1550 = vrsqrt.pop %v1534
          %v1551 = vrsqrt.pop %v1535
          %v1552 = vrsqrt.pop %v1536
          %v1553 = vrsqrt.pop %v1537
          %v1554 = vrsqrt.pop %v1538
          %v1555 = vrsqrt.pop %v1539
          %v1556 = vrsqrt.pop %v1540
          %v1557 = vrsqrt.pop %v1541
          %v1558 = vrsqrt.pop %v1542
          %v1559 = vrsqrt.pop %v1543
          %v1560 = vrsqrt.pop %v1544
          %v1561 = vrsqrt.pop %v1545
          %v1562 = vmul.f32 %v1514, %v1546
          %v1563 = vmul.f32 %v1515, %v1547
          %v1564 = vmul.f32 %v1516, %v1548
          %v1565 = vmul.f32 %v1517, %v1549
          %v1566 = vmul.f32 %v1518, %v1550
          %v1567 = vmul.f32 %v1519, %v1551
          %v1568 = vmul.f32 %v1520, %v1552
          %v1569 = vmul.f32 %v1521, %v1553
          %v1570 = vmul.f32 %v1522, %v1554
          %v1571 = vmul.f32 %v1523, %v1555
          %v1572 = vmul.f32 %v1524, %v1556
          %v1573 = vmul.f32 %v1525, %v1557
          %v1574 = vmul.f32 %v1526, %v1558
          %v1575 = vmul.f32 %v1527, %v1559
          %v1576 = vmul.f32 %v1528, %v1560
          %v1577 = vmul.f32 %v1529, %v1561
          %v1580 = vlaneseq
          %v1581 = vshrl.u32 %v1580, 7
          %v1582 = vsub.s32 0, %v1581
          %v1583 = vrot.slane %v1204, %v1582
          %v1584 = vlaneseq
          %v1585 = vshrl.u32 %v1584, 7
          %v1586 = vsub.s32 1, %v1585
          %v1587 = vrot.slane %v1204, %v1586
          %v1588 = vlaneseq
          %v1589 = vshrl.u32 %v1588, 7
          %v1590 = vsub.s32 2, %v1589
          %v1591 = vrot.slane %v1204, %v1590
          %v1592 = vlaneseq
          %v1593 = vshrl.u32 %v1592, 7
          %v1594 = vsub.s32 3, %v1593
          %v1595 = vrot.slane %v1204, %v1594
          %v1596 = vlaneseq
          %v1597 = vshrl.u32 %v1596, 7
          %v1598 = vsub.s32 4, %v1597
          %v1599 = vrot.slane %v1204, %v1598
          %v1600 = vlaneseq
          %v1601 = vshrl.u32 %v1600, 7
          %v1602 = vsub.s32 5, %v1601
          %v1603 = vrot.slane %v1204, %v1602
          %v1604 = vlaneseq
          %v1605 = vshrl.u32 %v1604, 7
          %v1606 = vsub.s32 6, %v1605
          %v1607 = vrot.slane %v1204, %v1606
          %v1608 = vlaneseq
          %v1609 = vshrl.u32 %v1608, 7
          %v1610 = vsub.s32 7, %v1609
          %v1611 = vrot.slane %v1204, %v1610
          %v1612 = vlaneseq
          %v1613 = vshrl.u32 %v1612, 7
          %v1614 = vsub.s32 0, %v1613
          %v1615 = vrot.slane %v1205, %v1614
          %v1616 = vlaneseq
          %v1617 = vshrl.u32 %v1616, 7
          %v1618 = vsub.s32 1, %v1617
          %v1619 = vrot.slane %v1205, %v1618
          %v1620 = vlaneseq
          %v1621 = vshrl.u32 %v1620, 7
          %v1622 = vsub.s32 2, %v1621
          %v1623 = vrot.slane %v1205, %v1622
          %v1624 = vlaneseq
          %v1625 = vshrl.u32 %v1624, 7
          %v1626 = vsub.s32 3, %v1625
          %v1627 = vrot.slane %v1205, %v1626
          %v1628 = vlaneseq
          %v1629 = vshrl.u32 %v1628, 7
          %v1630 = vsub.s32 4, %v1629
          %v1631 = vrot.slane %v1205, %v1630
          %v1632 = vlaneseq
          %v1633 = vshrl.u32 %v1632, 7
          %v1634 = vsub.s32 5, %v1633
          %v1635 = vrot.slane %v1205, %v1634
          %v1636 = vlaneseq
          %v1637 = vshrl.u32 %v1636, 7
          %v1638 = vsub.s32 6, %v1637
          %v1639 = vrot.slane %v1205, %v1638
          %v1640 = vlaneseq
          %v1641 = vshrl.u32 %v1640, 7
          %v1642 = vsub.s32 7, %v1641
          %v1643 = vrot.slane %v1205, %v1642
          %v1660 = vmul.f32 %v1562, %v1583
          %v1661 = vmul.f32 %v1563, %v1587
          %v1662 = vmul.f32 %v1564, %v1591
          %v1663 = vmul.f32 %v1565, %v1595
          %v1664 = vmul.f32 %v1566, %v1599
          %v1665 = vmul.f32 %v1567, %v1603
          %v1666 = vmul.f32 %v1568, %v1607
          %v1667 = vmul.f32 %v1569, %v1611
          %v1668 = vmul.f32 %v1570, %v1615
          %v1669 = vmul.f32 %v1571, %v1619
          %v1670 = vmul.f32 %v1572, %v1623
          %v1671 = vmul.f32 %v1573, %v1627
          %v1672 = vmul.f32 %v1574, %v1631
          %v1673 = vmul.f32 %v1575, %v1635
          %v1674 = vmul.f32 %v1576, %v1639
          %v1675 = vmul.f32 %v1577, %v1643
          %v1678 = vlaneseq
          %v1679 = vshrl.u32 %v1678, 7
          %v1680 = vsub.s32 0, %v1679
          %v1681 = vrot.slane %v1206, %v1680
          %v1682 = vlaneseq
          %v1683 = vshrl.u32 %v1682, 7
          %v1684 = vsub.s32 1, %v1683
          %v1685 = vrot.slane %v1206, %v1684
          %v1686 = vlaneseq
          %v1687 = vshrl.u32 %v1686, 7
          %v1688 = vsub.s32 2, %v1687
          %v1689 = vrot.slane %v1206, %v1688
          %v1690 = vlaneseq
          %v1691 = vshrl.u32 %v1690, 7
          %v1692 = vsub.s32 3, %v1691
          %v1693 = vrot.slane %v1206, %v1692
          %v1694 = vlaneseq
          %v1695 = vshrl.u32 %v1694, 7
          %v1696 = vsub.s32 4, %v1695
          %v1697 = vrot.slane %v1206, %v1696
          %v1698 = vlaneseq
          %v1699 = vshrl.u32 %v1698, 7
          %v1700 = vsub.s32 5, %v1699
          %v1701 = vrot.slane %v1206, %v1700
          %v1702 = vlaneseq
          %v1703 = vshrl.u32 %v1702, 7
          %v1704 = vsub.s32 6, %v1703
          %v1705 = vrot.slane %v1206, %v1704
          %v1706 = vlaneseq
          %v1707 = vshrl.u32 %v1706, 7
          %v1708 = vsub.s32 7, %v1707
          %v1709 = vrot.slane %v1206, %v1708
          %v1710 = vlaneseq
          %v1711 = vshrl.u32 %v1710, 7
          %v1712 = vsub.s32 0, %v1711
          %v1713 = vrot.slane %v1207, %v1712
          %v1714 = vlaneseq
          %v1715 = vshrl.u32 %v1714, 7
          %v1716 = vsub.s32 1, %v1715
          %v1717 = vrot.slane %v1207, %v1716
          %v1718 = vlaneseq
          %v1719 = vshrl.u32 %v1718, 7
          %v1720 = vsub.s32 2, %v1719
          %v1721 = vrot.slane %v1207, %v1720
          %v1722 = vlaneseq
          %v1723 = vshrl.u32 %v1722, 7
          %v1724 = vsub.s32 3, %v1723
          %v1725 = vrot.slane %v1207, %v1724
          %v1726 = vlaneseq
          %v1727 = vshrl.u32 %v1726, 7
          %v1728 = vsub.s32 4, %v1727
          %v1729 = vrot.slane %v1207, %v1728
          %v1730 = vlaneseq
          %v1731 = vshrl.u32 %v1730, 7
          %v1732 = vsub.s32 5, %v1731
          %v1733 = vrot.slane %v1207, %v1732
          %v1734 = vlaneseq
          %v1735 = vshrl.u32 %v1734, 7
          %v1736 = vsub.s32 6, %v1735
          %v1737 = vrot.slane %v1207, %v1736
          %v1738 = vlaneseq
          %v1739 = vshrl.u32 %v1738, 7
          %v1740 = vsub.s32 7, %v1739
          %v1741 = vrot.slane %v1207, %v1740
          %v1758 = vadd.f32 %v1660, %v1681
          %v1759 = vadd.f32 %v1661, %v1685
          %v1760 = vadd.f32 %v1662, %v1689
          %v1761 = vadd.f32 %v1663, %v1693
          %v1762 = vadd.f32 %v1664, %v1697
          %v1763 = vadd.f32 %v1665, %v1701
          %v1764 = vadd.f32 %v1666, %v1705
          %v1765 = vadd.f32 %v1667, %v1709
          %v1766 = vadd.f32 %v1668, %v1713
          %v1767 = vadd.f32 %v1669, %v1717
          %v1768 = vadd.f32 %v1670, %v1721
          %v1769 = vadd.f32 %v1671, %v1725
          %v1770 = vadd.f32 %v1672, %v1729
          %v1771 = vadd.f32 %v1673, %v1733
          %v1772 = vadd.f32 %v1674, %v1737
          %v1773 = vadd.f32 %v1675, %v1741
          %vm1774 = vcmp.ge.f32.partialorder %v1758, 0.0
          %vm1775 = vcmp.ge.f32.partialorder %v1759, 0.0
          %vm1776 = vcmp.ge.f32.partialorder %v1760, 0.0
          %vm1777 = vcmp.ge.f32.partialorder %v1761, 0.0
          %vm1778 = vcmp.ge.f32.partialorder %v1762, 0.0
          %vm1779 = vcmp.ge.f32.partialorder %v1763, 0.0
          %vm1780 = vcmp.ge.f32.partialorder %v1764, 0.0
          %vm1781 = vcmp.ge.f32.partialorder %v1765, 0.0
          %vm1782 = vcmp.ge.f32.partialorder %v1766, 0.0
          %vm1783 = vcmp.ge.f32.partialorder %v1767, 0.0
          %vm1784 = vcmp.ge.f32.partialorder %v1768, 0.0
          %vm1785 = vcmp.ge.f32.partialorder %v1769, 0.0
          %vm1786 = vcmp.ge.f32.partialorder %v1770, 0.0
          %vm1787 = vcmp.ge.f32.partialorder %v1771, 0.0
          %vm1788 = vcmp.ge.f32.partialorder %v1772, 0.0
          %vm1789 = vcmp.ge.f32.partialorder %v1773, 0.0
          %v1790 = vmul.f32 %v1758, 0.02
          %v1791 = vmul.f32 %v1759, 0.02
          %v1792 = vmul.f32 %v1760, 0.02
          %v1793 = vmul.f32 %v1761, 0.02
          %v1794 = vmul.f32 %v1762, 0.02
          %v1795 = vmul.f32 %v1763, 0.02
          %v1796 = vmul.f32 %v1764, 0.02
          %v1797 = vmul.f32 %v1765, 0.02
          %v1798 = vmul.f32 %v1766, 0.02
          %v1799 = vmul.f32 %v1767, 0.02
          %v1800 = vmul.f32 %v1768, 0.02
          %v1801 = vmul.f32 %v1769, 0.02
          %v1802 = vmul.f32 %v1770, 0.02
          %v1803 = vmul.f32 %v1771, 0.02
          %v1804 = vmul.f32 %v1772, 0.02
          %v1805 = vmul.f32 %v1773, 0.02
          %v1806 = vsel %vm1774, %v1758, %v1790
          %v1807 = vsel %vm1775, %v1759, %v1791
          %v1808 = vsel %vm1776, %v1760, %v1792
          %v1809 = vsel %vm1777, %v1761, %v1793
          %v1810 = vsel %vm1778, %v1762, %v1794
          %v1811 = vsel %vm1779, %v1763, %v1795
          %v1812 = vsel %vm1780, %v1764, %v1796
          %v1813 = vsel %vm1781, %v1765, %v1797
          %v1814 = vsel %vm1782, %v1766, %v1798
          %v1815 = vsel %vm1783, %v1767, %v1799
          %v1816 = vsel %vm1784, %v1768, %v1800
          %v1817 = vsel %vm1785, %v1769, %v1801
          %v1818 = vsel %vm1786, %v1770, %v1802
          %v1819 = vsel %vm1787, %v1771, %v1803
          %v1820 = vsel %vm1788, %v1772, %v1804
          %v1821 = vsel %vm1789, %v1773, %v1805
          %v1838 = vcombine.low %v1806, %v1807
          %v1839 = vcombine.low %v1808, %v1809
          %v1840 = vcombine.low %v1810, %v1811
          %v1841 = vcombine.low %v1812, %v1813
          %v1842 = vcombine.low %v1814, %v1815
          %v1843 = vcombine.low %v1816, %v1817
          %v1844 = vcombine.low %v1818, %v1819
          %v1845 = vcombine.low %v1820, %v1821
          %1854 = vst [vmem:[#allocation2] sm:$0xff] %v1838
          %1855 = vst [vmem:[#allocation2 + $0x8] sm:$0xff] %v1839
          %1856 = vst [vmem:[#allocation2 + $0x10] sm:$0xff] %v1840
          %1857 = vst [vmem:[#allocation2 + $0x18] sm:$0xff] %v1841
          %1858 = vst [vmem:[#allocation2 + $0x20] sm:$0xff] %v1842
          %1859 = vst [vmem:[#allocation2 + $0x28] sm:$0xff] %v1843
          %1860 = vst [vmem:[#allocation2 + $0x30] sm:$0xff] %v1844
          %1861 = vst [vmem:[#allocation2 + $0x38] sm:$0xff] %v1845
          %v1862 = vld [vmem:[#allocation3] sm:$0x1]
          %v1864 = vlaneseq
          %v1865 = vshrl.u32 %v1864, 7
          %v1866 = vsub.s32 0, %v1865
          %v1867 = vrot.slane %v1862, %v1866
          %v1869 = vadd.f32 %v1867, 0.0
          %vm1870 = vcmask 3072
          %1871 = vst.msk [vmem:[%s9] sm:$0xf] %vm1870, %v1869
        $region92: #{disc_high_fc_forward.1} parent=55 // pred_fallthru
          _
        %v1872 = vld [vmem:[#allocation2] sm:$0xff]
        %v1873 = vld [vmem:[#allocation2 + $0x8] sm:$0xff]
        %v1874 = vld [vmem:[#allocation2 + $0x10] sm:$0xff]
        %v1875 = vld [vmem:[#allocation2 + $0x18] sm:$0xff]
        %v1876 = vld [vmem:[#allocation2 + $0x20] sm:$0xff]
        %v1877 = vld [vmem:[#allocation2 + $0x28] sm:$0xff]
        %v1878 = vld [vmem:[#allocation2 + $0x30] sm:$0xff]
        %v1879 = vld [vmem:[#allocation2 + $0x38] sm:$0xff]
        %v1880 = vld [vmem:[%s423] sm:$0xff]
        %v1881 = vld [vmem:[%s423 + $0x8] sm:$0xff]
        %v1882 = vld [vmem:[%s423 + $0x10] sm:$0xff]
        %v1883 = vld [vmem:[%s423 + $0x18] sm:$0xff]
        %v1884 = vld [vmem:[%s423 + $0x20] sm:$0xff]
        %v1885 = vld [vmem:[%s423 + $0x28] sm:$0xff]
        %v1886 = vld [vmem:[%s423 + $0x30] sm:$0xff]
        %v1887 = vld [vmem:[%s423 + $0x38] sm:$0xff]
        %v1888 = vld [vmem:[%s423 + $0x40] sm:$0xff]
        %v1889 = vld [vmem:[%s423 + $0x48] sm:$0xff]
        %v1890 = vld [vmem:[%s423 + $0x50] sm:$0xff]
        %v1891 = vld [vmem:[%s423 + $0x58] sm:$0xff]
        %v1892 = vld [vmem:[%s423 + $0x60] sm:$0xff]
        %v1893 = vld [vmem:[%s423 + $0x68] sm:$0xff]
        %v1894 = vld [vmem:[%s423 + $0x70] sm:$0xff]
        %v1895 = vld [vmem:[%s423 + $0x78] sm:$0xff]
        %v1896 = vld [vmem:[%s423 + $0x80] sm:$0xff]
        %v1897 = vld [vmem:[%s423 + $0x88] sm:$0xff]
        %v1898 = vld [vmem:[%s423 + $0x90] sm:$0xff]
        %v1899 = vld [vmem:[%s423 + $0x98] sm:$0xff]
        %v1900 = vld [vmem:[%s423 + $0xa0] sm:$0xff]
        %v1901 = vld [vmem:[%s423 + $0xa8] sm:$0xff]
        %v1902 = vld [vmem:[%s423 + $0xb0] sm:$0xff]
        %v1903 = vld [vmem:[%s423 + $0xb8] sm:$0xff]
        %v1904 = vld [vmem:[%s423 + $0xc0] sm:$0xff]
        %v1905 = vld [vmem:[%s423 + $0xc8] sm:$0xff]
        %v1906 = vld [vmem:[%s423 + $0xd0] sm:$0xff]
        %v1907 = vld [vmem:[%s423 + $0xd8] sm:$0xff]
        %v1908 = vld [vmem:[%s423 + $0xe0] sm:$0xff]
        %v1909 = vld [vmem:[%s423 + $0xe8] sm:$0xff]
        %v1910 = vld [vmem:[%s423 + $0xf0] sm:$0xff]
        %v1911 = vld [vmem:[%s423 + $0xf8] sm:$0xff]
        %v1912 = vld [vmem:[%s423 + $0x100] sm:$0xff]
        %v1913 = vld [vmem:[%s423 + $0x108] sm:$0xff]
        %v1914 = vld [vmem:[%s423 + $0x110] sm:$0xff]
        %v1915 = vld [vmem:[%s423 + $0x118] sm:$0xff]
        %v1916 = vld [vmem:[%s423 + $0x120] sm:$0xff]
        %v1917 = vld [vmem:[%s423 + $0x128] sm:$0xff]
        %v1918 = vld [vmem:[%s423 + $0x130] sm:$0xff]
        %v1919 = vld [vmem:[%s423 + $0x138] sm:$0xff]
        %v1920 = vld [vmem:[%s423 + $0x140] sm:$0xff]
        %v1921 = vld [vmem:[%s423 + $0x148] sm:$0xff]
        %v1922 = vld [vmem:[%s423 + $0x150] sm:$0xff]
        %v1923 = vld [vmem:[%s423 + $0x158] sm:$0xff]
        %v1924 = vld [vmem:[%s423 + $0x160] sm:$0xff]
        %v1925 = vld [vmem:[%s423 + $0x168] sm:$0xff]
        %v1926 = vld [vmem:[%s423 + $0x170] sm:$0xff]
        %v1927 = vld [vmem:[%s423 + $0x178] sm:$0xff]
        %v1928 = vld [vmem:[%s423 + $0x180] sm:$0xff]
        %v1929 = vld [vmem:[%s423 + $0x188] sm:$0xff]
        %v1930 = vld [vmem:[%s423 + $0x190] sm:$0xff]
        %v1931 = vld [vmem:[%s423 + $0x198] sm:$0xff]
        %v1932 = vld [vmem:[%s423 + $0x1a0] sm:$0xff]
        %v1933 = vld [vmem:[%s423 + $0x1a8] sm:$0xff]
        %v1934 = vld [vmem:[%s423 + $0x1b0] sm:$0xff]
        %v1935 = vld [vmem:[%s423 + $0x1b8] sm:$0xff]
        %v1936 = vld [vmem:[%s423 + $0x1c0] sm:$0xff]
        %v1937 = vld [vmem:[%s423 + $0x1c8] sm:$0xff]
        %v1938 = vld [vmem:[%s423 + $0x1d0] sm:$0xff]
        %v1939 = vld [vmem:[%s423 + $0x1d8] sm:$0xff]
        %v1940 = vld [vmem:[%s423 + $0x1e0] sm:$0xff]
        %v1941 = vld [vmem:[%s423 + $0x1e8] sm:$0xff]
        %v1942 = vld [vmem:[%s423 + $0x1f0] sm:$0xff]
        %v1943 = vld [vmem:[%s423 + $0x1f8] sm:$0xff]
        %v1944 = vld [vmem:[%s423 + $0x200] sm:$0xff]
        %v1945 = vld [vmem:[%s423 + $0x208] sm:$0xff]
        %v1946 = vld [vmem:[%s423 + $0x210] sm:$0xff]
        %v1947 = vld [vmem:[%s423 + $0x218] sm:$0xff]
        %v1948 = vld [vmem:[%s423 + $0x220] sm:$0xff]
        %v1949 = vld [vmem:[%s423 + $0x228] sm:$0xff]
        %v1950 = vld [vmem:[%s423 + $0x230] sm:$0xff]
        %v1951 = vld [vmem:[%s423 + $0x238] sm:$0xff]
        %v1952 = vld [vmem:[%s423 + $0x240] sm:$0xff]
        %v1953 = vld [vmem:[%s423 + $0x248] sm:$0xff]
        %v1954 = vld [vmem:[%s423 + $0x250] sm:$0xff]
        %v1955 = vld [vmem:[%s423 + $0x258] sm:$0xff]
        %v1956 = vld [vmem:[%s423 + $0x260] sm:$0xff]
        %v1957 = vld [vmem:[%s423 + $0x268] sm:$0xff]
        %v1958 = vld [vmem:[%s423 + $0x270] sm:$0xff]
        %v1959 = vld [vmem:[%s423 + $0x278] sm:$0xff]
        %v1960 = vld [vmem:[%s423 + $0x280] sm:$0xff]
        %v1961 = vld [vmem:[%s423 + $0x288] sm:$0xff]
        %v1962 = vld [vmem:[%s423 + $0x290] sm:$0xff]
        %v1963 = vld [vmem:[%s423 + $0x298] sm:$0xff]
        %v1964 = vld [vmem:[%s423 + $0x2a0] sm:$0xff]
        %v1965 = vld [vmem:[%s423 + $0x2a8] sm:$0xff]
        %v1966 = vld [vmem:[%s423 + $0x2b0] sm:$0xff]
        %v1967 = vld [vmem:[%s423 + $0x2b8] sm:$0xff]
        %v1968 = vld [vmem:[%s423 + $0x2c0] sm:$0xff]
        %v1969 = vld [vmem:[%s423 + $0x2c8] sm:$0xff]
        %v1970 = vld [vmem:[%s423 + $0x2d0] sm:$0xff]
        %v1971 = vld [vmem:[%s423 + $0x2d8] sm:$0xff]
        %v1972 = vld [vmem:[%s423 + $0x2e0] sm:$0xff]
        %v1973 = vld [vmem:[%s423 + $0x2e8] sm:$0xff]
        %v1974 = vld [vmem:[%s423 + $0x2f0] sm:$0xff]
        %v1975 = vld [vmem:[%s423 + $0x2f8] sm:$0xff]
        %v1976 = vld [vmem:[%s423 + $0x300] sm:$0xff]
        %v1977 = vld [vmem:[%s423 + $0x308] sm:$0xff]
        %v1978 = vld [vmem:[%s423 + $0x310] sm:$0xff]
        %v1979 = vld [vmem:[%s423 + $0x318] sm:$0xff]
        %v1980 = vld [vmem:[%s423 + $0x320] sm:$0xff]
        %v1981 = vld [vmem:[%s423 + $0x328] sm:$0xff]
        %v1982 = vld [vmem:[%s423 + $0x330] sm:$0xff]
        %v1983 = vld [vmem:[%s423 + $0x338] sm:$0xff]
        %v1984 = vld [vmem:[%s423 + $0x340] sm:$0xff]
        %v1985 = vld [vmem:[%s423 + $0x348] sm:$0xff]
        %v1986 = vld [vmem:[%s423 + $0x350] sm:$0xff]
        %v1987 = vld [vmem:[%s423 + $0x358] sm:$0xff]
        %v1988 = vld [vmem:[%s423 + $0x360] sm:$0xff]
        %v1989 = vld [vmem:[%s423 + $0x368] sm:$0xff]
        %v1990 = vld [vmem:[%s423 + $0x370] sm:$0xff]
        %v1991 = vld [vmem:[%s423 + $0x378] sm:$0xff]
        %v1992 = vld [vmem:[%s423 + $0x380] sm:$0xff]
        %v1993 = vld [vmem:[%s423 + $0x388] sm:$0xff]
        %v1994 = vld [vmem:[%s423 + $0x390] sm:$0xff]
        %v1995 = vld [vmem:[%s423 + $0x398] sm:$0xff]
        %v1996 = vld [vmem:[%s423 + $0x3a0] sm:$0xff]
        %v1997 = vld [vmem:[%s423 + $0x3a8] sm:$0xff]
        %v1998 = vld [vmem:[%s423 + $0x3b0] sm:$0xff]
        %v1999 = vld [vmem:[%s423 + $0x3b8] sm:$0xff]
        %v2000 = vld [vmem:[%s423 + $0x3c0] sm:$0xff]
        %v2001 = vld [vmem:[%s423 + $0x3c8] sm:$0xff]
        %v2002 = vld [vmem:[%s423 + $0x3d0] sm:$0xff]
        %v2003 = vld [vmem:[%s423 + $0x3d8] sm:$0xff]
        %v2004 = vld [vmem:[%s423 + $0x3e0] sm:$0xff]
        %v2005 = vld [vmem:[%s423 + $0x3e8] sm:$0xff]
        %v2006 = vld [vmem:[%s423 + $0x3f0] sm:$0xff]
        %v2007 = vld [vmem:[%s423 + $0x3f8] sm:$0xff]
        %v2008 = vld [vmem:[%s423 + $0x400] sm:$0xff]
        %v2009 = vld [vmem:[%s423 + $0x408] sm:$0xff]
        %v2010 = vld [vmem:[%s423 + $0x410] sm:$0xff]
        %v2011 = vld [vmem:[%s423 + $0x418] sm:$0xff]
        %v2012 = vld [vmem:[%s423 + $0x420] sm:$0xff]
        %v2013 = vld [vmem:[%s423 + $0x428] sm:$0xff]
        %v2014 = vld [vmem:[%s423 + $0x430] sm:$0xff]
        %v2015 = vld [vmem:[%s423 + $0x438] sm:$0xff]
        %v2016 = vld [vmem:[%s423 + $0x440] sm:$0xff]
        %v2017 = vld [vmem:[%s423 + $0x448] sm:$0xff]
        %v2018 = vld [vmem:[%s423 + $0x450] sm:$0xff]
        %v2019 = vld [vmem:[%s423 + $0x458] sm:$0xff]
        %v2020 = vld [vmem:[%s423 + $0x460] sm:$0xff]
        %v2021 = vld [vmem:[%s423 + $0x468] sm:$0xff]
        %v2022 = vld [vmem:[%s423 + $0x470] sm:$0xff]
        %v2023 = vld [vmem:[%s423 + $0x478] sm:$0xff]
        %v2024 = vld [vmem:[%s423 + $0x480] sm:$0xff]
        %v2025 = vld [vmem:[%s423 + $0x488] sm:$0xff]
        %v2026 = vld [vmem:[%s423 + $0x490] sm:$0xff]
        %v2027 = vld [vmem:[%s423 + $0x498] sm:$0xff]
        %v2028 = vld [vmem:[%s423 + $0x4a0] sm:$0xff]
        %v2029 = vld [vmem:[%s423 + $0x4a8] sm:$0xff]
        %v2030 = vld [vmem:[%s423 + $0x4b0] sm:$0xff]
        %v2031 = vld [vmem:[%s423 + $0x4b8] sm:$0xff]
        %v2032 = vld [vmem:[%s423 + $0x4c0] sm:$0xff]
        %v2033 = vld [vmem:[%s423 + $0x4c8] sm:$0xff]
        %v2034 = vld [vmem:[%s423 + $0x4d0] sm:$0xff]
        %v2035 = vld [vmem:[%s423 + $0x4d8] sm:$0xff]
        %v2036 = vld [vmem:[%s423 + $0x4e0] sm:$0xff]
        %v2037 = vld [vmem:[%s423 + $0x4e8] sm:$0xff]
        %v2038 = vld [vmem:[%s423 + $0x4f0] sm:$0xff]
        %v2039 = vld [vmem:[%s423 + $0x4f8] sm:$0xff]
        %v2040 = vld [vmem:[%s423 + $0x500] sm:$0xff]
        %v2041 = vld [vmem:[%s423 + $0x508] sm:$0xff]
        %v2042 = vld [vmem:[%s423 + $0x510] sm:$0xff]
        %v2043 = vld [vmem:[%s423 + $0x518] sm:$0xff]
        %v2044 = vld [vmem:[%s423 + $0x520] sm:$0xff]
        %v2045 = vld [vmem:[%s423 + $0x528] sm:$0xff]
        %v2046 = vld [vmem:[%s423 + $0x530] sm:$0xff]
        %v2047 = vld [vmem:[%s423 + $0x538] sm:$0xff]
        %v2048 = vld [vmem:[%s423 + $0x540] sm:$0xff]
        %v2049 = vld [vmem:[%s423 + $0x548] sm:$0xff]
        %v2050 = vld [vmem:[%s423 + $0x550] sm:$0xff]
        %v2051 = vld [vmem:[%s423 + $0x558] sm:$0xff]
        %v2052 = vld [vmem:[%s423 + $0x560] sm:$0xff]
        %v2053 = vld [vmem:[%s423 + $0x568] sm:$0xff]
        %v2054 = vld [vmem:[%s423 + $0x570] sm:$0xff]
        %v2055 = vld [vmem:[%s423 + $0x578] sm:$0xff]
        %v2056 = vld [vmem:[%s423 + $0x580] sm:$0xff]
        %v2057 = vld [vmem:[%s423 + $0x588] sm:$0xff]
        %v2058 = vld [vmem:[%s423 + $0x590] sm:$0xff]
        %v2059 = vld [vmem:[%s423 + $0x598] sm:$0xff]
        %v2060 = vld [vmem:[%s423 + $0x5a0] sm:$0xff]
        %v2061 = vld [vmem:[%s423 + $0x5a8] sm:$0xff]
        %v2062 = vld [vmem:[%s423 + $0x5b0] sm:$0xff]
        %v2063 = vld [vmem:[%s423 + $0x5b8] sm:$0xff]
        %v2064 = vld [vmem:[%s423 + $0x5c0] sm:$0xff]
        %v2065 = vld [vmem:[%s423 + $0x5c8] sm:$0xff]
        %v2066 = vld [vmem:[%s423 + $0x5d0] sm:$0xff]
        %v2067 = vld [vmem:[%s423 + $0x5d8] sm:$0xff]
        %v2068 = vld [vmem:[%s423 + $0x5e0] sm:$0xff]
        %v2069 = vld [vmem:[%s423 + $0x5e8] sm:$0xff]
        %v2070 = vld [vmem:[%s423 + $0x5f0] sm:$0xff]
        %v2071 = vld [vmem:[%s423 + $0x5f8] sm:$0xff]
        %v2072 = vld [vmem:[%s423 + $0x600] sm:$0xff]
        %v2073 = vld [vmem:[%s423 + $0x608] sm:$0xff]
        %v2074 = vld [vmem:[%s423 + $0x610] sm:$0xff]
        %v2075 = vld [vmem:[%s423 + $0x618] sm:$0xff]
        %v2076 = vld [vmem:[%s423 + $0x620] sm:$0xff]
        %v2077 = vld [vmem:[%s423 + $0x628] sm:$0xff]
        %v2078 = vld [vmem:[%s423 + $0x630] sm:$0xff]
        %v2079 = vld [vmem:[%s423 + $0x638] sm:$0xff]
        %v2080 = vld [vmem:[%s423 + $0x640] sm:$0xff]
        %v2081 = vld [vmem:[%s423 + $0x648] sm:$0xff]
        %v2082 = vld [vmem:[%s423 + $0x650] sm:$0xff]
        %v2083 = vld [vmem:[%s423 + $0x658] sm:$0xff]
        %v2084 = vld [vmem:[%s423 + $0x660] sm:$0xff]
        %v2085 = vld [vmem:[%s423 + $0x668] sm:$0xff]
        %v2086 = vld [vmem:[%s423 + $0x670] sm:$0xff]
        %v2087 = vld [vmem:[%s423 + $0x678] sm:$0xff]
        %v2088 = vld [vmem:[%s423 + $0x680] sm:$0xff]
        %v2089 = vld [vmem:[%s423 + $0x688] sm:$0xff]
        %v2090 = vld [vmem:[%s423 + $0x690] sm:$0xff]
        %v2091 = vld [vmem:[%s423 + $0x698] sm:$0xff]
        %v2092 = vld [vmem:[%s423 + $0x6a0] sm:$0xff]
        %v2093 = vld [vmem:[%s423 + $0x6a8] sm:$0xff]
        %v2094 = vld [vmem:[%s423 + $0x6b0] sm:$0xff]
        %v2095 = vld [vmem:[%s423 + $0x6b8] sm:$0xff]
        %v2096 = vld [vmem:[%s423 + $0x6c0] sm:$0xff]
        %v2097 = vld [vmem:[%s423 + $0x6c8] sm:$0xff]
        %v2098 = vld [vmem:[%s423 + $0x6d0] sm:$0xff]
        %v2099 = vld [vmem:[%s423 + $0x6d8] sm:$0xff]
        %v2100 = vld [vmem:[%s423 + $0x6e0] sm:$0xff]
        %v2101 = vld [vmem:[%s423 + $0x6e8] sm:$0xff]
        %v2102 = vld [vmem:[%s423 + $0x6f0] sm:$0xff]
        %v2103 = vld [vmem:[%s423 + $0x6f8] sm:$0xff]
        %v2104 = vld [vmem:[%s423 + $0x700] sm:$0xff]
        %v2105 = vld [vmem:[%s423 + $0x708] sm:$0xff]
        %v2106 = vld [vmem:[%s423 + $0x710] sm:$0xff]
        %v2107 = vld [vmem:[%s423 + $0x718] sm:$0xff]
        %v2108 = vld [vmem:[%s423 + $0x720] sm:$0xff]
        %v2109 = vld [vmem:[%s423 + $0x728] sm:$0xff]
        %v2110 = vld [vmem:[%s423 + $0x730] sm:$0xff]
        %v2111 = vld [vmem:[%s423 + $0x738] sm:$0xff]
        %v2112 = vld [vmem:[%s423 + $0x740] sm:$0xff]
        %v2113 = vld [vmem:[%s423 + $0x748] sm:$0xff]
        %v2114 = vld [vmem:[%s423 + $0x750] sm:$0xff]
        %v2115 = vld [vmem:[%s423 + $0x758] sm:$0xff]
        %v2116 = vld [vmem:[%s423 + $0x760] sm:$0xff]
        %v2117 = vld [vmem:[%s423 + $0x768] sm:$0xff]
        %v2118 = vld [vmem:[%s423 + $0x770] sm:$0xff]
        %v2119 = vld [vmem:[%s423 + $0x778] sm:$0xff]
        %v2120 = vld [vmem:[%s423 + $0x780] sm:$0xff]
        %v2121 = vld [vmem:[%s423 + $0x788] sm:$0xff]
        %v2122 = vld [vmem:[%s423 + $0x790] sm:$0xff]
        %v2123 = vld [vmem:[%s423 + $0x798] sm:$0xff]
        %v2124 = vld [vmem:[%s423 + $0x7a0] sm:$0xff]
        %v2125 = vld [vmem:[%s423 + $0x7a8] sm:$0xff]
        %v2126 = vld [vmem:[%s423 + $0x7b0] sm:$0xff]
        %v2127 = vld [vmem:[%s423 + $0x7b8] sm:$0xff]
        %v2128 = vld [vmem:[%s423 + $0x7c0] sm:$0xff]
        %v2129 = vld [vmem:[%s423 + $0x7c8] sm:$0xff]
        %v2130 = vld [vmem:[%s423 + $0x7d0] sm:$0xff]
        %v2131 = vld [vmem:[%s423 + $0x7d8] sm:$0xff]
        %v2132 = vld [vmem:[%s423 + $0x7e0] sm:$0xff]
        %v2133 = vld [vmem:[%s423 + $0x7e8] sm:$0xff]
        %v2134 = vld [vmem:[%s423 + $0x7f0] sm:$0xff]
        %v2135 = vld [vmem:[%s423 + $0x7f8] sm:$0xff]
        %v2136 = vld [vmem:[%s423 + $0x800] sm:$0xff]
        %v2137 = vld [vmem:[%s423 + $0x808] sm:$0xff]
        %v2138 = vld [vmem:[%s423 + $0x810] sm:$0xff]
        %v2139 = vld [vmem:[%s423 + $0x818] sm:$0xff]
        %v2140 = vld [vmem:[%s423 + $0x820] sm:$0xff]
        %v2141 = vld [vmem:[%s423 + $0x828] sm:$0xff]
        %v2142 = vld [vmem:[%s423 + $0x830] sm:$0xff]
        %v2143 = vld [vmem:[%s423 + $0x838] sm:$0xff]
        %v2144 = vld [vmem:[%s423 + $0x840] sm:$0xff]
        %v2145 = vld [vmem:[%s423 + $0x848] sm:$0xff]
        %v2146 = vld [vmem:[%s423 + $0x850] sm:$0xff]
        %v2147 = vld [vmem:[%s423 + $0x858] sm:$0xff]
        %v2148 = vld [vmem:[%s423 + $0x860] sm:$0xff]
        %v2149 = vld [vmem:[%s423 + $0x868] sm:$0xff]
        %v2150 = vld [vmem:[%s423 + $0x870] sm:$0xff]
        %v2151 = vld [vmem:[%s423 + $0x878] sm:$0xff]
        %v2152 = vld [vmem:[%s423 + $0x880] sm:$0xff]
        %v2153 = vld [vmem:[%s423 + $0x888] sm:$0xff]
        %v2154 = vld [vmem:[%s423 + $0x890] sm:$0xff]
        %v2155 = vld [vmem:[%s423 + $0x898] sm:$0xff]
        %v2156 = vld [vmem:[%s423 + $0x8a0] sm:$0xff]
        %v2157 = vld [vmem:[%s423 + $0x8a8] sm:$0xff]
        %v2158 = vld [vmem:[%s423 + $0x8b0] sm:$0xff]
        %v2159 = vld [vmem:[%s423 + $0x8b8] sm:$0xff]
        %v2160 = vld [vmem:[%s423 + $0x8c0] sm:$0xff]
        %v2161 = vld [vmem:[%s423 + $0x8c8] sm:$0xff]
        %v2162 = vld [vmem:[%s423 + $0x8d0] sm:$0xff]
        %v2163 = vld [vmem:[%s423 + $0x8d8] sm:$0xff]
        %v2164 = vld [vmem:[%s423 + $0x8e0] sm:$0xff]
        %v2165 = vld [vmem:[%s423 + $0x8e8] sm:$0xff]
        %v2166 = vld [vmem:[%s423 + $0x8f0] sm:$0xff]
        %v2167 = vld [vmem:[%s423 + $0x8f8] sm:$0xff]
        %v2168 = vld [vmem:[%s423 + $0x900] sm:$0xff]
        %v2169 = vld [vmem:[%s423 + $0x908] sm:$0xff]
        %v2170 = vld [vmem:[%s423 + $0x910] sm:$0xff]
        %v2171 = vld [vmem:[%s423 + $0x918] sm:$0xff]
        %v2172 = vld [vmem:[%s423 + $0x920] sm:$0xff]
        %v2173 = vld [vmem:[%s423 + $0x928] sm:$0xff]
        %v2174 = vld [vmem:[%s423 + $0x930] sm:$0xff]
        %v2175 = vld [vmem:[%s423 + $0x938] sm:$0xff]
        %v2176 = vld [vmem:[%s423 + $0x940] sm:$0xff]
        %v2177 = vld [vmem:[%s423 + $0x948] sm:$0xff]
        %v2178 = vld [vmem:[%s423 + $0x950] sm:$0xff]
        %v2179 = vld [vmem:[%s423 + $0x958] sm:$0xff]
        %v2180 = vld [vmem:[%s423 + $0x960] sm:$0xff]
        %v2181 = vld [vmem:[%s423 + $0x968] sm:$0xff]
        %v2182 = vld [vmem:[%s423 + $0x970] sm:$0xff]
        %v2183 = vld [vmem:[%s423 + $0x978] sm:$0xff]
        %v2184 = vld [vmem:[%s423 + $0x980] sm:$0xff]
        %v2185 = vld [vmem:[%s423 + $0x988] sm:$0xff]
        %v2186 = vld [vmem:[%s423 + $0x990] sm:$0xff]
        %v2187 = vld [vmem:[%s423 + $0x998] sm:$0xff]
        %v2188 = vld [vmem:[%s423 + $0x9a0] sm:$0xff]
        %v2189 = vld [vmem:[%s423 + $0x9a8] sm:$0xff]
        %v2190 = vld [vmem:[%s423 + $0x9b0] sm:$0xff]
        %v2191 = vld [vmem:[%s423 + $0x9b8] sm:$0xff]
        %v2192 = vld [vmem:[%s423 + $0x9c0] sm:$0xff]
        %v2193 = vld [vmem:[%s423 + $0x9c8] sm:$0xff]
        %v2194 = vld [vmem:[%s423 + $0x9d0] sm:$0xff]
        %v2195 = vld [vmem:[%s423 + $0x9d8] sm:$0xff]
        %v2196 = vld [vmem:[%s423 + $0x9e0] sm:$0xff]
        %v2197 = vld [vmem:[%s423 + $0x9e8] sm:$0xff]
        %v2198 = vld [vmem:[%s423 + $0x9f0] sm:$0xff]
        %v2199 = vld [vmem:[%s423 + $0x9f8] sm:$0xff]
        %v2200 = vld [vmem:[%s423 + $0xa00] sm:$0xff]
        %v2201 = vld [vmem:[%s423 + $0xa08] sm:$0xff]
        %v2202 = vld [vmem:[%s423 + $0xa10] sm:$0xff]
        %v2203 = vld [vmem:[%s423 + $0xa18] sm:$0xff]
        %v2204 = vld [vmem:[%s423 + $0xa20] sm:$0xff]
        %v2205 = vld [vmem:[%s423 + $0xa28] sm:$0xff]
        %v2206 = vld [vmem:[%s423 + $0xa30] sm:$0xff]
        %v2207 = vld [vmem:[%s423 + $0xa38] sm:$0xff]
        %v2208 = vld [vmem:[%s423 + $0xa40] sm:$0xff]
        %v2209 = vld [vmem:[%s423 + $0xa48] sm:$0xff]
        %v2210 = vld [vmem:[%s423 + $0xa50] sm:$0xff]
        %v2211 = vld [vmem:[%s423 + $0xa58] sm:$0xff]
        %v2212 = vld [vmem:[%s423 + $0xa60] sm:$0xff]
        %v2213 = vld [vmem:[%s423 + $0xa68] sm:$0xff]
        %v2214 = vld [vmem:[%s423 + $0xa70] sm:$0xff]
        %v2215 = vld [vmem:[%s423 + $0xa78] sm:$0xff]
        %v2216 = vld [vmem:[%s423 + $0xa80] sm:$0xff]
        %v2217 = vld [vmem:[%s423 + $0xa88] sm:$0xff]
        %v2218 = vld [vmem:[%s423 + $0xa90] sm:$0xff]
        %v2219 = vld [vmem:[%s423 + $0xa98] sm:$0xff]
        %v2220 = vld [vmem:[%s423 + $0xaa0] sm:$0xff]
        %v2221 = vld [vmem:[%s423 + $0xaa8] sm:$0xff]
        %v2222 = vld [vmem:[%s423 + $0xab0] sm:$0xff]
        %v2223 = vld [vmem:[%s423 + $0xab8] sm:$0xff]
        %v2224 = vld [vmem:[%s423 + $0xac0] sm:$0xff]
        %v2225 = vld [vmem:[%s423 + $0xac8] sm:$0xff]
        %v2226 = vld [vmem:[%s423 + $0xad0] sm:$0xff]
        %v2227 = vld [vmem:[%s423 + $0xad8] sm:$0xff]
        %v2228 = vld [vmem:[%s423 + $0xae0] sm:$0xff]
        %v2229 = vld [vmem:[%s423 + $0xae8] sm:$0xff]
        %v2230 = vld [vmem:[%s423 + $0xaf0] sm:$0xff]
        %v2231 = vld [vmem:[%s423 + $0xaf8] sm:$0xff]
        %v2232 = vld [vmem:[%s423 + $0xb00] sm:$0xff]
        %v2233 = vld [vmem:[%s423 + $0xb08] sm:$0xff]
        %v2234 = vld [vmem:[%s423 + $0xb10] sm:$0xff]
        %v2235 = vld [vmem:[%s423 + $0xb18] sm:$0xff]
        %v2236 = vld [vmem:[%s423 + $0xb20] sm:$0xff]
        %v2237 = vld [vmem:[%s423 + $0xb28] sm:$0xff]
        %v2238 = vld [vmem:[%s423 + $0xb30] sm:$0xff]
        %v2239 = vld [vmem:[%s423 + $0xb38] sm:$0xff]
        %v2240 = vld [vmem:[%s423 + $0xb40] sm:$0xff]
        %v2241 = vld [vmem:[%s423 + $0xb48] sm:$0xff]
        %v2242 = vld [vmem:[%s423 + $0xb50] sm:$0xff]
        %v2243 = vld [vmem:[%s423 + $0xb58] sm:$0xff]
        %v2244 = vld [vmem:[%s423 + $0xb60] sm:$0xff]
        %v2245 = vld [vmem:[%s423 + $0xb68] sm:$0xff]
        %v2246 = vld [vmem:[%s423 + $0xb70] sm:$0xff]
        %v2247 = vld [vmem:[%s423 + $0xb78] sm:$0xff]
        %v2248 = vld [vmem:[%s423 + $0xb80] sm:$0xff]
        %v2249 = vld [vmem:[%s423 + $0xb88] sm:$0xff]
        %v2250 = vld [vmem:[%s423 + $0xb90] sm:$0xff]
        %v2251 = vld [vmem:[%s423 + $0xb98] sm:$0xff]
        %v2252 = vld [vmem:[%s423 + $0xba0] sm:$0xff]
        %v2253 = vld [vmem:[%s423 + $0xba8] sm:$0xff]
        %v2254 = vld [vmem:[%s423 + $0xbb0] sm:$0xff]
        %v2255 = vld [vmem:[%s423 + $0xbb8] sm:$0xff]
        %v2256 = vld [vmem:[%s423 + $0xbc0] sm:$0xff]
        %v2257 = vld [vmem:[%s423 + $0xbc8] sm:$0xff]
        %v2258 = vld [vmem:[%s423 + $0xbd0] sm:$0xff]
        %v2259 = vld [vmem:[%s423 + $0xbd8] sm:$0xff]
        %v2260 = vld [vmem:[%s423 + $0xbe0] sm:$0xff]
        %v2261 = vld [vmem:[%s423 + $0xbe8] sm:$0xff]
        %v2262 = vld [vmem:[%s423 + $0xbf0] sm:$0xff]
        %v2263 = vld [vmem:[%s423 + $0xbf8] sm:$0xff]
        %v2264 = vld [vmem:[%s423 + $0xc00] sm:$0xff]
        %v2265 = vld [vmem:[%s423 + $0xc08] sm:$0xff]
        %v2266 = vld [vmem:[%s423 + $0xc10] sm:$0xff]
        %v2267 = vld [vmem:[%s423 + $0xc18] sm:$0xff]
        %v2268 = vld [vmem:[%s423 + $0xc20] sm:$0xff]
        %v2269 = vld [vmem:[%s423 + $0xc28] sm:$0xff]
        %v2270 = vld [vmem:[%s423 + $0xc30] sm:$0xff]
        %v2271 = vld [vmem:[%s423 + $0xc38] sm:$0xff]
        %v2272 = vld [vmem:[%s423 + $0xc40] sm:$0xff]
        %v2273 = vld [vmem:[%s423 + $0xc48] sm:$0xff]
        %v2274 = vld [vmem:[%s423 + $0xc50] sm:$0xff]
        %v2275 = vld [vmem:[%s423 + $0xc58] sm:$0xff]
        %v2276 = vld [vmem:[%s423 + $0xc60] sm:$0xff]
        %v2277 = vld [vmem:[%s423 + $0xc68] sm:$0xff]
        %v2278 = vld [vmem:[%s423 + $0xc70] sm:$0xff]
        %v2279 = vld [vmem:[%s423 + $0xc78] sm:$0xff]
        %v2280 = vld [vmem:[%s423 + $0xc80] sm:$0xff]
        %v2281 = vld [vmem:[%s423 + $0xc88] sm:$0xff]
        %v2282 = vld [vmem:[%s423 + $0xc90] sm:$0xff]
        %v2283 = vld [vmem:[%s423 + $0xc98] sm:$0xff]
        %v2284 = vld [vmem:[%s423 + $0xca0] sm:$0xff]
        %v2285 = vld [vmem:[%s423 + $0xca8] sm:$0xff]
        %v2286 = vld [vmem:[%s423 + $0xcb0] sm:$0xff]
        %v2287 = vld [vmem:[%s423 + $0xcb8] sm:$0xff]
        %v2288 = vld [vmem:[%s423 + $0xcc0] sm:$0xff]
        %v2289 = vld [vmem:[%s423 + $0xcc8] sm:$0xff]
        %v2290 = vld [vmem:[%s423 + $0xcd0] sm:$0xff]
        %v2291 = vld [vmem:[%s423 + $0xcd8] sm:$0xff]
        %v2292 = vld [vmem:[%s423 + $0xce0] sm:$0xff]
        %v2293 = vld [vmem:[%s423 + $0xce8] sm:$0xff]
        %v2294 = vld [vmem:[%s423 + $0xcf0] sm:$0xff]
        %v2295 = vld [vmem:[%s423 + $0xcf8] sm:$0xff]
        %v2296 = vld [vmem:[%s423 + $0xd00] sm:$0xff]
        %v2297 = vld [vmem:[%s423 + $0xd08] sm:$0xff]
        %v2298 = vld [vmem:[%s423 + $0xd10] sm:$0xff]
        %v2299 = vld [vmem:[%s423 + $0xd18] sm:$0xff]
        %v2300 = vld [vmem:[%s423 + $0xd20] sm:$0xff]
        %v2301 = vld [vmem:[%s423 + $0xd28] sm:$0xff]
        %v2302 = vld [vmem:[%s423 + $0xd30] sm:$0xff]
        %v2303 = vld [vmem:[%s423 + $0xd38] sm:$0xff]
        %v2304 = vld [vmem:[%s423 + $0xd40] sm:$0xff]
        %v2305 = vld [vmem:[%s423 + $0xd48] sm:$0xff]
        %v2306 = vld [vmem:[%s423 + $0xd50] sm:$0xff]
        %v2307 = vld [vmem:[%s423 + $0xd58] sm:$0xff]
        %v2308 = vld [vmem:[%s423 + $0xd60] sm:$0xff]
        %v2309 = vld [vmem:[%s423 + $0xd68] sm:$0xff]
        %v2310 = vld [vmem:[%s423 + $0xd70] sm:$0xff]
        %v2311 = vld [vmem:[%s423 + $0xd78] sm:$0xff]
        %v2312 = vld [vmem:[%s423 + $0xd80] sm:$0xff]
        %v2313 = vld [vmem:[%s423 + $0xd88] sm:$0xff]
        %v2314 = vld [vmem:[%s423 + $0xd90] sm:$0xff]
        %v2315 = vld [vmem:[%s423 + $0xd98] sm:$0xff]
        %v2316 = vld [vmem:[%s423 + $0xda0] sm:$0xff]
        %v2317 = vld [vmem:[%s423 + $0xda8] sm:$0xff]
        %v2318 = vld [vmem:[%s423 + $0xdb0] sm:$0xff]
        %v2319 = vld [vmem:[%s423 + $0xdb8] sm:$0xff]
        %v2320 = vld [vmem:[%s423 + $0xdc0] sm:$0xff]
        %v2321 = vld [vmem:[%s423 + $0xdc8] sm:$0xff]
        %v2322 = vld [vmem:[%s423 + $0xdd0] sm:$0xff]
        %v2323 = vld [vmem:[%s423 + $0xdd8] sm:$0xff]
        %v2324 = vld [vmem:[%s423 + $0xde0] sm:$0xff]
        %v2325 = vld [vmem:[%s423 + $0xde8] sm:$0xff]
        %v2326 = vld [vmem:[%s423 + $0xdf0] sm:$0xff]
        %v2327 = vld [vmem:[%s423 + $0xdf8] sm:$0xff]
        %v2328 = vld [vmem:[%s423 + $0xe00] sm:$0xff]
        %v2329 = vld [vmem:[%s423 + $0xe08] sm:$0xff]
        %v2330 = vld [vmem:[%s423 + $0xe10] sm:$0xff]
        %v2331 = vld [vmem:[%s423 + $0xe18] sm:$0xff]
        %v2332 = vld [vmem:[%s423 + $0xe20] sm:$0xff]
        %v2333 = vld [vmem:[%s423 + $0xe28] sm:$0xff]
        %v2334 = vld [vmem:[%s423 + $0xe30] sm:$0xff]
        %v2335 = vld [vmem:[%s423 + $0xe38] sm:$0xff]
        %v2336 = vld [vmem:[%s423 + $0xe40] sm:$0xff]
        %v2337 = vld [vmem:[%s423 + $0xe48] sm:$0xff]
        %v2338 = vld [vmem:[%s423 + $0xe50] sm:$0xff]
        %v2339 = vld [vmem:[%s423 + $0xe58] sm:$0xff]
        %v2340 = vld [vmem:[%s423 + $0xe60] sm:$0xff]
        %v2341 = vld [vmem:[%s423 + $0xe68] sm:$0xff]
        %v2342 = vld [vmem:[%s423 + $0xe70] sm:$0xff]
        %v2343 = vld [vmem:[%s423 + $0xe78] sm:$0xff]
        %v2344 = vld [vmem:[%s423 + $0xe80] sm:$0xff]
        %v2345 = vld [vmem:[%s423 + $0xe88] sm:$0xff]
        %v2346 = vld [vmem:[%s423 + $0xe90] sm:$0xff]
        %v2347 = vld [vmem:[%s423 + $0xe98] sm:$0xff]
        %v2348 = vld [vmem:[%s423 + $0xea0] sm:$0xff]
        %v2349 = vld [vmem:[%s423 + $0xea8] sm:$0xff]
        %v2350 = vld [vmem:[%s423 + $0xeb0] sm:$0xff]
        %v2351 = vld [vmem:[%s423 + $0xeb8] sm:$0xff]
        %v2352 = vld [vmem:[%s423 + $0xec0] sm:$0xff]
        %v2353 = vld [vmem:[%s423 + $0xec8] sm:$0xff]
        %v2354 = vld [vmem:[%s423 + $0xed0] sm:$0xff]
        %v2355 = vld [vmem:[%s423 + $0xed8] sm:$0xff]
        %v2356 = vld [vmem:[%s423 + $0xee0] sm:$0xff]
        %v2357 = vld [vmem:[%s423 + $0xee8] sm:$0xff]
        %v2358 = vld [vmem:[%s423 + $0xef0] sm:$0xff]
        %v2359 = vld [vmem:[%s423 + $0xef8] sm:$0xff]
        %v2360 = vld [vmem:[%s423 + $0xf00] sm:$0xff]
        %v2361 = vld [vmem:[%s423 + $0xf08] sm:$0xff]
        %v2362 = vld [vmem:[%s423 + $0xf10] sm:$0xff]
        %v2363 = vld [vmem:[%s423 + $0xf18] sm:$0xff]
        %v2364 = vld [vmem:[%s423 + $0xf20] sm:$0xff]
        %v2365 = vld [vmem:[%s423 + $0xf28] sm:$0xff]
        %v2366 = vld [vmem:[%s423 + $0xf30] sm:$0xff]
        %v2367 = vld [vmem:[%s423 + $0xf38] sm:$0xff]
        %v2368 = vld [vmem:[%s423 + $0xf40] sm:$0xff]
        %v2369 = vld [vmem:[%s423 + $0xf48] sm:$0xff]
        %v2370 = vld [vmem:[%s423 + $0xf50] sm:$0xff]
        %v2371 = vld [vmem:[%s423 + $0xf58] sm:$0xff]
        %v2372 = vld [vmem:[%s423 + $0xf60] sm:$0xff]
        %v2373 = vld [vmem:[%s423 + $0xf68] sm:$0xff]
        %v2374 = vld [vmem:[%s423 + $0xf70] sm:$0xff]
        %v2375 = vld [vmem:[%s423 + $0xf78] sm:$0xff]
        %v2376 = vld [vmem:[%s423 + $0xf80] sm:$0xff]
        %v2377 = vld [vmem:[%s423 + $0xf88] sm:$0xff]
        %v2378 = vld [vmem:[%s423 + $0xf90] sm:$0xff]
        %v2379 = vld [vmem:[%s423 + $0xf98] sm:$0xff]
        %v2380 = vld [vmem:[%s423 + $0xfa0] sm:$0xff]
        %v2381 = vld [vmem:[%s423 + $0xfa8] sm:$0xff]
        %v2382 = vld [vmem:[%s423 + $0xfb0] sm:$0xff]
        %v2383 = vld [vmem:[%s423 + $0xfb8] sm:$0xff]
        %v2384 = vld [vmem:[%s423 + $0xfc0] sm:$0xff]
        %v2385 = vld [vmem:[%s423 + $0xfc8] sm:$0xff]
        %v2386 = vld [vmem:[%s423 + $0xfd0] sm:$0xff]
        %v2387 = vld [vmem:[%s423 + $0xfd8] sm:$0xff]
        %v2388 = vld [vmem:[%s423 + $0xfe0] sm:$0xff]
        %v2389 = vld [vmem:[%s423 + $0xfe8] sm:$0xff]
        %v2390 = vld [vmem:[%s423 + $0xff0] sm:$0xff]
        %v2391 = vld [vmem:[%s423 + $0xff8] sm:$0xff]
        %v2392 = vld [vmem:[%s423 + $0x1000] sm:$0xff]
        %v2393 = vld [vmem:[%s423 + $0x1008] sm:$0xff]
        %v2394 = vld [vmem:[%s423 + $0x1010] sm:$0xff]
        %v2395 = vld [vmem:[%s423 + $0x1018] sm:$0xff]
        %v2396 = vld [vmem:[%s423 + $0x1020] sm:$0xff]
        %v2397 = vld [vmem:[%s423 + $0x1028] sm:$0xff]
        %v2398 = vld [vmem:[%s423 + $0x1030] sm:$0xff]
        %v2399 = vld [vmem:[%s423 + $0x1038] sm:$0xff]
        %v2400 = vld [vmem:[%s423 + $0x1040] sm:$0xff]
        %v2401 = vld [vmem:[%s423 + $0x1048] sm:$0xff]
        %v2402 = vld [vmem:[%s423 + $0x1050] sm:$0xff]
        %v2403 = vld [vmem:[%s423 + $0x1058] sm:$0xff]
        %v2404 = vld [vmem:[%s423 + $0x1060] sm:$0xff]
        %v2405 = vld [vmem:[%s423 + $0x1068] sm:$0xff]
        %v2406 = vld [vmem:[%s423 + $0x1070] sm:$0xff]
        %v2407 = vld [vmem:[%s423 + $0x1078] sm:$0xff]
        %v2408 = vld [vmem:[%s423 + $0x1080] sm:$0xff]
        %v2409 = vld [vmem:[%s423 + $0x1088] sm:$0xff]
        %v2410 = vld [vmem:[%s423 + $0x1090] sm:$0xff]
        %v2411 = vld [vmem:[%s423 + $0x1098] sm:$0xff]
        %v2412 = vld [vmem:[%s423 + $0x10a0] sm:$0xff]
        %v2413 = vld [vmem:[%s423 + $0x10a8] sm:$0xff]
        %v2414 = vld [vmem:[%s423 + $0x10b0] sm:$0xff]
        %v2415 = vld [vmem:[%s423 + $0x10b8] sm:$0xff]
        %v2416 = vld [vmem:[%s423 + $0x10c0] sm:$0xff]
        %v2417 = vld [vmem:[%s423 + $0x10c8] sm:$0xff]
        %v2418 = vld [vmem:[%s423 + $0x10d0] sm:$0xff]
        %v2419 = vld [vmem:[%s423 + $0x10d8] sm:$0xff]
        %v2420 = vld [vmem:[%s423 + $0x10e0] sm:$0xff]
        %v2421 = vld [vmem:[%s423 + $0x10e8] sm:$0xff]
        %v2422 = vld [vmem:[%s423 + $0x10f0] sm:$0xff]
        %v2423 = vld [vmem:[%s423 + $0x10f8] sm:$0xff]
        %v2424 = vld [vmem:[%s423 + $0x1100] sm:$0xff]
        %v2425 = vld [vmem:[%s423 + $0x1108] sm:$0xff]
        %v2426 = vld [vmem:[%s423 + $0x1110] sm:$0xff]
        %v2427 = vld [vmem:[%s423 + $0x1118] sm:$0xff]
        %v2428 = vld [vmem:[%s423 + $0x1120] sm:$0xff]
        %v2429 = vld [vmem:[%s423 + $0x1128] sm:$0xff]
        %v2430 = vld [vmem:[%s423 + $0x1130] sm:$0xff]
        %v2431 = vld [vmem:[%s423 + $0x1138] sm:$0xff]
        %v2432 = vld [vmem:[%s423 + $0x1140] sm:$0xff]
        %v2433 = vld [vmem:[%s423 + $0x1148] sm:$0xff]
        %v2434 = vld [vmem:[%s423 + $0x1150] sm:$0xff]
        %v2435 = vld [vmem:[%s423 + $0x1158] sm:$0xff]
        %v2436 = vld [vmem:[%s423 + $0x1160] sm:$0xff]
        %v2437 = vld [vmem:[%s423 + $0x1168] sm:$0xff]
        %v2438 = vld [vmem:[%s423 + $0x1170] sm:$0xff]
        %v2439 = vld [vmem:[%s423 + $0x1178] sm:$0xff]
        %v2440 = vld [vmem:[%s423 + $0x1180] sm:$0xff]
        %v2441 = vld [vmem:[%s423 + $0x1188] sm:$0xff]
        %v2442 = vld [vmem:[%s423 + $0x1190] sm:$0xff]
        %v2443 = vld [vmem:[%s423 + $0x1198] sm:$0xff]
        %v2444 = vld [vmem:[%s423 + $0x11a0] sm:$0xff]
        %v2445 = vld [vmem:[%s423 + $0x11a8] sm:$0xff]
        %v2446 = vld [vmem:[%s423 + $0x11b0] sm:$0xff]
        %v2447 = vld [vmem:[%s423 + $0x11b8] sm:$0xff]
        %v2448 = vld [vmem:[%s423 + $0x11c0] sm:$0xff]
        %v2449 = vld [vmem:[%s423 + $0x11c8] sm:$0xff]
        %v2450 = vld [vmem:[%s423 + $0x11d0] sm:$0xff]
        %v2451 = vld [vmem:[%s423 + $0x11d8] sm:$0xff]
        %v2452 = vld [vmem:[%s423 + $0x11e0] sm:$0xff]
        %v2453 = vld [vmem:[%s423 + $0x11e8] sm:$0xff]
        %v2454 = vld [vmem:[%s423 + $0x11f0] sm:$0xff]
        %v2455 = vld [vmem:[%s423 + $0x11f8] sm:$0xff]
        %v2456 = vld [vmem:[%s423 + $0x1200] sm:$0xff]
        %v2457 = vld [vmem:[%s423 + $0x1208] sm:$0xff]
        %v2458 = vld [vmem:[%s423 + $0x1210] sm:$0xff]
        %v2459 = vld [vmem:[%s423 + $0x1218] sm:$0xff]
        %v2460 = vld [vmem:[%s423 + $0x1220] sm:$0xff]
        %v2461 = vld [vmem:[%s423 + $0x1228] sm:$0xff]
        %v2462 = vld [vmem:[%s423 + $0x1230] sm:$0xff]
        %v2463 = vld [vmem:[%s423 + $0x1238] sm:$0xff]
        %v2464 = vld [vmem:[%s423 + $0x1240] sm:$0xff]
        %v2465 = vld [vmem:[%s423 + $0x1248] sm:$0xff]
        %v2466 = vld [vmem:[%s423 + $0x1250] sm:$0xff]
        %v2467 = vld [vmem:[%s423 + $0x1258] sm:$0xff]
        %v2468 = vld [vmem:[%s423 + $0x1260] sm:$0xff]
        %v2469 = vld [vmem:[%s423 + $0x1268] sm:$0xff]
        %v2470 = vld [vmem:[%s423 + $0x1270] sm:$0xff]
        %v2471 = vld [vmem:[%s423 + $0x1278] sm:$0xff]
        %v2472 = vld [vmem:[%s423 + $0x1280] sm:$0xff]
        %v2473 = vld [vmem:[%s423 + $0x1288] sm:$0xff]
        %v2474 = vld [vmem:[%s423 + $0x1290] sm:$0xff]
        %v2475 = vld [vmem:[%s423 + $0x1298] sm:$0xff]
        %v2476 = vld [vmem:[%s423 + $0x12a0] sm:$0xff]
        %v2477 = vld [vmem:[%s423 + $0x12a8] sm:$0xff]
        %v2478 = vld [vmem:[%s423 + $0x12b0] sm:$0xff]
        %v2479 = vld [vmem:[%s423 + $0x12b8] sm:$0xff]
        %v2480 = vld [vmem:[%s423 + $0x12c0] sm:$0xff]
        %v2481 = vld [vmem:[%s423 + $0x12c8] sm:$0xff]
        %v2482 = vld [vmem:[%s423 + $0x12d0] sm:$0xff]
        %v2483 = vld [vmem:[%s423 + $0x12d8] sm:$0xff]
        %v2484 = vld [vmem:[%s423 + $0x12e0] sm:$0xff]
        %v2485 = vld [vmem:[%s423 + $0x12e8] sm:$0xff]
        %v2486 = vld [vmem:[%s423 + $0x12f0] sm:$0xff]
        %v2487 = vld [vmem:[%s423 + $0x12f8] sm:$0xff]
        %v2488 = vld [vmem:[%s423 + $0x1300] sm:$0xff]
        %v2489 = vld [vmem:[%s423 + $0x1308] sm:$0xff]
        %v2490 = vld [vmem:[%s423 + $0x1310] sm:$0xff]
        %v2491 = vld [vmem:[%s423 + $0x1318] sm:$0xff]
        %v2492 = vld [vmem:[%s423 + $0x1320] sm:$0xff]
        %v2493 = vld [vmem:[%s423 + $0x1328] sm:$0xff]
        %v2494 = vld [vmem:[%s423 + $0x1330] sm:$0xff]
        %v2495 = vld [vmem:[%s423 + $0x1338] sm:$0xff]
        %v2496 = vld [vmem:[%s423 + $0x1340] sm:$0xff]
        %v2497 = vld [vmem:[%s423 + $0x1348] sm:$0xff]
        %v2498 = vld [vmem:[%s423 + $0x1350] sm:$0xff]
        %v2499 = vld [vmem:[%s423 + $0x1358] sm:$0xff]
        %v2500 = vld [vmem:[%s423 + $0x1360] sm:$0xff]
        %v2501 = vld [vmem:[%s423 + $0x1368] sm:$0xff]
        %v2502 = vld [vmem:[%s423 + $0x1370] sm:$0xff]
        %v2503 = vld [vmem:[%s423 + $0x1378] sm:$0xff]
        %v2504 = vld [vmem:[%s423 + $0x1380] sm:$0xff]
        %v2505 = vld [vmem:[%s423 + $0x1388] sm:$0xff]
        %v2506 = vld [vmem:[%s423 + $0x1390] sm:$0xff]
        %v2507 = vld [vmem:[%s423 + $0x1398] sm:$0xff]
        %v2508 = vld [vmem:[%s423 + $0x13a0] sm:$0xff]
        %v2509 = vld [vmem:[%s423 + $0x13a8] sm:$0xff]
        %v2510 = vld [vmem:[%s423 + $0x13b0] sm:$0xff]
        %v2511 = vld [vmem:[%s423 + $0x13b8] sm:$0xff]
        %v2512 = vld [vmem:[%s423 + $0x13c0] sm:$0xff]
        %v2513 = vld [vmem:[%s423 + $0x13c8] sm:$0xff]
        %v2514 = vld [vmem:[%s423 + $0x13d0] sm:$0xff]
        %v2515 = vld [vmem:[%s423 + $0x13d8] sm:$0xff]
        %v2516 = vld [vmem:[%s423 + $0x13e0] sm:$0xff]
        %v2517 = vld [vmem:[%s423 + $0x13e8] sm:$0xff]
        %v2518 = vld [vmem:[%s423 + $0x13f0] sm:$0xff]
        %v2519 = vld [vmem:[%s423 + $0x13f8] sm:$0xff]
        %v2520 = vld [vmem:[%s423 + $0x1400] sm:$0xff]
        %v2521 = vld [vmem:[%s423 + $0x1408] sm:$0xff]
        %v2522 = vld [vmem:[%s423 + $0x1410] sm:$0xff]
        %v2523 = vld [vmem:[%s423 + $0x1418] sm:$0xff]
        %v2524 = vld [vmem:[%s423 + $0x1420] sm:$0xff]
        %v2525 = vld [vmem:[%s423 + $0x1428] sm:$0xff]
        %v2526 = vld [vmem:[%s423 + $0x1430] sm:$0xff]
        %v2527 = vld [vmem:[%s423 + $0x1438] sm:$0xff]
        %v2528 = vld [vmem:[%s423 + $0x1440] sm:$0xff]
        %v2529 = vld [vmem:[%s423 + $0x1448] sm:$0xff]
        %v2530 = vld [vmem:[%s423 + $0x1450] sm:$0xff]
        %v2531 = vld [vmem:[%s423 + $0x1458] sm:$0xff]
        %v2532 = vld [vmem:[%s423 + $0x1460] sm:$0xff]
        %v2533 = vld [vmem:[%s423 + $0x1468] sm:$0xff]
        %v2534 = vld [vmem:[%s423 + $0x1470] sm:$0xff]
        %v2535 = vld [vmem:[%s423 + $0x1478] sm:$0xff]
        %v2536 = vld [vmem:[%s423 + $0x1480] sm:$0xff]
        %v2537 = vld [vmem:[%s423 + $0x1488] sm:$0xff]
        %v2538 = vld [vmem:[%s423 + $0x1490] sm:$0xff]
        %v2539 = vld [vmem:[%s423 + $0x1498] sm:$0xff]
        %v2540 = vld [vmem:[%s423 + $0x14a0] sm:$0xff]
        %v2541 = vld [vmem:[%s423 + $0x14a8] sm:$0xff]
        %v2542 = vld [vmem:[%s423 + $0x14b0] sm:$0xff]
        %v2543 = vld [vmem:[%s423 + $0x14b8] sm:$0xff]
        %v2544 = vld [vmem:[%s423 + $0x14c0] sm:$0xff]
        %v2545 = vld [vmem:[%s423 + $0x14c8] sm:$0xff]
        %v2546 = vld [vmem:[%s423 + $0x14d0] sm:$0xff]
        %v2547 = vld [vmem:[%s423 + $0x14d8] sm:$0xff]
        %v2548 = vld [vmem:[%s423 + $0x14e0] sm:$0xff]
        %v2549 = vld [vmem:[%s423 + $0x14e8] sm:$0xff]
        %v2550 = vld [vmem:[%s423 + $0x14f0] sm:$0xff]
        %v2551 = vld [vmem:[%s423 + $0x14f8] sm:$0xff]
        %v2552 = vld [vmem:[%s423 + $0x1500] sm:$0xff]
        %v2553 = vld [vmem:[%s423 + $0x1508] sm:$0xff]
        %v2554 = vld [vmem:[%s423 + $0x1510] sm:$0xff]
        %v2555 = vld [vmem:[%s423 + $0x1518] sm:$0xff]
        %v2556 = vld [vmem:[%s423 + $0x1520] sm:$0xff]
        %v2557 = vld [vmem:[%s423 + $0x1528] sm:$0xff]
        %v2558 = vld [vmem:[%s423 + $0x1530] sm:$0xff]
        %v2559 = vld [vmem:[%s423 + $0x1538] sm:$0xff]
        %v2560 = vld [vmem:[%s423 + $0x1540] sm:$0xff]
        %v2561 = vld [vmem:[%s423 + $0x1548] sm:$0xff]
        %v2562 = vld [vmem:[%s423 + $0x1550] sm:$0xff]
        %v2563 = vld [vmem:[%s423 + $0x1558] sm:$0xff]
        %v2564 = vld [vmem:[%s423 + $0x1560] sm:$0xff]
        %v2565 = vld [vmem:[%s423 + $0x1568] sm:$0xff]
        %v2566 = vld [vmem:[%s423 + $0x1570] sm:$0xff]
        %v2567 = vld [vmem:[%s423 + $0x1578] sm:$0xff]
        %v2568 = vld [vmem:[%s423 + $0x1580] sm:$0xff]
        %v2569 = vld [vmem:[%s423 + $0x1588] sm:$0xff]
        %v2570 = vld [vmem:[%s423 + $0x1590] sm:$0xff]
        %v2571 = vld [vmem:[%s423 + $0x1598] sm:$0xff]
        %v2572 = vld [vmem:[%s423 + $0x15a0] sm:$0xff]
        %v2573 = vld [vmem:[%s423 + $0x15a8] sm:$0xff]
        %v2574 = vld [vmem:[%s423 + $0x15b0] sm:$0xff]
        %v2575 = vld [vmem:[%s423 + $0x15b8] sm:$0xff]
        %v2576 = vld [vmem:[%s423 + $0x15c0] sm:$0xff]
        %v2577 = vld [vmem:[%s423 + $0x15c8] sm:$0xff]
        %v2578 = vld [vmem:[%s423 + $0x15d0] sm:$0xff]
        %v2579 = vld [vmem:[%s423 + $0x15d8] sm:$0xff]
        %v2580 = vld [vmem:[%s423 + $0x15e0] sm:$0xff]
        %v2581 = vld [vmem:[%s423 + $0x15e8] sm:$0xff]
        %v2582 = vld [vmem:[%s423 + $0x15f0] sm:$0xff]
        %v2583 = vld [vmem:[%s423 + $0x15f8] sm:$0xff]
        %v2584 = vld [vmem:[%s423 + $0x1600] sm:$0xff]
        %v2585 = vld [vmem:[%s423 + $0x1608] sm:$0xff]
        %v2586 = vld [vmem:[%s423 + $0x1610] sm:$0xff]
        %v2587 = vld [vmem:[%s423 + $0x1618] sm:$0xff]
        %v2588 = vld [vmem:[%s423 + $0x1620] sm:$0xff]
        %v2589 = vld [vmem:[%s423 + $0x1628] sm:$0xff]
        %v2590 = vld [vmem:[%s423 + $0x1630] sm:$0xff]
        %v2591 = vld [vmem:[%s423 + $0x1638] sm:$0xff]
        %v2592 = vld [vmem:[%s423 + $0x1640] sm:$0xff]
        %v2593 = vld [vmem:[%s423 + $0x1648] sm:$0xff]
        %v2594 = vld [vmem:[%s423 + $0x1650] sm:$0xff]
        %v2595 = vld [vmem:[%s423 + $0x1658] sm:$0xff]
        %v2596 = vld [vmem:[%s423 + $0x1660] sm:$0xff]
        %v2597 = vld [vmem:[%s423 + $0x1668] sm:$0xff]
        %v2598 = vld [vmem:[%s423 + $0x1670] sm:$0xff]
        %v2599 = vld [vmem:[%s423 + $0x1678] sm:$0xff]
        %v2600 = vld [vmem:[%s423 + $0x1680] sm:$0xff]
        %v2601 = vld [vmem:[%s423 + $0x1688] sm:$0xff]
        %v2602 = vld [vmem:[%s423 + $0x1690] sm:$0xff]
        %v2603 = vld [vmem:[%s423 + $0x1698] sm:$0xff]
        %v2604 = vld [vmem:[%s423 + $0x16a0] sm:$0xff]
        %v2605 = vld [vmem:[%s423 + $0x16a8] sm:$0xff]
        %v2606 = vld [vmem:[%s423 + $0x16b0] sm:$0xff]
        %v2607 = vld [vmem:[%s423 + $0x16b8] sm:$0xff]
        %v2608 = vld [vmem:[%s423 + $0x16c0] sm:$0xff]
        %v2609 = vld [vmem:[%s423 + $0x16c8] sm:$0xff]
        %v2610 = vld [vmem:[%s423 + $0x16d0] sm:$0xff]
        %v2611 = vld [vmem:[%s423 + $0x16d8] sm:$0xff]
        %v2612 = vld [vmem:[%s423 + $0x16e0] sm:$0xff]
        %v2613 = vld [vmem:[%s423 + $0x16e8] sm:$0xff]
        %v2614 = vld [vmem:[%s423 + $0x16f0] sm:$0xff]
        %v2615 = vld [vmem:[%s423 + $0x16f8] sm:$0xff]
        %v2616 = vld [vmem:[%s423 + $0x1700] sm:$0xff]
        %v2617 = vld [vmem:[%s423 + $0x1708] sm:$0xff]
        %v2618 = vld [vmem:[%s423 + $0x1710] sm:$0xff]
        %v2619 = vld [vmem:[%s423 + $0x1718] sm:$0xff]
        %v2620 = vld [vmem:[%s423 + $0x1720] sm:$0xff]
        %v2621 = vld [vmem:[%s423 + $0x1728] sm:$0xff]
        %v2622 = vld [vmem:[%s423 + $0x1730] sm:$0xff]
        %v2623 = vld [vmem:[%s423 + $0x1738] sm:$0xff]
        %v2624 = vld [vmem:[%s423 + $0x1740] sm:$0xff]
        %v2625 = vld [vmem:[%s423 + $0x1748] sm:$0xff]
        %v2626 = vld [vmem:[%s423 + $0x1750] sm:$0xff]
        %v2627 = vld [vmem:[%s423 + $0x1758] sm:$0xff]
        %v2628 = vld [vmem:[%s423 + $0x1760] sm:$0xff]
        %v2629 = vld [vmem:[%s423 + $0x1768] sm:$0xff]
        %v2630 = vld [vmem:[%s423 + $0x1770] sm:$0xff]
        %v2631 = vld [vmem:[%s423 + $0x1778] sm:$0xff]
        %v2632 = vld [vmem:[%s423 + $0x1780] sm:$0xff]
        %v2633 = vld [vmem:[%s423 + $0x1788] sm:$0xff]
        %v2634 = vld [vmem:[%s423 + $0x1790] sm:$0xff]
        %v2635 = vld [vmem:[%s423 + $0x1798] sm:$0xff]
        %v2636 = vld [vmem:[%s423 + $0x17a0] sm:$0xff]
        %v2637 = vld [vmem:[%s423 + $0x17a8] sm:$0xff]
        %v2638 = vld [vmem:[%s423 + $0x17b0] sm:$0xff]
        %v2639 = vld [vmem:[%s423 + $0x17b8] sm:$0xff]
        %v2640 = vld [vmem:[%s423 + $0x17c0] sm:$0xff]
        %v2641 = vld [vmem:[%s423 + $0x17c8] sm:$0xff]
        %v2642 = vld [vmem:[%s423 + $0x17d0] sm:$0xff]
        %v2643 = vld [vmem:[%s423 + $0x17d8] sm:$0xff]
        %v2644 = vld [vmem:[%s423 + $0x17e0] sm:$0xff]
        %v2645 = vld [vmem:[%s423 + $0x17e8] sm:$0xff]
        %v2646 = vld [vmem:[%s423 + $0x17f0] sm:$0xff]
        %v2647 = vld [vmem:[%s423 + $0x17f8] sm:$0xff]
        %v2648 = vld [vmem:[%s423 + $0x1800] sm:$0xff]
        %v2649 = vld [vmem:[%s423 + $0x1808] sm:$0xff]
        %v2650 = vld [vmem:[%s423 + $0x1810] sm:$0xff]
        %v2651 = vld [vmem:[%s423 + $0x1818] sm:$0xff]
        %v2652 = vld [vmem:[%s423 + $0x1820] sm:$0xff]
        %v2653 = vld [vmem:[%s423 + $0x1828] sm:$0xff]
        %v2654 = vld [vmem:[%s423 + $0x1830] sm:$0xff]
        %v2655 = vld [vmem:[%s423 + $0x1838] sm:$0xff]
        %v2656 = vld [vmem:[%s423 + $0x1840] sm:$0xff]
        %v2657 = vld [vmem:[%s423 + $0x1848] sm:$0xff]
        %v2658 = vld [vmem:[%s423 + $0x1850] sm:$0xff]
        %v2659 = vld [vmem:[%s423 + $0x1858] sm:$0xff]
        %v2660 = vld [vmem:[%s423 + $0x1860] sm:$0xff]
        %v2661 = vld [vmem:[%s423 + $0x1868] sm:$0xff]
        %v2662 = vld [vmem:[%s423 + $0x1870] sm:$0xff]
        %v2663 = vld [vmem:[%s423 + $0x1878] sm:$0xff]
        %v2664 = vld [vmem:[%s423 + $0x1880] sm:$0xff]
        %v2665 = vld [vmem:[%s423 + $0x1888] sm:$0xff]
        %v2666 = vld [vmem:[%s423 + $0x1890] sm:$0xff]
        %v2667 = vld [vmem:[%s423 + $0x1898] sm:$0xff]
        %v2668 = vld [vmem:[%s423 + $0x18a0] sm:$0xff]
        %v2669 = vld [vmem:[%s423 + $0x18a8] sm:$0xff]
        %v2670 = vld [vmem:[%s423 + $0x18b0] sm:$0xff]
        %v2671 = vld [vmem:[%s423 + $0x18b8] sm:$0xff]
        %v2672 = vld [vmem:[%s423 + $0x18c0] sm:$0xff]
        %v2673 = vld [vmem:[%s423 + $0x18c8] sm:$0xff]
        %v2674 = vld [vmem:[%s423 + $0x18d0] sm:$0xff]
        %v2675 = vld [vmem:[%s423 + $0x18d8] sm:$0xff]
        %v2676 = vld [vmem:[%s423 + $0x18e0] sm:$0xff]
        %v2677 = vld [vmem:[%s423 + $0x18e8] sm:$0xff]
        %v2678 = vld [vmem:[%s423 + $0x18f0] sm:$0xff]
        %v2679 = vld [vmem:[%s423 + $0x18f8] sm:$0xff]
        %v2680 = vld [vmem:[%s423 + $0x1900] sm:$0xff]
        %v2681 = vld [vmem:[%s423 + $0x1908] sm:$0xff]
        %v2682 = vld [vmem:[%s423 + $0x1910] sm:$0xff]
        %v2683 = vld [vmem:[%s423 + $0x1918] sm:$0xff]
        %v2684 = vld [vmem:[%s423 + $0x1920] sm:$0xff]
        %v2685 = vld [vmem:[%s423 + $0x1928] sm:$0xff]
        %v2686 = vld [vmem:[%s423 + $0x1930] sm:$0xff]
        %v2687 = vld [vmem:[%s423 + $0x1938] sm:$0xff]
        %v2688 = vld [vmem:[%s423 + $0x1940] sm:$0xff]
        %v2689 = vld [vmem:[%s423 + $0x1948] sm:$0xff]
        %v2690 = vld [vmem:[%s423 + $0x1950] sm:$0xff]
        %v2691 = vld [vmem:[%s423 + $0x1958] sm:$0xff]
        %v2692 = vld [vmem:[%s423 + $0x1960] sm:$0xff]
        %v2693 = vld [vmem:[%s423 + $0x1968] sm:$0xff]
        %v2694 = vld [vmem:[%s423 + $0x1970] sm:$0xff]
        %v2695 = vld [vmem:[%s423 + $0x1978] sm:$0xff]
        %v2696 = vld [vmem:[%s423 + $0x1980] sm:$0xff]
        %v2697 = vld [vmem:[%s423 + $0x1988] sm:$0xff]
        %v2698 = vld [vmem:[%s423 + $0x1990] sm:$0xff]
        %v2699 = vld [vmem:[%s423 + $0x1998] sm:$0xff]
        %v2700 = vld [vmem:[%s423 + $0x19a0] sm:$0xff]
        %v2701 = vld [vmem:[%s423 + $0x19a8] sm:$0xff]
        %v2702 = vld [vmem:[%s423 + $0x19b0] sm:$0xff]
        %v2703 = vld [vmem:[%s423 + $0x19b8] sm:$0xff]
        %v2704 = vld [vmem:[%s423 + $0x19c0] sm:$0xff]
        %v2705 = vld [vmem:[%s423 + $0x19c8] sm:$0xff]
        %v2706 = vld [vmem:[%s423 + $0x19d0] sm:$0xff]
        %v2707 = vld [vmem:[%s423 + $0x19d8] sm:$0xff]
        %v2708 = vld [vmem:[%s423 + $0x19e0] sm:$0xff]
        %v2709 = vld [vmem:[%s423 + $0x19e8] sm:$0xff]
        %v2710 = vld [vmem:[%s423 + $0x19f0] sm:$0xff]
        %v2711 = vld [vmem:[%s423 + $0x19f8] sm:$0xff]
        %v2712 = vld [vmem:[%s423 + $0x1a00] sm:$0xff]
        %v2713 = vld [vmem:[%s423 + $0x1a08] sm:$0xff]
        %v2714 = vld [vmem:[%s423 + $0x1a10] sm:$0xff]
        %v2715 = vld [vmem:[%s423 + $0x1a18] sm:$0xff]
        %v2716 = vld [vmem:[%s423 + $0x1a20] sm:$0xff]
        %v2717 = vld [vmem:[%s423 + $0x1a28] sm:$0xff]
        %v2718 = vld [vmem:[%s423 + $0x1a30] sm:$0xff]
        %v2719 = vld [vmem:[%s423 + $0x1a38] sm:$0xff]
        %v2720 = vld [vmem:[%s423 + $0x1a40] sm:$0xff]
        %v2721 = vld [vmem:[%s423 + $0x1a48] sm:$0xff]
        %v2722 = vld [vmem:[%s423 + $0x1a50] sm:$0xff]
        %v2723 = vld [vmem:[%s423 + $0x1a58] sm:$0xff]
        %v2724 = vld [vmem:[%s423 + $0x1a60] sm:$0xff]
        %v2725 = vld [vmem:[%s423 + $0x1a68] sm:$0xff]
        %v2726 = vld [vmem:[%s423 + $0x1a70] sm:$0xff]
        %v2727 = vld [vmem:[%s423 + $0x1a78] sm:$0xff]
        %v2728 = vld [vmem:[%s423 + $0x1a80] sm:$0xff]
        %v2729 = vld [vmem:[%s423 + $0x1a88] sm:$0xff]
        %v2730 = vld [vmem:[%s423 + $0x1a90] sm:$0xff]
        %v2731 = vld [vmem:[%s423 + $0x1a98] sm:$0xff]
        %v2732 = vld [vmem:[%s423 + $0x1aa0] sm:$0xff]
        %v2733 = vld [vmem:[%s423 + $0x1aa8] sm:$0xff]
        %v2734 = vld [vmem:[%s423 + $0x1ab0] sm:$0xff]
        %v2735 = vld [vmem:[%s423 + $0x1ab8] sm:$0xff]
        %v2736 = vld [vmem:[%s423 + $0x1ac0] sm:$0xff]
        %v2737 = vld [vmem:[%s423 + $0x1ac8] sm:$0xff]
        %v2738 = vld [vmem:[%s423 + $0x1ad0] sm:$0xff]
        %v2739 = vld [vmem:[%s423 + $0x1ad8] sm:$0xff]
        %v2740 = vld [vmem:[%s423 + $0x1ae0] sm:$0xff]
        %v2741 = vld [vmem:[%s423 + $0x1ae8] sm:$0xff]
        %v2742 = vld [vmem:[%s423 + $0x1af0] sm:$0xff]
        %v2743 = vld [vmem:[%s423 + $0x1af8] sm:$0xff]
        %v2744 = vld [vmem:[%s423 + $0x1b00] sm:$0xff]
        %v2745 = vld [vmem:[%s423 + $0x1b08] sm:$0xff]
        %v2746 = vld [vmem:[%s423 + $0x1b10] sm:$0xff]
        %v2747 = vld [vmem:[%s423 + $0x1b18] sm:$0xff]
        %v2748 = vld [vmem:[%s423 + $0x1b20] sm:$0xff]
        %v2749 = vld [vmem:[%s423 + $0x1b28] sm:$0xff]
        %v2750 = vld [vmem:[%s423 + $0x1b30] sm:$0xff]
        %v2751 = vld [vmem:[%s423 + $0x1b38] sm:$0xff]
        %v2752 = vld [vmem:[%s423 + $0x1b40] sm:$0xff]
        %v2753 = vld [vmem:[%s423 + $0x1b48] sm:$0xff]
        %v2754 = vld [vmem:[%s423 + $0x1b50] sm:$0xff]
        %v2755 = vld [vmem:[%s423 + $0x1b58] sm:$0xff]
        %v2756 = vld [vmem:[%s423 + $0x1b60] sm:$0xff]
        %v2757 = vld [vmem:[%s423 + $0x1b68] sm:$0xff]
        %v2758 = vld [vmem:[%s423 + $0x1b70] sm:$0xff]
        %v2759 = vld [vmem:[%s423 + $0x1b78] sm:$0xff]
        %v2760 = vld [vmem:[%s423 + $0x1b80] sm:$0xff]
        %v2761 = vld [vmem:[%s423 + $0x1b88] sm:$0xff]
        %v2762 = vld [vmem:[%s423 + $0x1b90] sm:$0xff]
        %v2763 = vld [vmem:[%s423 + $0x1b98] sm:$0xff]
        %v2764 = vld [vmem:[%s423 + $0x1ba0] sm:$0xff]
        %v2765 = vld [vmem:[%s423 + $0x1ba8] sm:$0xff]
        %v2766 = vld [vmem:[%s423 + $0x1bb0] sm:$0xff]
        %v2767 = vld [vmem:[%s423 + $0x1bb8] sm:$0xff]
        %v2768 = vld [vmem:[%s423 + $0x1bc0] sm:$0xff]
        %v2769 = vld [vmem:[%s423 + $0x1bc8] sm:$0xff]
        %v2770 = vld [vmem:[%s423 + $0x1bd0] sm:$0xff]
        %v2771 = vld [vmem:[%s423 + $0x1bd8] sm:$0xff]
        %v2772 = vld [vmem:[%s423 + $0x1be0] sm:$0xff]
        %v2773 = vld [vmem:[%s423 + $0x1be8] sm:$0xff]
        %v2774 = vld [vmem:[%s423 + $0x1bf0] sm:$0xff]
        %v2775 = vld [vmem:[%s423 + $0x1bf8] sm:$0xff]
        %v2776 = vld [vmem:[%s423 + $0x1c00] sm:$0xff]
        %v2777 = vld [vmem:[%s423 + $0x1c08] sm:$0xff]
        %v2778 = vld [vmem:[%s423 + $0x1c10] sm:$0xff]
        %v2779 = vld [vmem:[%s423 + $0x1c18] sm:$0xff]
        %v2780 = vld [vmem:[%s423 + $0x1c20] sm:$0xff]
        %v2781 = vld [vmem:[%s423 + $0x1c28] sm:$0xff]
        %v2782 = vld [vmem:[%s423 + $0x1c30] sm:$0xff]
        %v2783 = vld [vmem:[%s423 + $0x1c38] sm:$0xff]
        %v2784 = vld [vmem:[%s423 + $0x1c40] sm:$0xff]
        %v2785 = vld [vmem:[%s423 + $0x1c48] sm:$0xff]
        %v2786 = vld [vmem:[%s423 + $0x1c50] sm:$0xff]
        %v2787 = vld [vmem:[%s423 + $0x1c58] sm:$0xff]
        %v2788 = vld [vmem:[%s423 + $0x1c60] sm:$0xff]
        %v2789 = vld [vmem:[%s423 + $0x1c68] sm:$0xff]
        %v2790 = vld [vmem:[%s423 + $0x1c70] sm:$0xff]
        %v2791 = vld [vmem:[%s423 + $0x1c78] sm:$0xff]
        %v2792 = vld [vmem:[%s423 + $0x1c80] sm:$0xff]
        %v2793 = vld [vmem:[%s423 + $0x1c88] sm:$0xff]
        %v2794 = vld [vmem:[%s423 + $0x1c90] sm:$0xff]
        %v2795 = vld [vmem:[%s423 + $0x1c98] sm:$0xff]
        %v2796 = vld [vmem:[%s423 + $0x1ca0] sm:$0xff]
        %v2797 = vld [vmem:[%s423 + $0x1ca8] sm:$0xff]
        %v2798 = vld [vmem:[%s423 + $0x1cb0] sm:$0xff]
        %v2799 = vld [vmem:[%s423 + $0x1cb8] sm:$0xff]
        %v2800 = vld [vmem:[%s423 + $0x1cc0] sm:$0xff]
        %v2801 = vld [vmem:[%s423 + $0x1cc8] sm:$0xff]
        %v2802 = vld [vmem:[%s423 + $0x1cd0] sm:$0xff]
        %v2803 = vld [vmem:[%s423 + $0x1cd8] sm:$0xff]
        %v2804 = vld [vmem:[%s423 + $0x1ce0] sm:$0xff]
        %v2805 = vld [vmem:[%s423 + $0x1ce8] sm:$0xff]
        %v2806 = vld [vmem:[%s423 + $0x1cf0] sm:$0xff]
        %v2807 = vld [vmem:[%s423 + $0x1cf8] sm:$0xff]
        %v2808 = vld [vmem:[%s423 + $0x1d00] sm:$0xff]
        %v2809 = vld [vmem:[%s423 + $0x1d08] sm:$0xff]
        %v2810 = vld [vmem:[%s423 + $0x1d10] sm:$0xff]
        %v2811 = vld [vmem:[%s423 + $0x1d18] sm:$0xff]
        %v2812 = vld [vmem:[%s423 + $0x1d20] sm:$0xff]
        %v2813 = vld [vmem:[%s423 + $0x1d28] sm:$0xff]
        %v2814 = vld [vmem:[%s423 + $0x1d30] sm:$0xff]
        %v2815 = vld [vmem:[%s423 + $0x1d38] sm:$0xff]
        %v2816 = vld [vmem:[%s423 + $0x1d40] sm:$0xff]
        %v2817 = vld [vmem:[%s423 + $0x1d48] sm:$0xff]
        %v2818 = vld [vmem:[%s423 + $0x1d50] sm:$0xff]
        %v2819 = vld [vmem:[%s423 + $0x1d58] sm:$0xff]
        %v2820 = vld [vmem:[%s423 + $0x1d60] sm:$0xff]
        %v2821 = vld [vmem:[%s423 + $0x1d68] sm:$0xff]
        %v2822 = vld [vmem:[%s423 + $0x1d70] sm:$0xff]
        %v2823 = vld [vmem:[%s423 + $0x1d78] sm:$0xff]
        %v2824 = vld [vmem:[%s423 + $0x1d80] sm:$0xff]
        %v2825 = vld [vmem:[%s423 + $0x1d88] sm:$0xff]
        %v2826 = vld [vmem:[%s423 + $0x1d90] sm:$0xff]
        %v2827 = vld [vmem:[%s423 + $0x1d98] sm:$0xff]
        %v2828 = vld [vmem:[%s423 + $0x1da0] sm:$0xff]
        %v2829 = vld [vmem:[%s423 + $0x1da8] sm:$0xff]
        %v2830 = vld [vmem:[%s423 + $0x1db0] sm:$0xff]
        %v2831 = vld [vmem:[%s423 + $0x1db8] sm:$0xff]
        %v2832 = vld [vmem:[%s423 + $0x1dc0] sm:$0xff]
        %v2833 = vld [vmem:[%s423 + $0x1dc8] sm:$0xff]
        %v2834 = vld [vmem:[%s423 + $0x1dd0] sm:$0xff]
        %v2835 = vld [vmem:[%s423 + $0x1dd8] sm:$0xff]
        %v2836 = vld [vmem:[%s423 + $0x1de0] sm:$0xff]
        %v2837 = vld [vmem:[%s423 + $0x1de8] sm:$0xff]
        %v2838 = vld [vmem:[%s423 + $0x1df0] sm:$0xff]
        %v2839 = vld [vmem:[%s423 + $0x1df8] sm:$0xff]
        %v2840 = vld [vmem:[%s423 + $0x1e00] sm:$0xff]
        %v2841 = vld [vmem:[%s423 + $0x1e08] sm:$0xff]
        %v2842 = vld [vmem:[%s423 + $0x1e10] sm:$0xff]
        %v2843 = vld [vmem:[%s423 + $0x1e18] sm:$0xff]
        %v2844 = vld [vmem:[%s423 + $0x1e20] sm:$0xff]
        %v2845 = vld [vmem:[%s423 + $0x1e28] sm:$0xff]
        %v2846 = vld [vmem:[%s423 + $0x1e30] sm:$0xff]
        %v2847 = vld [vmem:[%s423 + $0x1e38] sm:$0xff]
        %v2848 = vld [vmem:[%s423 + $0x1e40] sm:$0xff]
        %v2849 = vld [vmem:[%s423 + $0x1e48] sm:$0xff]
        %v2850 = vld [vmem:[%s423 + $0x1e50] sm:$0xff]
        %v2851 = vld [vmem:[%s423 + $0x1e58] sm:$0xff]
        %v2852 = vld [vmem:[%s423 + $0x1e60] sm:$0xff]
        %v2853 = vld [vmem:[%s423 + $0x1e68] sm:$0xff]
        %v2854 = vld [vmem:[%s423 + $0x1e70] sm:$0xff]
        %v2855 = vld [vmem:[%s423 + $0x1e78] sm:$0xff]
        %v2856 = vld [vmem:[%s423 + $0x1e80] sm:$0xff]
        %v2857 = vld [vmem:[%s423 + $0x1e88] sm:$0xff]
        %v2858 = vld [vmem:[%s423 + $0x1e90] sm:$0xff]
        %v2859 = vld [vmem:[%s423 + $0x1e98] sm:$0xff]
        %v2860 = vld [vmem:[%s423 + $0x1ea0] sm:$0xff]
        %v2861 = vld [vmem:[%s423 + $0x1ea8] sm:$0xff]
        %v2862 = vld [vmem:[%s423 + $0x1eb0] sm:$0xff]
        %v2863 = vld [vmem:[%s423 + $0x1eb8] sm:$0xff]
        %v2864 = vld [vmem:[%s423 + $0x1ec0] sm:$0xff]
        %v2865 = vld [vmem:[%s423 + $0x1ec8] sm:$0xff]
        %v2866 = vld [vmem:[%s423 + $0x1ed0] sm:$0xff]
        %v2867 = vld [vmem:[%s423 + $0x1ed8] sm:$0xff]
        %v2868 = vld [vmem:[%s423 + $0x1ee0] sm:$0xff]
        %v2869 = vld [vmem:[%s423 + $0x1ee8] sm:$0xff]
        %v2870 = vld [vmem:[%s423 + $0x1ef0] sm:$0xff]
        %v2871 = vld [vmem:[%s423 + $0x1ef8] sm:$0xff]
        %v2872 = vld [vmem:[%s423 + $0x1f00] sm:$0xff]
        %v2873 = vld [vmem:[%s423 + $0x1f08] sm:$0xff]
        %v2874 = vld [vmem:[%s423 + $0x1f10] sm:$0xff]
        %v2875 = vld [vmem:[%s423 + $0x1f18] sm:$0xff]
        %v2876 = vld [vmem:[%s423 + $0x1f20] sm:$0xff]
        %v2877 = vld [vmem:[%s423 + $0x1f28] sm:$0xff]
        %v2878 = vld [vmem:[%s423 + $0x1f30] sm:$0xff]
        %v2879 = vld [vmem:[%s423 + $0x1f38] sm:$0xff]
        %v2880 = vld [vmem:[%s423 + $0x1f40] sm:$0xff]
        %v2881 = vld [vmem:[%s423 + $0x1f48] sm:$0xff]
        %v2882 = vld [vmem:[%s423 + $0x1f50] sm:$0xff]
        %v2883 = vld [vmem:[%s423 + $0x1f58] sm:$0xff]
        %v2884 = vld [vmem:[%s423 + $0x1f60] sm:$0xff]
        %v2885 = vld [vmem:[%s423 + $0x1f68] sm:$0xff]
        %v2886 = vld [vmem:[%s423 + $0x1f70] sm:$0xff]
        %v2887 = vld [vmem:[%s423 + $0x1f78] sm:$0xff]
        %v2888 = vld [vmem:[%s423 + $0x1f80] sm:$0xff]
        %v2889 = vld [vmem:[%s423 + $0x1f88] sm:$0xff]
        %v2890 = vld [vmem:[%s423 + $0x1f90] sm:$0xff]
        %v2891 = vld [vmem:[%s423 + $0x1f98] sm:$0xff]
        %v2892 = vld [vmem:[%s423 + $0x1fa0] sm:$0xff]
        %v2893 = vld [vmem:[%s423 + $0x1fa8] sm:$0xff]
        %v2894 = vld [vmem:[%s423 + $0x1fb0] sm:$0xff]
        %v2895 = vld [vmem:[%s423 + $0x1fb8] sm:$0xff]
        %v2896 = vld [vmem:[%s423 + $0x1fc0] sm:$0xff]
        %v2897 = vld [vmem:[%s423 + $0x1fc8] sm:$0xff]
        %v2898 = vld [vmem:[%s423 + $0x1fd0] sm:$0xff]
        %v2899 = vld [vmem:[%s423 + $0x1fd8] sm:$0xff]
        %v2900 = vld [vmem:[%s423 + $0x1fe0] sm:$0xff]
        %v2901 = vld [vmem:[%s423 + $0x1fe8] sm:$0xff]
        %v2902 = vld [vmem:[%s423 + $0x1ff0] sm:$0xff]
        %v2903 = vld [vmem:[%s423 + $0x1ff8] sm:$0xff]
        %v2912 = vcombine.high %v1872, %v1872
        %v2913 = vcombine.high %v1873, %v1873
        %v2914 = vcombine.high %v1874, %v1874
        %v2915 = vcombine.high %v1875, %v1875
        %v2916 = vcombine.high %v1876, %v1876
        %v2917 = vcombine.high %v1877, %v1877
        %v2918 = vcombine.high %v1878, %v1878
        %v2919 = vcombine.high %v1879, %v1879
        %2928 = vmatprep.subr.mxu0 %v1881
        %2929 = vmatpush1.msra.mxu0 %v1880
        %2930 = vmatprep.subr.mxu0 %v1885
        %2931 = vmatpush1.msra.mxu0 %v1884
        %2932 = vmatprep.subr.mxu0 %v1889
        %2933 = vmatpush1.msra.mxu0 %v1888
        %2934 = vmatprep.subr.mxu0 %v1893
        %2935 = vmatpush1.msra.mxu0 %v1892
        %2936 = vmatprep.subr.mxu0 %v1897
        %2937 = vmatpush1.msra.mxu0 %v1896
        %2938 = vmatprep.subr.mxu0 %v1901
        %2939 = vmatpush1.msra.mxu0 %v1900
        %2940 = vmatprep.subr.mxu0 %v1905
        %2941 = vmatpush1.msra.mxu0 %v1904
        %2942 = vmatprep.subr.mxu0 %v1909
        %2943 = vmatpush1.msra.mxu0 %v1908
        %2944 = vmatprep.subr.mxu0 %v1913
        %2945 = vmatpush1.msra.mxu0 %v1912
        %2946 = vmatprep.subr.mxu0 %v1917
        %2947 = vmatpush1.msra.mxu0 %v1916
        %2948 = vmatprep.subr.mxu0 %v1921
        %2949 = vmatpush1.msra.mxu0 %v1920
        %2950 = vmatprep.subr.mxu0 %v1925
        %2951 = vmatpush1.msra.mxu0 %v1924
        %2952 = vmatprep.subr.mxu0 %v1929
        %2953 = vmatpush1.msra.mxu0 %v1928
        %2954 = vmatprep.subr.mxu0 %v1933
        %2955 = vmatpush1.msra.mxu0 %v1932
        %2956 = vmatprep.subr.mxu0 %v1937
        %2957 = vmatpush1.msra.mxu0 %v1936
        %2958 = vmatprep.subr.mxu0 %v1941
        %2959 = vmatpush1.msra.mxu0 %v1940
        %2960 = vmatprep.subr.mxu0 %v1945
        %2961 = vmatpush1.msra.mxu0 %v1944
        %2962 = vmatprep.subr.mxu0 %v1949
        %2963 = vmatpush1.msra.mxu0 %v1948
        %2964 = vmatprep.subr.mxu0 %v1953
        %2965 = vmatpush1.msra.mxu0 %v1952
        %2966 = vmatprep.subr.mxu0 %v1957
        %2967 = vmatpush1.msra.mxu0 %v1956
        %2968 = vmatprep.subr.mxu0 %v1961
        %2969 = vmatpush1.msra.mxu0 %v1960
        %2970 = vmatprep.subr.mxu0 %v1965
        %2971 = vmatpush1.msra.mxu0 %v1964
        %2972 = vmatprep.subr.mxu0 %v1969
        %2973 = vmatpush1.msra.mxu0 %v1968
        %2974 = vmatprep.subr.mxu0 %v1973
        %2975 = vmatpush1.msra.mxu0 %v1972
        %2976 = vmatprep.subr.mxu0 %v1977
        %2977 = vmatpush1.msra.mxu0 %v1976
        %2978 = vmatprep.subr.mxu0 %v1981
        %2979 = vmatpush1.msra.mxu0 %v1980
        %2980 = vmatprep.subr.mxu0 %v1985
        %2981 = vmatpush1.msra.mxu0 %v1984
        %2982 = vmatprep.subr.mxu0 %v1989
        %2983 = vmatpush1.msra.mxu0 %v1988
        %2984 = vmatprep.subr.mxu0 %v1993
        %2985 = vmatpush1.msra.mxu0 %v1992
        %2986 = vmatprep.subr.mxu0 %v1997
        %2987 = vmatpush1.msra.mxu0 %v1996
        %2988 = vmatprep.subr.mxu0 %v2001
        %2989 = vmatpush1.msra.mxu0 %v2000
        %2990 = vmatprep.subr.mxu0 %v2005
        %2991 = vmatpush1.msra.mxu0 %v2004
        %2992 = vmatprep.mubr.f32.mxu0 %v2912
        %2993 = vmatmul.mubr.f32.gmra.mrb[0].mxu0 %v1872
        %v2994 = vpop.f32.mrb[0].mxu0
        %v2995 = vadd.f32 0.0, %v2994
        %v2996 = vpop.f32.mrb[0].mxu0
        %v2997 = vadd.f32 0.0, %v2996
        %2998 = vdwg.mxu0
        %2999 = vmatprep.subr.mxu0 %v2009
        %3000 = vmatpush1.msra.mxu0 %v2008
        %3001 = vmatprep.subr.mxu0 %v2013
        %3002 = vmatpush1.msra.mxu0 %v2012
        %3003 = vmatprep.subr.mxu0 %v2017
        %3004 = vmatpush1.msra.mxu0 %v2016
        %3005 = vmatprep.subr.mxu0 %v2021
        %3006 = vmatpush1.msra.mxu0 %v2020
        %3007 = vmatprep.subr.mxu0 %v2025
        %3008 = vmatpush1.msra.mxu0 %v2024
        %3009 = vmatprep.subr.mxu0 %v2029
        %3010 = vmatpush1.msra.mxu0 %v2028
        %3011 = vmatprep.subr.mxu0 %v2033
        %3012 = vmatpush1.msra.mxu0 %v2032
        %3013 = vmatprep.subr.mxu0 %v2037
        %3014 = vmatpush1.msra.mxu0 %v2036
        %3015 = vmatprep.subr.mxu0 %v2041
        %3016 = vmatpush1.msra.mxu0 %v2040
        %3017 = vmatprep.subr.mxu0 %v2045
        %3018 = vmatpush1.msra.mxu0 %v2044
        %3019 = vmatprep.subr.mxu0 %v2049
        %3020 = vmatpush1.msra.mxu0 %v2048
        %3021 = vmatprep.subr.mxu0 %v2053
        %3022 = vmatpush1.msra.mxu0 %v2052
        %3023 = vmatprep.subr.mxu0 %v2057
        %3024 = vmatpush1.msra.mxu0 %v2056
        %3025 = vmatprep.subr.mxu0 %v2061
        %3026 = vmatpush1.msra.mxu0 %v2060
        %3027 = vmatprep.subr.mxu0 %v2065
        %3028 = vmatpush1.msra.mxu0 %v2064
        %3029 = vmatprep.subr.mxu0 %v2069
        %3030 = vmatpush1.msra.mxu0 %v2068
        %3031 = vmatprep.subr.mxu0 %v2073
        %3032 = vmatpush1.msra.mxu0 %v2072
        %3033 = vmatprep.subr.mxu0 %v2077
        %3034 = vmatpush1.msra.mxu0 %v2076
        %3035 = vmatprep.subr.mxu0 %v2081
        %3036 = vmatpush1.msra.mxu0 %v2080
        %3037 = vmatprep.subr.mxu0 %v2085
        %3038 = vmatpush1.msra.mxu0 %v2084
        %3039 = vmatprep.subr.mxu0 %v2089
        %3040 = vmatpush1.msra.mxu0 %v2088
        %3041 = vmatprep.subr.mxu0 %v2093
        %3042 = vmatpush1.msra.mxu0 %v2092
        %3043 = vmatprep.subr.mxu0 %v2097
        %3044 = vmatpush1.msra.mxu0 %v2096
        %3045 = vmatprep.subr.mxu0 %v2101
        %3046 = vmatpush1.msra.mxu0 %v2100
        %3047 = vmatprep.subr.mxu0 %v2105
        %3048 = vmatpush1.msra.mxu0 %v2104
        %3049 = vmatprep.subr.mxu0 %v2109
        %3050 = vmatpush1.msra.mxu0 %v2108
        %3051 = vmatprep.subr.mxu0 %v2113
        %3052 = vmatpush1.msra.mxu0 %v2112
        %3053 = vmatprep.subr.mxu0 %v2117
        %3054 = vmatpush1.msra.mxu0 %v2116
        %3055 = vmatprep.subr.mxu0 %v2121
        %3056 = vmatpush1.msra.mxu0 %v2120
        %3057 = vmatprep.subr.mxu0 %v2125
        %3058 = vmatpush1.msra.mxu0 %v2124
        %3059 = vmatprep.subr.mxu0 %v2129
        %3060 = vmatpush1.msra.mxu0 %v2128
        %3061 = vmatprep.subr.mxu0 %v2133
        %3062 = vmatpush1.msra.mxu0 %v2132
        %3063 = vmatprep.mubr.f32.mxu0 %v2913
        %3064 = vmatmul.mubr.f32.gmra.mrb[0].mxu0 %v1873
        %v3065 = vpop.f32.mrb[0].mxu0
        %v3066 = vadd.f32 %v2995, %v3065
        %v3067 = vpop.f32.mrb[0].mxu0
        %v3068 = vadd.f32 %v2997, %v3067
        %3069 = vdwg.mxu0
        %3070 = vmatprep.subr.mxu0 %v2137
        %3071 = vmatpush1.msra.mxu0 %v2136
        %3072 = vmatprep.subr.mxu0 %v2141
        %3073 = vmatpush1.msra.mxu0 %v2140
        %3074 = vmatprep.subr.mxu0 %v2145
        %3075 = vmatpush1.msra.mxu0 %v2144
        %3076 = vmatprep.subr.mxu0 %v2149
        %3077 = vmatpush1.msra.mxu0 %v2148
        %3078 = vmatprep.subr.mxu0 %v2153
        %3079 = vmatpush1.msra.mxu0 %v2152
        %3080 = vmatprep.subr.mxu0 %v2157
        %3081 = vmatpush1.msra.mxu0 %v2156
        %3082 = vmatprep.subr.mxu0 %v2161
        %3083 = vmatpush1.msra.mxu0 %v2160
        %3084 = vmatprep.subr.mxu0 %v2165
        %3085 = vmatpush1.msra.mxu0 %v2164
        %3086 = vmatprep.subr.mxu0 %v2169
        %3087 = vmatpush1.msra.mxu0 %v2168
        %3088 = vmatprep.subr.mxu0 %v2173
        %3089 = vmatpush1.msra.mxu0 %v2172
        %3090 = vmatprep.subr.mxu0 %v2177
        %3091 = vmatpush1.msra.mxu0 %v2176
        %3092 = vmatprep.subr.mxu0 %v2181
        %3093 = vmatpush1.msra.mxu0 %v2180
        %3094 = vmatprep.subr.mxu0 %v2185
        %3095 = vmatpush1.msra.mxu0 %v2184
        %3096 = vmatprep.subr.mxu0 %v2189
        %3097 = vmatpush1.msra.mxu0 %v2188
        %3098 = vmatprep.subr.mxu0 %v2193
        %3099 = vmatpush1.msra.mxu0 %v2192
        %3100 = vmatprep.subr.mxu0 %v2197
        %3101 = vmatpush1.msra.mxu0 %v2196
        %3102 = vmatprep.subr.mxu0 %v2201
        %3103 = vmatpush1.msra.mxu0 %v2200
        %3104 = vmatprep.subr.mxu0 %v2205
        %3105 = vmatpush1.msra.mxu0 %v2204
        %3106 = vmatprep.subr.mxu0 %v2209
        %3107 = vmatpush1.msra.mxu0 %v2208
        %3108 = vmatprep.subr.mxu0 %v2213
        %3109 = vmatpush1.msra.mxu0 %v2212
        %3110 = vmatprep.subr.mxu0 %v2217
        %3111 = vmatpush1.msra.mxu0 %v2216
        %3112 = vmatprep.subr.mxu0 %v2221
        %3113 = vmatpush1.msra.mxu0 %v2220
        %3114 = vmatprep.subr.mxu0 %v2225
        %3115 = vmatpush1.msra.mxu0 %v2224
        %3116 = vmatprep.subr.mxu0 %v2229
        %3117 = vmatpush1.msra.mxu0 %v2228
        %3118 = vmatprep.subr.mxu0 %v2233
        %3119 = vmatpush1.msra.mxu0 %v2232
        %3120 = vmatprep.subr.mxu0 %v2237
        %3121 = vmatpush1.msra.mxu0 %v2236
        %3122 = vmatprep.subr.mxu0 %v2241
        %3123 = vmatpush1.msra.mxu0 %v2240
        %3124 = vmatprep.subr.mxu0 %v2245
        %3125 = vmatpush1.msra.mxu0 %v2244
        %3126 = vmatprep.subr.mxu0 %v2249
        %3127 = vmatpush1.msra.mxu0 %v2248
        %3128 = vmatprep.subr.mxu0 %v2253
        %3129 = vmatpush1.msra.mxu0 %v2252
        %3130 = vmatprep.subr.mxu0 %v2257
        %3131 = vmatpush1.msra.mxu0 %v2256
        %3132 = vmatprep.subr.mxu0 %v2261
        %3133 = vmatpush1.msra.mxu0 %v2260
        %3134 = vmatprep.mubr.f32.mxu0 %v2914
        %3135 = vmatmul.mubr.f32.gmra.mrb[0].mxu0 %v1874
        %v3136 = vpop.f32.mrb[0].mxu0
        %v3137 = vadd.f32 %v3066, %v3136
        %v3138 = vpop.f32.mrb[0].mxu0
        %v3139 = vadd.f32 %v3068, %v3138
        %3140 = vdwg.mxu0
        %3141 = vmatprep.subr.mxu0 %v2265
        %3142 = vmatpush1.msra.mxu0 %v2264
        %3143 = vmatprep.subr.mxu0 %v2269
        %3144 = vmatpush1.msra.mxu0 %v2268
        %3145 = vmatprep.subr.mxu0 %v2273
        %3146 = vmatpush1.msra.mxu0 %v2272
        %3147 = vmatprep.subr.mxu0 %v2277
        %3148 = vmatpush1.msra.mxu0 %v2276
        %3149 = vmatprep.subr.mxu0 %v2281
        %3150 = vmatpush1.msra.mxu0 %v2280
        %3151 = vmatprep.subr.mxu0 %v2285
        %3152 = vmatpush1.msra.mxu0 %v2284
        %3153 = vmatprep.subr.mxu0 %v2289
        %3154 = vmatpush1.msra.mxu0 %v2288
        %3155 = vmatprep.subr.mxu0 %v2293
        %3156 = vmatpush1.msra.mxu0 %v2292
        %3157 = vmatprep.subr.mxu0 %v2297
        %3158 = vmatpush1.msra.mxu0 %v2296
        %3159 = vmatprep.subr.mxu0 %v2301
        %3160 = vmatpush1.msra.mxu0 %v2300
        %3161 = vmatprep.subr.mxu0 %v2305
        %3162 = vmatpush1.msra.mxu0 %v2304
        %3163 = vmatprep.subr.mxu0 %v2309
        %3164 = vmatpush1.msra.mxu0 %v2308
        %3165 = vmatprep.subr.mxu0 %v2313
        %3166 = vmatpush1.msra.mxu0 %v2312
        %3167 = vmatprep.subr.mxu0 %v2317
        %3168 = vmatpush1.msra.mxu0 %v2316
        %3169 = vmatprep.subr.mxu0 %v2321
        %3170 = vmatpush1.msra.mxu0 %v2320
        %3171 = vmatprep.subr.mxu0 %v2325
        %3172 = vmatpush1.msra.mxu0 %v2324
        %3173 = vmatprep.subr.mxu0 %v2329
        %3174 = vmatpush1.msra.mxu0 %v2328
        %3175 = vmatprep.subr.mxu0 %v2333
        %3176 = vmatpush1.msra.mxu0 %v2332
        %3177 = vmatprep.subr.mxu0 %v2337
        %3178 = vmatpush1.msra.mxu0 %v2336
        %3179 = vmatprep.subr.mxu0 %v2341
        %3180 = vmatpush1.msra.mxu0 %v2340
        %3181 = vmatprep.subr.mxu0 %v2345
        %3182 = vmatpush1.msra.mxu0 %v2344
        %3183 = vmatprep.subr.mxu0 %v2349
        %3184 = vmatpush1.msra.mxu0 %v2348
        %3185 = vmatprep.subr.mxu0 %v2353
        %3186 = vmatpush1.msra.mxu0 %v2352
        %3187 = vmatprep.subr.mxu0 %v2357
        %3188 = vmatpush1.msra.mxu0 %v2356
        %3189 = vmatprep.subr.mxu0 %v2361
        %3190 = vmatpush1.msra.mxu0 %v2360
        %3191 = vmatprep.subr.mxu0 %v2365
        %3192 = vmatpush1.msra.mxu0 %v2364
        %3193 = vmatprep.subr.mxu0 %v2369
        %3194 = vmatpush1.msra.mxu0 %v2368
        %3195 = vmatprep.subr.mxu0 %v2373
        %3196 = vmatpush1.msra.mxu0 %v2372
        %3197 = vmatprep.subr.mxu0 %v2377
        %3198 = vmatpush1.msra.mxu0 %v2376
        %3199 = vmatprep.subr.mxu0 %v2381
        %3200 = vmatpush1.msra.mxu0 %v2380
        %3201 = vmatprep.subr.mxu0 %v2385
        %3202 = vmatpush1.msra.mxu0 %v2384
        %3203 = vmatprep.subr.mxu0 %v2389
        %3204 = vmatpush1.msra.mxu0 %v2388
        %3205 = vmatprep.mubr.f32.mxu0 %v2915
        %3206 = vmatmul.mubr.f32.gmra.mrb[0].mxu0 %v1875
        %v3207 = vpop.f32.mrb[0].mxu0
        %v3208 = vadd.f32 %v3137, %v3207
        %v3209 = vpop.f32.mrb[0].mxu0
        %v3210 = vadd.f32 %v3139, %v3209
        %3211 = vdwg.mxu0
        %3212 = vmatprep.subr.mxu0 %v2393
        %3213 = vmatpush1.msra.mxu0 %v2392
        %3214 = vmatprep.subr.mxu0 %v2397
        %3215 = vmatpush1.msra.mxu0 %v2396
        %3216 = vmatprep.subr.mxu0 %v2401
        %3217 = vmatpush1.msra.mxu0 %v2400
        %3218 = vmatprep.subr.mxu0 %v2405
        %3219 = vmatpush1.msra.mxu0 %v2404
        %3220 = vmatprep.subr.mxu0 %v2409
        %3221 = vmatpush1.msra.mxu0 %v2408
        %3222 = vmatprep.subr.mxu0 %v2413
        %3223 = vmatpush1.msra.mxu0 %v2412
        %3224 = vmatprep.subr.mxu0 %v2417
        %3225 = vmatpush1.msra.mxu0 %v2416
        %3226 = vmatprep.subr.mxu0 %v2421
        %3227 = vmatpush1.msra.mxu0 %v2420
        %3228 = vmatprep.subr.mxu0 %v2425
        %3229 = vmatpush1.msra.mxu0 %v2424
        %3230 = vmatprep.subr.mxu0 %v2429
        %3231 = vmatpush1.msra.mxu0 %v2428
        %3232 = vmatprep.subr.mxu0 %v2433
        %3233 = vmatpush1.msra.mxu0 %v2432
        %3234 = vmatprep.subr.mxu0 %v2437
        %3235 = vmatpush1.msra.mxu0 %v2436
        %3236 = vmatprep.subr.mxu0 %v2441
        %3237 = vmatpush1.msra.mxu0 %v2440
        %3238 = vmatprep.subr.mxu0 %v2445
        %3239 = vmatpush1.msra.mxu0 %v2444
        %3240 = vmatprep.subr.mxu0 %v2449
        %3241 = vmatpush1.msra.mxu0 %v2448
        %3242 = vmatprep.subr.mxu0 %v2453
        %3243 = vmatpush1.msra.mxu0 %v2452
        %3244 = vmatprep.subr.mxu0 %v2457
        %3245 = vmatpush1.msra.mxu0 %v2456
        %3246 = vmatprep.subr.mxu0 %v2461
        %3247 = vmatpush1.msra.mxu0 %v2460
        %3248 = vmatprep.subr.mxu0 %v2465
        %3249 = vmatpush1.msra.mxu0 %v2464
        %3250 = vmatprep.subr.mxu0 %v2469
        %3251 = vmatpush1.msra.mxu0 %v2468
        %3252 = vmatprep.subr.mxu0 %v2473
        %3253 = vmatpush1.msra.mxu0 %v2472
        %3254 = vmatprep.subr.mxu0 %v2477
        %3255 = vmatpush1.msra.mxu0 %v2476
        %3256 = vmatprep.subr.mxu0 %v2481
        %3257 = vmatpush1.msra.mxu0 %v2480
        %3258 = vmatprep.subr.mxu0 %v2485
        %3259 = vmatpush1.msra.mxu0 %v2484
        %3260 = vmatprep.subr.mxu0 %v2489
        %3261 = vmatpush1.msra.mxu0 %v2488
        %3262 = vmatprep.subr.mxu0 %v2493
        %3263 = vmatpush1.msra.mxu0 %v2492
        %3264 = vmatprep.subr.mxu0 %v2497
        %3265 = vmatpush1.msra.mxu0 %v2496
        %3266 = vmatprep.subr.mxu0 %v2501
        %3267 = vmatpush1.msra.mxu0 %v2500
        %3268 = vmatprep.subr.mxu0 %v2505
        %3269 = vmatpush1.msra.mxu0 %v2504
        %3270 = vmatprep.subr.mxu0 %v2509
        %3271 = vmatpush1.msra.mxu0 %v2508
        %3272 = vmatprep.subr.mxu0 %v2513
        %3273 = vmatpush1.msra.mxu0 %v2512
        %3274 = vmatprep.subr.mxu0 %v2517
        %3275 = vmatpush1.msra.mxu0 %v2516
        %3276 = vmatprep.mubr.f32.mxu0 %v2916
        %3277 = vmatmul.mubr.f32.gmra.mrb[0].mxu0 %v1876
        %v3278 = vpop.f32.mrb[0].mxu0
        %v3279 = vadd.f32 %v3208, %v3278
        %v3280 = vpop.f32.mrb[0].mxu0
        %v3281 = vadd.f32 %v3210, %v3280
        %3282 = vdwg.mxu0
        %3283 = vmatprep.subr.mxu0 %v2521
        %3284 = vmatpush1.msra.mxu0 %v2520
        %3285 = vmatprep.subr.mxu0 %v2525
        %3286 = vmatpush1.msra.mxu0 %v2524
        %3287 = vmatprep.subr.mxu0 %v2529
        %3288 = vmatpush1.msra.mxu0 %v2528
        %3289 = vmatprep.subr.mxu0 %v2533
        %3290 = vmatpush1.msra.mxu0 %v2532
        %3291 = vmatprep.subr.mxu0 %v2537
        %3292 = vmatpush1.msra.mxu0 %v2536
        %3293 = vmatprep.subr.mxu0 %v2541
        %3294 = vmatpush1.msra.mxu0 %v2540
        %3295 = vmatprep.subr.mxu0 %v2545
        %3296 = vmatpush1.msra.mxu0 %v2544
        %3297 = vmatprep.subr.mxu0 %v2549
        %3298 = vmatpush1.msra.mxu0 %v2548
        %3299 = vmatprep.subr.mxu0 %v2553
        %3300 = vmatpush1.msra.mxu0 %v2552
        %3301 = vmatprep.subr.mxu0 %v2557
        %3302 = vmatpush1.msra.mxu0 %v2556
        %3303 = vmatprep.subr.mxu0 %v2561
        %3304 = vmatpush1.msra.mxu0 %v2560
        %3305 = vmatprep.subr.mxu0 %v2565
        %3306 = vmatpush1.msra.mxu0 %v2564
        %3307 = vmatprep.subr.mxu0 %v2569
        %3308 = vmatpush1.msra.mxu0 %v2568
        %3309 = vmatprep.subr.mxu0 %v2573
        %3310 = vmatpush1.msra.mxu0 %v2572
        %3311 = vmatprep.subr.mxu0 %v2577
        %3312 = vmatpush1.msra.mxu0 %v2576
        %3313 = vmatprep.subr.mxu0 %v2581
        %3314 = vmatpush1.msra.mxu0 %v2580
        %3315 = vmatprep.subr.mxu0 %v2585
        %3316 = vmatpush1.msra.mxu0 %v2584
        %3317 = vmatprep.subr.mxu0 %v2589
        %3318 = vmatpush1.msra.mxu0 %v2588
        %3319 = vmatprep.subr.mxu0 %v2593
        %3320 = vmatpush1.msra.mxu0 %v2592
        %3321 = vmatprep.subr.mxu0 %v2597
        %3322 = vmatpush1.msra.mxu0 %v2596
        %3323 = vmatprep.subr.mxu0 %v2601
        %3324 = vmatpush1.msra.mxu0 %v2600
        %3325 = vmatprep.subr.mxu0 %v2605
        %3326 = vmatpush1.msra.mxu0 %v2604
        %3327 = vmatprep.subr.mxu0 %v2609
        %3328 = vmatpush1.msra.mxu0 %v2608
        %3329 = vmatprep.subr.mxu0 %v2613
        %3330 = vmatpush1.msra.mxu0 %v2612
        %3331 = vmatprep.subr.mxu0 %v2617
        %3332 = vmatpush1.msra.mxu0 %v2616
        %3333 = vmatprep.subr.mxu0 %v2621
        %3334 = vmatpush1.msra.mxu0 %v2620
        %3335 = vmatprep.subr.mxu0 %v2625
        %3336 = vmatpush1.msra.mxu0 %v2624
        %3337 = vmatprep.subr.mxu0 %v2629
        %3338 = vmatpush1.msra.mxu0 %v2628
        %3339 = vmatprep.subr.mxu0 %v2633
        %3340 = vmatpush1.msra.mxu0 %v2632
        %3341 = vmatprep.subr.mxu0 %v2637
        %3342 = vmatpush1.msra.mxu0 %v2636
        %3343 = vmatprep.subr.mxu0 %v2641
        %3344 = vmatpush1.msra.mxu0 %v2640
        %3345 = vmatprep.subr.mxu0 %v2645
        %3346 = vmatpush1.msra.mxu0 %v2644
        %3347 = vmatprep.mubr.f32.mxu0 %v2917
        %3348 = vmatmul.mubr.f32.gmra.mrb[0].mxu0 %v1877
        %v3349 = vpop.f32.mrb[0].mxu0
        %v3350 = vadd.f32 %v3279, %v3349
        %v3351 = vpop.f32.mrb[0].mxu0
        %v3352 = vadd.f32 %v3281, %v3351
        %3353 = vdwg.mxu0
        %3354 = vmatprep.subr.mxu0 %v2649
        %3355 = vmatpush1.msra.mxu0 %v2648
        %3356 = vmatprep.subr.mxu0 %v2653
        %3357 = vmatpush1.msra.mxu0 %v2652
        %3358 = vmatprep.subr.mxu0 %v2657
        %3359 = vmatpush1.msra.mxu0 %v2656
        %3360 = vmatprep.subr.mxu0 %v2661
        %3361 = vmatpush1.msra.mxu0 %v2660
        %3362 = vmatprep.subr.mxu0 %v2665
        %3363 = vmatpush1.msra.mxu0 %v2664
        %3364 = vmatprep.subr.mxu0 %v2669
        %3365 = vmatpush1.msra.mxu0 %v2668
        %3366 = vmatprep.subr.mxu0 %v2673
        %3367 = vmatpush1.msra.mxu0 %v2672
        %3368 = vmatprep.subr.mxu0 %v2677
        %3369 = vmatpush1.msra.mxu0 %v2676
        %3370 = vmatprep.subr.mxu0 %v2681
        %3371 = vmatpush1.msra.mxu0 %v2680
        %3372 = vmatprep.subr.mxu0 %v2685
        %3373 = vmatpush1.msra.mxu0 %v2684
        %3374 = vmatprep.subr.mxu0 %v2689
        %3375 = vmatpush1.msra.mxu0 %v2688
        %3376 = vmatprep.subr.mxu0 %v2693
        %3377 = vmatpush1.msra.mxu0 %v2692
        %3378 = vmatprep.subr.mxu0 %v2697
        %3379 = vmatpush1.msra.mxu0 %v2696
        %3380 = vmatprep.subr.mxu0 %v2701
        %3381 = vmatpush1.msra.mxu0 %v2700
        %3382 = vmatprep.subr.mxu0 %v2705
        %3383 = vmatpush1.msra.mxu0 %v2704
        %3384 = vmatprep.subr.mxu0 %v2709
        %3385 = vmatpush1.msra.mxu0 %v2708
        %3386 = vmatprep.subr.mxu0 %v2713
        %3387 = vmatpush1.msra.mxu0 %v2712
        %3388 = vmatprep.subr.mxu0 %v2717
        %3389 = vmatpush1.msra.mxu0 %v2716
        %3390 = vmatprep.subr.mxu0 %v2721
        %3391 = vmatpush1.msra.mxu0 %v2720
        %3392 = vmatprep.subr.mxu0 %v2725
        %3393 = vmatpush1.msra.mxu0 %v2724
        %3394 = vmatprep.subr.mxu0 %v2729
        %3395 = vmatpush1.msra.mxu0 %v2728
        %3396 = vmatprep.subr.mxu0 %v2733
        %3397 = vmatpush1.msra.mxu0 %v2732
        %3398 = vmatprep.subr.mxu0 %v2737
        %3399 = vmatpush1.msra.mxu0 %v2736
        %3400 = vmatprep.subr.mxu0 %v2741
        %3401 = vmatpush1.msra.mxu0 %v2740
        %3402 = vmatprep.subr.mxu0 %v2745
        %3403 = vmatpush1.msra.mxu0 %v2744
        %3404 = vmatprep.subr.mxu0 %v2749
        %3405 = vmatpush1.msra.mxu0 %v2748
        %3406 = vmatprep.subr.mxu0 %v2753
        %3407 = vmatpush1.msra.mxu0 %v2752
        %3408 = vmatprep.subr.mxu0 %v2757
        %3409 = vmatpush1.msra.mxu0 %v2756
        %3410 = vmatprep.subr.mxu0 %v2761
        %3411 = vmatpush1.msra.mxu0 %v2760
        %3412 = vmatprep.subr.mxu0 %v2765
        %3413 = vmatpush1.msra.mxu0 %v2764
        %3414 = vmatprep.subr.mxu0 %v2769
        %3415 = vmatpush1.msra.mxu0 %v2768
        %3416 = vmatprep.subr.mxu0 %v2773
        %3417 = vmatpush1.msra.mxu0 %v2772
        %3418 = vmatprep.mubr.f32.mxu0 %v2918
        %3419 = vmatmul.mubr.f32.gmra.mrb[0].mxu0 %v1878
        %v3420 = vpop.f32.mrb[0].mxu0
        %v3421 = vadd.f32 %v3350, %v3420
        %v3422 = vpop.f32.mrb[0].mxu0
        %v3423 = vadd.f32 %v3352, %v3422
        %3424 = vdwg.mxu0
        %3425 = vmatprep.subr.mxu0 %v2777
        %3426 = vmatpush1.msra.mxu0 %v2776
        %3427 = vmatprep.subr.mxu0 %v2781
        %3428 = vmatpush1.msra.mxu0 %v2780
        %3429 = vmatprep.subr.mxu0 %v2785
        %3430 = vmatpush1.msra.mxu0 %v2784
        %3431 = vmatprep.subr.mxu0 %v2789
        %3432 = vmatpush1.msra.mxu0 %v2788
        %3433 = vmatprep.subr.mxu0 %v2793
        %3434 = vmatpush1.msra.mxu0 %v2792
        %3435 = vmatprep.subr.mxu0 %v2797
        %3436 = vmatpush1.msra.mxu0 %v2796
        %3437 = vmatprep.subr.mxu0 %v2801
        %3438 = vmatpush1.msra.mxu0 %v2800
        %3439 = vmatprep.subr.mxu0 %v2805
        %3440 = vmatpush1.msra.mxu0 %v2804
        %3441 = vmatprep.subr.mxu0 %v2809
        %3442 = vmatpush1.msra.mxu0 %v2808
        %3443 = vmatprep.subr.mxu0 %v2813
        %3444 = vmatpush1.msra.mxu0 %v2812
        %3445 = vmatprep.subr.mxu0 %v2817
        %3446 = vmatpush1.msra.mxu0 %v2816
        %3447 = vmatprep.subr.mxu0 %v2821
        %3448 = vmatpush1.msra.mxu0 %v2820
        %3449 = vmatprep.subr.mxu0 %v2825
        %3450 = vmatpush1.msra.mxu0 %v2824
        %3451 = vmatprep.subr.mxu0 %v2829
        %3452 = vmatpush1.msra.mxu0 %v2828
        %3453 = vmatprep.subr.mxu0 %v2833
        %3454 = vmatpush1.msra.mxu0 %v2832
        %3455 = vmatprep.subr.mxu0 %v2837
        %3456 = vmatpush1.msra.mxu0 %v2836
        %3457 = vmatprep.subr.mxu0 %v2841
        %3458 = vmatpush1.msra.mxu0 %v2840
        %3459 = vmatprep.subr.mxu0 %v2845
        %3460 = vmatpush1.msra.mxu0 %v2844
        %3461 = vmatprep.subr.mxu0 %v2849
        %3462 = vmatpush1.msra.mxu0 %v2848
        %3463 = vmatprep.subr.mxu0 %v2853
        %3464 = vmatpush1.msra.mxu0 %v2852
        %3465 = vmatprep.subr.mxu0 %v2857
        %3466 = vmatpush1.msra.mxu0 %v2856
        %3467 = vmatprep.subr.mxu0 %v2861
        %3468 = vmatpush1.msra.mxu0 %v2860
        %3469 = vmatprep.subr.mxu0 %v2865
        %3470 = vmatpush1.msra.mxu0 %v2864
        %3471 = vmatprep.subr.mxu0 %v2869
        %3472 = vmatpush1.msra.mxu0 %v2868
        %3473 = vmatprep.subr.mxu0 %v2873
        %3474 = vmatpush1.msra.mxu0 %v2872
        %3475 = vmatprep.subr.mxu0 %v2877
        %3476 = vmatpush1.msra.mxu0 %v2876
        %3477 = vmatprep.subr.mxu0 %v2881
        %3478 = vmatpush1.msra.mxu0 %v2880
        %3479 = vmatprep.subr.mxu0 %v2885
        %3480 = vmatpush1.msra.mxu0 %v2884
        %3481 = vmatprep.subr.mxu0 %v2889
        %3482 = vmatpush1.msra.mxu0 %v2888
        %3483 = vmatprep.subr.mxu0 %v2893
        %3484 = vmatpush1.msra.mxu0 %v2892
        %3485 = vmatprep.subr.mxu0 %v2897
        %3486 = vmatpush1.msra.mxu0 %v2896
        %3487 = vmatprep.subr.mxu0 %v2901
        %3488 = vmatpush1.msra.mxu0 %v2900
        %3489 = vmatprep.mubr.f32.mxu0 %v2919
        %3490 = vmatmul.mubr.f32.gmra.mrb[0].mxu0 %v1879
        %v3491 = vpop.f32.mrb[0].mxu0
        %v3492 = vadd.f32 %v3421, %v3491
        %v3493 = vpop.f32.mrb[0].mxu0
        %v3494 = vadd.f32 %v3423, %v3493
        %3495 = vdwg.mxu0
        %3496 = vmatprep.subr.mxu0 %v1883
        %3497 = vmatpush1.msra.mxu0 %v1882
        %3498 = vmatprep.subr.mxu0 %v1887
        %3499 = vmatpush1.msra.mxu0 %v1886
        %3500 = vmatprep.subr.mxu0 %v1891
        %3501 = vmatpush1.msra.mxu0 %v1890
        %3502 = vmatprep.subr.mxu0 %v1895
        %3503 = vmatpush1.msra.mxu0 %v1894
        %3504 = vmatprep.subr.mxu0 %v1899
        %3505 = vmatpush1.msra.mxu0 %v1898
        %3506 = vmatprep.subr.mxu0 %v1903
        %3507 = vmatpush1.msra.mxu0 %v1902
        %3508 = vmatprep.subr.mxu0 %v1907
        %3509 = vmatpush1.msra.mxu0 %v1906
        %3510 = vmatprep.subr.mxu0 %v1911
        %3511 = vmatpush1.msra.mxu0 %v1910
        %3512 = vmatprep.subr.mxu0 %v1915
        %3513 = vmatpush1.msra.mxu0 %v1914
        %3514 = vmatprep.subr.mxu0 %v1919
        %3515 = vmatpush1.msra.mxu0 %v1918
        %3516 = vmatprep.subr.mxu0 %v1923
        %3517 = vmatpush1.msra.mxu0 %v1922
        %3518 = vmatprep.subr.mxu0 %v1927
        %3519 = vmatpush1.msra.mxu0 %v1926
        %3520 = vmatprep.subr.mxu0 %v1931
        %3521 = vmatpush1.msra.mxu0 %v1930
        %3522 = vmatprep.subr.mxu0 %v1935
        %3523 = vmatpush1.msra.mxu0 %v1934
        %3524 = vmatprep.subr.mxu0 %v1939
        %3525 = vmatpush1.msra.mxu0 %v1938
        %3526 = vmatprep.subr.mxu0 %v1943
        %3527 = vmatpush1.msra.mxu0 %v1942
        %3528 = vmatprep.subr.mxu0 %v1947
        %3529 = vmatpush1.msra.mxu0 %v1946
        %3530 = vmatprep.subr.mxu0 %v1951
        %3531 = vmatpush1.msra.mxu0 %v1950
        %3532 = vmatprep.subr.mxu0 %v1955
        %3533 = vmatpush1.msra.mxu0 %v1954
        %3534 = vmatprep.subr.mxu0 %v1959
        %3535 = vmatpush1.msra.mxu0 %v1958
        %3536 = vmatprep.subr.mxu0 %v1963
        %3537 = vmatpush1.msra.mxu0 %v1962
        %3538 = vmatprep.subr.mxu0 %v1967
        %3539 = vmatpush1.msra.mxu0 %v1966
        %3540 = vmatprep.subr.mxu0 %v1971
        %3541 = vmatpush1.msra.mxu0 %v1970
        %3542 = vmatprep.subr.mxu0 %v1975
        %3543 = vmatpush1.msra.mxu0 %v1974
        %3544 = vmatprep.subr.mxu0 %v1979
        %3545 = vmatpush1.msra.mxu0 %v1978
        %3546 = vmatprep.subr.mxu0 %v1983
        %3547 = vmatpush1.msra.mxu0 %v1982
        %3548 = vmatprep.subr.mxu0 %v1987
        %3549 = vmatpush1.msra.mxu0 %v1986
        %3550 = vmatprep.subr.mxu0 %v1991
        %3551 = vmatpush1.msra.mxu0 %v1990
        %3552 = vmatprep.subr.mxu0 %v1995
        %3553 = vmatpush1.msra.mxu0 %v1994
        %3554 = vmatprep.subr.mxu0 %v1999
        %3555 = vmatpush1.msra.mxu0 %v1998
        %3556 = vmatprep.subr.mxu0 %v2003
        %3557 = vmatpush1.msra.mxu0 %v2002
        %3558 = vmatprep.subr.mxu0 %v2007
        %3559 = vmatpush1.msra.mxu0 %v2006
        %3560 = vmatprep.mubr.f32.mxu0 %v2912
        %3561 = vmatmul.mubr.f32.gmra.mrb[0].mxu0 %v1872
        %v3562 = vpop.f32.mrb[0].mxu0
        %v3563 = vadd.f32 0.0, %v3562
        %v3564 = vpop.f32.mrb[0].mxu0
        %v3565 = vadd.f32 0.0, %v3564
        %3566 = vdwg.mxu0
        %3567 = vmatprep.subr.mxu0 %v2011
        %3568 = vmatpush1.msra.mxu0 %v2010
        %3569 = vmatprep.subr.mxu0 %v2015
        %3570 = vmatpush1.msra.mxu0 %v2014
        %3571 = vmatprep.subr.mxu0 %v2019
        %3572 = vmatpush1.msra.mxu0 %v2018
        %3573 = vmatprep.subr.mxu0 %v2023
        %3574 = vmatpush1.msra.mxu0 %v2022
        %3575 = vmatprep.subr.mxu0 %v2027
        %3576 = vmatpush1.msra.mxu0 %v2026
        %3577 = vmatprep.subr.mxu0 %v2031
        %3578 = vmatpush1.msra.mxu0 %v2030
        %3579 = vmatprep.subr.mxu0 %v2035
        %3580 = vmatpush1.msra.mxu0 %v2034
        %3581 = vmatprep.subr.mxu0 %v2039
        %3582 = vmatpush1.msra.mxu0 %v2038
        %3583 = vmatprep.subr.mxu0 %v2043
        %3584 = vmatpush1.msra.mxu0 %v2042
        %3585 = vmatprep.subr.mxu0 %v2047
        %3586 = vmatpush1.msra.mxu0 %v2046
        %3587 = vmatprep.subr.mxu0 %v2051
        %3588 = vmatpush1.msra.mxu0 %v2050
        %3589 = vmatprep.subr.mxu0 %v2055
        %3590 = vmatpush1.msra.mxu0 %v2054
        %3591 = vmatprep.subr.mxu0 %v2059
        %3592 = vmatpush1.msra.mxu0 %v2058
        %3593 = vmatprep.subr.mxu0 %v2063
        %3594 = vmatpush1.msra.mxu0 %v2062
        %3595 = vmatprep.subr.mxu0 %v2067
        %3596 = vmatpush1.msra.mxu0 %v2066
        %3597 = vmatprep.subr.mxu0 %v2071
        %3598 = vmatpush1.msra.mxu0 %v2070
        %3599 = vmatprep.subr.mxu0 %v2075
        %3600 = vmatpush1.msra.mxu0 %v2074
        %3601 = vmatprep.subr.mxu0 %v2079
        %3602 = vmatpush1.msra.mxu0 %v2078
        %3603 = vmatprep.subr.mxu0 %v2083
        %3604 = vmatpush1.msra.mxu0 %v2082
        %3605 = vmatprep.subr.mxu0 %v2087
        %3606 = vmatpush1.msra.mxu0 %v2086
        %3607 = vmatprep.subr.mxu0 %v2091
        %3608 = vmatpush1.msra.mxu0 %v2090
        %3609 = vmatprep.subr.mxu0 %v2095
        %3610 = vmatpush1.msra.mxu0 %v2094
        %3611 = vmatprep.subr.mxu0 %v2099
        %3612 = vmatpush1.msra.mxu0 %v2098
        %3613 = vmatprep.subr.mxu0 %v2103
        %3614 = vmatpush1.msra.mxu0 %v2102
        %3615 = vmatprep.subr.mxu0 %v2107
        %3616 = vmatpush1.msra.mxu0 %v2106
        %3617 = vmatprep.subr.mxu0 %v2111
        %3618 = vmatpush1.msra.mxu0 %v2110
        %3619 = vmatprep.subr.mxu0 %v2115
        %3620 = vmatpush1.msra.mxu0 %v2114
        %3621 = vmatprep.subr.mxu0 %v2119
        %3622 = vmatpush1.msra.mxu0 %v2118
        %3623 = vmatprep.subr.mxu0 %v2123
        %3624 = vmatpush1.msra.mxu0 %v2122
        %3625 = vmatprep.subr.mxu0 %v2127
        %3626 = vmatpush1.msra.mxu0 %v2126
        %3627 = vmatprep.subr.mxu0 %v2131
        %3628 = vmatpush1.msra.mxu0 %v2130
        %3629 = vmatprep.subr.mxu0 %v2135
        %3630 = vmatpush1.msra.mxu0 %v2134
        %3631 = vmatprep.mubr.f32.mxu0 %v2913
        %3632 = vmatmul.mubr.f32.gmra.mrb[0].mxu0 %v1873
        %v3633 = vpop.f32.mrb[0].mxu0
        %v3634 = vadd.f32 %v3563, %v3633
        %v3635 = vpop.f32.mrb[0].mxu0
        %v3636 = vadd.f32 %v3565, %v3635
        %3637 = vdwg.mxu0
        %3638 = vmatprep.subr.mxu0 %v2139
        %3639 = vmatpush1.msra.mxu0 %v2138
        %3640 = vmatprep.subr.mxu0 %v2143
        %3641 = vmatpush1.msra.mxu0 %v2142
        %3642 = vmatprep.subr.mxu0 %v2147
        %3643 = vmatpush1.msra.mxu0 %v2146
        %3644 = vmatprep.subr.mxu0 %v2151
        %3645 = vmatpush1.msra.mxu0 %v2150
        %3646 = vmatprep.subr.mxu0 %v2155
        %3647 = vmatpush1.msra.mxu0 %v2154
        %3648 = vmatprep.subr.mxu0 %v2159
        %3649 = vmatpush1.msra.mxu0 %v2158
        %3650 = vmatprep.subr.mxu0 %v2163
        %3651 = vmatpush1.msra.mxu0 %v2162
        %3652 = vmatprep.subr.mxu0 %v2167
        %3653 = vmatpush1.msra.mxu0 %v2166
        %3654 = vmatprep.subr.mxu0 %v2171
        %3655 = vmatpush1.msra.mxu0 %v2170
        %3656 = vmatprep.subr.mxu0 %v2175
        %3657 = vmatpush1.msra.mxu0 %v2174
        %3658 = vmatprep.subr.mxu0 %v2179
        %3659 = vmatpush1.msra.mxu0 %v2178
        %3660 = vmatprep.subr.mxu0 %v2183
        %3661 = vmatpush1.msra.mxu0 %v2182
        %3662 = vmatprep.subr.mxu0 %v2187
        %3663 = vmatpush1.msra.mxu0 %v2186
        %3664 = vmatprep.subr.mxu0 %v2191
        %3665 = vmatpush1.msra.mxu0 %v2190
        %3666 = vmatprep.subr.mxu0 %v2195
        %3667 = vmatpush1.msra.mxu0 %v2194
        %3668 = vmatprep.subr.mxu0 %v2199
        %3669 = vmatpush1.msra.mxu0 %v2198
        %3670 = vmatprep.subr.mxu0 %v2203
        %3671 = vmatpush1.msra.mxu0 %v2202
        %3672 = vmatprep.subr.mxu0 %v2207
        %3673 = vmatpush1.msra.mxu0 %v2206
        %3674 = vmatprep.subr.mxu0 %v2211
        %3675 = vmatpush1.msra.mxu0 %v2210
        %3676 = vmatprep.subr.mxu0 %v2215
        %3677 = vmatpush1.msra.mxu0 %v2214
        %3678 = vmatprep.subr.mxu0 %v2219
        %3679 = vmatpush1.msra.mxu0 %v2218
        %3680 = vmatprep.subr.mxu0 %v2223
        %3681 = vmatpush1.msra.mxu0 %v2222
        %3682 = vmatprep.subr.mxu0 %v2227
        %3683 = vmatpush1.msra.mxu0 %v2226
        %3684 = vmatprep.subr.mxu0 %v2231
        %3685 = vmatpush1.msra.mxu0 %v2230
        %3686 = vmatprep.subr.mxu0 %v2235
        %3687 = vmatpush1.msra.mxu0 %v2234
        %3688 = vmatprep.subr.mxu0 %v2239
        %3689 = vmatpush1.msra.mxu0 %v2238
        %3690 = vmatprep.subr.mxu0 %v2243
        %3691 = vmatpush1.msra.mxu0 %v2242
        %3692 = vmatprep.subr.mxu0 %v2247
        %3693 = vmatpush1.msra.mxu0 %v2246
        %3694 = vmatprep.subr.mxu0 %v2251
        %3695 = vmatpush1.msra.mxu0 %v2250
        %3696 = vmatprep.subr.mxu0 %v2255
        %3697 = vmatpush1.msra.mxu0 %v2254
        %3698 = vmatprep.subr.mxu0 %v2259
        %3699 = vmatpush1.msra.mxu0 %v2258
        %3700 = vmatprep.subr.mxu0 %v2263
        %3701 = vmatpush1.msra.mxu0 %v2262
        %3702 = vmatprep.mubr.f32.mxu0 %v2914
        %3703 = vmatmul.mubr.f32.gmra.mrb[0].mxu0 %v1874
        %v3704 = vpop.f32.mrb[0].mxu0
        %v3705 = vadd.f32 %v3634, %v3704
        %v3706 = vpop.f32.mrb[0].mxu0
        %v3707 = vadd.f32 %v3636, %v3706
        %3708 = vdwg.mxu0
        %3709 = vmatprep.subr.mxu0 %v2267
        %3710 = vmatpush1.msra.mxu0 %v2266
        %3711 = vmatprep.subr.mxu0 %v2271
        %3712 = vmatpush1.msra.mxu0 %v2270
        %3713 = vmatprep.subr.mxu0 %v2275
        %3714 = vmatpush1.msra.mxu0 %v2274
        %3715 = vmatprep.subr.mxu0 %v2279
        %3716 = vmatpush1.msra.mxu0 %v2278
        %3717 = vmatprep.subr.mxu0 %v2283
        %3718 = vmatpush1.msra.mxu0 %v2282
        %3719 = vmatprep.subr.mxu0 %v2287
        %3720 = vmatpush1.msra.mxu0 %v2286
        %3721 = vmatprep.subr.mxu0 %v2291
        %3722 = vmatpush1.msra.mxu0 %v2290
        %3723 = vmatprep.subr.mxu0 %v2295
        %3724 = vmatpush1.msra.mxu0 %v2294
        %3725 = vmatprep.subr.mxu0 %v2299
        %3726 = vmatpush1.msra.mxu0 %v2298
        %3727 = vmatprep.subr.mxu0 %v2303
        %3728 = vmatpush1.msra.mxu0 %v2302
        %3729 = vmatprep.subr.mxu0 %v2307
        %3730 = vmatpush1.msra.mxu0 %v2306
        %3731 = vmatprep.subr.mxu0 %v2311
        %3732 = vmatpush1.msra.mxu0 %v2310
        %3733 = vmatprep.subr.mxu0 %v2315
        %3734 = vmatpush1.msra.mxu0 %v2314
        %3735 = vmatprep.subr.mxu0 %v2319
        %3736 = vmatpush1.msra.mxu0 %v2318
        %3737 = vmatprep.subr.mxu0 %v2323
        %3738 = vmatpush1.msra.mxu0 %v2322
        %3739 = vmatprep.subr.mxu0 %v2327
        %3740 = vmatpush1.msra.mxu0 %v2326
        %3741 = vmatprep.subr.mxu0 %v2331
        %3742 = vmatpush1.msra.mxu0 %v2330
        %3743 = vmatprep.subr.mxu0 %v2335
        %3744 = vmatpush1.msra.mxu0 %v2334
        %3745 = vmatprep.subr.mxu0 %v2339
        %3746 = vmatpush1.msra.mxu0 %v2338
        %3747 = vmatprep.subr.mxu0 %v2343
        %3748 = vmatpush1.msra.mxu0 %v2342
        %3749 = vmatprep.subr.mxu0 %v2347
        %3750 = vmatpush1.msra.mxu0 %v2346
        %3751 = vmatprep.subr.mxu0 %v2351
        %3752 = vmatpush1.msra.mxu0 %v2350
        %3753 = vmatprep.subr.mxu0 %v2355
        %3754 = vmatpush1.msra.mxu0 %v2354
        %3755 = vmatprep.subr.mxu0 %v2359
        %3756 = vmatpush1.msra.mxu0 %v2358
        %3757 = vmatprep.subr.mxu0 %v2363
        %3758 = vmatpush1.msra.mxu0 %v2362
        %3759 = vmatprep.subr.mxu0 %v2367
        %3760 = vmatpush1.msra.mxu0 %v2366
        %3761 = vmatprep.subr.mxu0 %v2371
        %3762 = vmatpush1.msra.mxu0 %v2370
        %3763 = vmatprep.subr.mxu0 %v2375
        %3764 = vmatpush1.msra.mxu0 %v2374
        %3765 = vmatprep.subr.mxu0 %v2379
        %3766 = vmatpush1.msra.mxu0 %v2378
        %3767 = vmatprep.subr.mxu0 %v2383
        %3768 = vmatpush1.msra.mxu0 %v2382
        %3769 = vmatprep.subr.mxu0 %v2387
        %3770 = vmatpush1.msra.mxu0 %v2386
        %3771 = vmatprep.subr.mxu0 %v2391
        %3772 = vmatpush1.msra.mxu0 %v2390
        %3773 = vmatprep.mubr.f32.mxu0 %v2915
        %3774 = vmatmul.mubr.f32.gmra.mrb[0].mxu0 %v1875
        %v3775 = vpop.f32.mrb[0].mxu0
        %v3776 = vadd.f32 %v3705, %v3775
        %v3777 = vpop.f32.mrb[0].mxu0
        %v3778 = vadd.f32 %v3707, %v3777
        %3779 = vdwg.mxu0
        %3780 = vmatprep.subr.mxu0 %v2395
        %3781 = vmatpush1.msra.mxu0 %v2394
        %3782 = vmatprep.subr.mxu0 %v2399
        %3783 = vmatpush1.msra.mxu0 %v2398
        %3784 = vmatprep.subr.mxu0 %v2403
        %3785 = vmatpush1.msra.mxu0 %v2402
        %3786 = vmatprep.subr.mxu0 %v2407
        %3787 = vmatpush1.msra.mxu0 %v2406
        %3788 = vmatprep.subr.mxu0 %v2411
        %3789 = vmatpush1.msra.mxu0 %v2410
        %3790 = vmatprep.subr.mxu0 %v2415
        %3791 = vmatpush1.msra.mxu0 %v2414
        %3792 = vmatprep.subr.mxu0 %v2419
        %3793 = vmatpush1.msra.mxu0 %v2418
        %3794 = vmatprep.subr.mxu0 %v2423
        %3795 = vmatpush1.msra.mxu0 %v2422
        %3796 = vmatprep.subr.mxu0 %v2427
        %3797 = vmatpush1.msra.mxu0 %v2426
        %3798 = vmatprep.subr.mxu0 %v2431
        %3799 = vmatpush1.msra.mxu0 %v2430
        %3800 = vmatprep.subr.mxu0 %v2435
        %3801 = vmatpush1.msra.mxu0 %v2434
        %3802 = vmatprep.subr.mxu0 %v2439
        %3803 = vmatpush1.msra.mxu0 %v2438
        %3804 = vmatprep.subr.mxu0 %v2443
        %3805 = vmatpush1.msra.mxu0 %v2442
        %3806 = vmatprep.subr.mxu0 %v2447
        %3807 = vmatpush1.msra.mxu0 %v2446
        %3808 = vmatprep.subr.mxu0 %v2451
        %3809 = vmatpush1.msra.mxu0 %v2450
        %3810 = vmatprep.subr.mxu0 %v2455
        %3811 = vmatpush1.msra.mxu0 %v2454
        %3812 = vmatprep.subr.mxu0 %v2459
        %3813 = vmatpush1.msra.mxu0 %v2458
        %3814 = vmatprep.subr.mxu0 %v2463
        %3815 = vmatpush1.msra.mxu0 %v2462
        %3816 = vmatprep.subr.mxu0 %v2467
        %3817 = vmatpush1.msra.mxu0 %v2466
        %3818 = vmatprep.subr.mxu0 %v2471
        %3819 = vmatpush1.msra.mxu0 %v2470
        %3820 = vmatprep.subr.mxu0 %v2475
        %3821 = vmatpush1.msra.mxu0 %v2474
        %3822 = vmatprep.subr.mxu0 %v2479
        %3823 = vmatpush1.msra.mxu0 %v2478
        %3824 = vmatprep.subr.mxu0 %v2483
        %3825 = vmatpush1.msra.mxu0 %v2482
        %3826 = vmatprep.subr.mxu0 %v2487
        %3827 = vmatpush1.msra.mxu0 %v2486
        %3828 = vmatprep.subr.mxu0 %v2491
        %3829 = vmatpush1.msra.mxu0 %v2490
        %3830 = vmatprep.subr.mxu0 %v2495
        %3831 = vmatpush1.msra.mxu0 %v2494
        %3832 = vmatprep.subr.mxu0 %v2499
        %3833 = vmatpush1.msra.mxu0 %v2498
        %3834 = vmatprep.subr.mxu0 %v2503
        %3835 = vmatpush1.msra.mxu0 %v2502
        %3836 = vmatprep.subr.mxu0 %v2507
        %3837 = vmatpush1.msra.mxu0 %v2506
        %3838 = vmatprep.subr.mxu0 %v2511
        %3839 = vmatpush1.msra.mxu0 %v2510
        %3840 = vmatprep.subr.mxu0 %v2515
        %3841 = vmatpush1.msra.mxu0 %v2514
        %3842 = vmatprep.subr.mxu0 %v2519
        %3843 = vmatpush1.msra.mxu0 %v2518
        %3844 = vmatprep.mubr.f32.mxu0 %v2916
        %3845 = vmatmul.mubr.f32.gmra.mrb[0].mxu0 %v1876
        %v3846 = vpop.f32.mrb[0].mxu0
        %v3847 = vadd.f32 %v3776, %v3846
        %v3848 = vpop.f32.mrb[0].mxu0
        %v3849 = vadd.f32 %v3778, %v3848
        %3850 = vdwg.mxu0
        %3851 = vmatprep.subr.mxu0 %v2523
        %3852 = vmatpush1.msra.mxu0 %v2522
        %3853 = vmatprep.subr.mxu0 %v2527
        %3854 = vmatpush1.msra.mxu0 %v2526
        %3855 = vmatprep.subr.mxu0 %v2531
        %3856 = vmatpush1.msra.mxu0 %v2530
        %3857 = vmatprep.subr.mxu0 %v2535
        %3858 = vmatpush1.msra.mxu0 %v2534
        %3859 = vmatprep.subr.mxu0 %v2539
        %3860 = vmatpush1.msra.mxu0 %v2538
        %3861 = vmatprep.subr.mxu0 %v2543
        %3862 = vmatpush1.msra.mxu0 %v2542
        %3863 = vmatprep.subr.mxu0 %v2547
        %3864 = vmatpush1.msra.mxu0 %v2546
        %3865 = vmatprep.subr.mxu0 %v2551
        %3866 = vmatpush1.msra.mxu0 %v2550
        %3867 = vmatprep.subr.mxu0 %v2555
        %3868 = vmatpush1.msra.mxu0 %v2554
        %3869 = vmatprep.subr.mxu0 %v2559
        %3870 = vmatpush1.msra.mxu0 %v2558
        %3871 = vmatprep.subr.mxu0 %v2563
        %3872 = vmatpush1.msra.mxu0 %v2562
        %3873 = vmatprep.subr.mxu0 %v2567
        %3874 = vmatpush1.msra.mxu0 %v2566
        %3875 = vmatprep.subr.mxu0 %v2571
        %3876 = vmatpush1.msra.mxu0 %v2570
        %3877 = vmatprep.subr.mxu0 %v2575
        %3878 = vmatpush1.msra.mxu0 %v2574
        %3879 = vmatprep.subr.mxu0 %v2579
        %3880 = vmatpush1.msra.mxu0 %v2578
        %3881 = vmatprep.subr.mxu0 %v2583
        %3882 = vmatpush1.msra.mxu0 %v2582
        %3883 = vmatprep.subr.mxu0 %v2587
        %3884 = vmatpush1.msra.mxu0 %v2586
        %3885 = vmatprep.subr.mxu0 %v2591
        %3886 = vmatpush1.msra.mxu0 %v2590
        %3887 = vmatprep.subr.mxu0 %v2595
        %3888 = vmatpush1.msra.mxu0 %v2594
        %3889 = vmatprep.subr.mxu0 %v2599
        %3890 = vmatpush1.msra.mxu0 %v2598
        %3891 = vmatprep.subr.mxu0 %v2603
        %3892 = vmatpush1.msra.mxu0 %v2602
        %3893 = vmatprep.subr.mxu0 %v2607
        %3894 = vmatpush1.msra.mxu0 %v2606
        %3895 = vmatprep.subr.mxu0 %v2611
        %3896 = vmatpush1.msra.mxu0 %v2610
        %3897 = vmatprep.subr.mxu0 %v2615
        %3898 = vmatpush1.msra.mxu0 %v2614
        %3899 = vmatprep.subr.mxu0 %v2619
        %3900 = vmatpush1.msra.mxu0 %v2618
        %3901 = vmatprep.subr.mxu0 %v2623
        %3902 = vmatpush1.msra.mxu0 %v2622
        %3903 = vmatprep.subr.mxu0 %v2627
        %3904 = vmatpush1.msra.mxu0 %v2626
        %3905 = vmatprep.subr.mxu0 %v2631
        %3906 = vmatpush1.msra.mxu0 %v2630
        %3907 = vmatprep.subr.mxu0 %v2635
        %3908 = vmatpush1.msra.mxu0 %v2634
        %3909 = vmatprep.subr.mxu0 %v2639
        %3910 = vmatpush1.msra.mxu0 %v2638
        %3911 = vmatprep.subr.mxu0 %v2643
        %3912 = vmatpush1.msra.mxu0 %v2642
        %3913 = vmatprep.subr.mxu0 %v2647
        %3914 = vmatpush1.msra.mxu0 %v2646
        %3915 = vmatprep.mubr.f32.mxu0 %v2917
        %3916 = vmatmul.mubr.f32.gmra.mrb[0].mxu0 %v1877
        %v3917 = vpop.f32.mrb[0].mxu0
        %v3918 = vadd.f32 %v3847, %v3917
        %v3919 = vpop.f32.mrb[0].mxu0
        %v3920 = vadd.f32 %v3849, %v3919
        %3921 = vdwg.mxu0
        %3922 = vmatprep.subr.mxu0 %v2651
        %3923 = vmatpush1.msra.mxu0 %v2650
        %3924 = vmatprep.subr.mxu0 %v2655
        %3925 = vmatpush1.msra.mxu0 %v2654
        %3926 = vmatprep.subr.mxu0 %v2659
        %3927 = vmatpush1.msra.mxu0 %v2658
        %3928 = vmatprep.subr.mxu0 %v2663
        %3929 = vmatpush1.msra.mxu0 %v2662
        %3930 = vmatprep.subr.mxu0 %v2667
        %3931 = vmatpush1.msra.mxu0 %v2666
        %3932 = vmatprep.subr.mxu0 %v2671
        %3933 = vmatpush1.msra.mxu0 %v2670
        %3934 = vmatprep.subr.mxu0 %v2675
        %3935 = vmatpush1.msra.mxu0 %v2674
        %3936 = vmatprep.subr.mxu0 %v2679
        %3937 = vmatpush1.msra.mxu0 %v2678
        %3938 = vmatprep.subr.mxu0 %v2683
        %3939 = vmatpush1.msra.mxu0 %v2682
        %3940 = vmatprep.subr.mxu0 %v2687
        %3941 = vmatpush1.msra.mxu0 %v2686
        %3942 = vmatprep.subr.mxu0 %v2691
        %3943 = vmatpush1.msra.mxu0 %v2690
        %3944 = vmatprep.subr.mxu0 %v2695
        %3945 = vmatpush1.msra.mxu0 %v2694
        %3946 = vmatprep.subr.mxu0 %v2699
        %3947 = vmatpush1.msra.mxu0 %v2698
        %3948 = vmatprep.subr.mxu0 %v2703
        %3949 = vmatpush1.msra.mxu0 %v2702
        %3950 = vmatprep.subr.mxu0 %v2707
        %3951 = vmatpush1.msra.mxu0 %v2706
        %3952 = vmatprep.subr.mxu0 %v2711
        %3953 = vmatpush1.msra.mxu0 %v2710
        %3954 = vmatprep.subr.mxu0 %v2715
        %3955 = vmatpush1.msra.mxu0 %v2714
        %3956 = vmatprep.subr.mxu0 %v2719
        %3957 = vmatpush1.msra.mxu0 %v2718
        %3958 = vmatprep.subr.mxu0 %v2723
        %3959 = vmatpush1.msra.mxu0 %v2722
        %3960 = vmatprep.subr.mxu0 %v2727
        %3961 = vmatpush1.msra.mxu0 %v2726
        %3962 = vmatprep.subr.mxu0 %v2731
        %3963 = vmatpush1.msra.mxu0 %v2730
        %3964 = vmatprep.subr.mxu0 %v2735
        %3965 = vmatpush1.msra.mxu0 %v2734
        %3966 = vmatprep.subr.mxu0 %v2739
        %3967 = vmatpush1.msra.mxu0 %v2738
        %3968 = vmatprep.subr.mxu0 %v2743
        %3969 = vmatpush1.msra.mxu0 %v2742
        %3970 = vmatprep.subr.mxu0 %v2747
        %3971 = vmatpush1.msra.mxu0 %v2746
        %3972 = vmatprep.subr.mxu0 %v2751
        %3973 = vmatpush1.msra.mxu0 %v2750
        %3974 = vmatprep.subr.mxu0 %v2755
        %3975 = vmatpush1.msra.mxu0 %v2754
        %3976 = vmatprep.subr.mxu0 %v2759
        %3977 = vmatpush1.msra.mxu0 %v2758
        %3978 = vmatprep.subr.mxu0 %v2763
        %3979 = vmatpush1.msra.mxu0 %v2762
        %3980 = vmatprep.subr.mxu0 %v2767
        %3981 = vmatpush1.msra.mxu0 %v2766
        %3982 = vmatprep.subr.mxu0 %v2771
        %3983 = vmatpush1.msra.mxu0 %v2770
        %3984 = vmatprep.subr.mxu0 %v2775
        %3985 = vmatpush1.msra.mxu0 %v2774
        %3986 = vmatprep.mubr.f32.mxu0 %v2918
        %3987 = vmatmul.mubr.f32.gmra.mrb[0].mxu0 %v1878
        %v3988 = vpop.f32.mrb[0].mxu0
        %v3989 = vadd.f32 %v3918, %v3988
        %v3990 = vpop.f32.mrb[0].mxu0
        %v3991 = vadd.f32 %v3920, %v3990
        %3992 = vdwg.mxu0
        %3993 = vmatprep.subr.mxu0 %v2779
        %3994 = vmatpush1.msra.mxu0 %v2778
        %3995 = vmatprep.subr.mxu0 %v2783
        %3996 = vmatpush1.msra.mxu0 %v2782
        %3997 = vmatprep.subr.mxu0 %v2787
        %3998 = vmatpush1.msra.mxu0 %v2786
        %3999 = vmatprep.subr.mxu0 %v2791
        %4000 = vmatpush1.msra.mxu0 %v2790
        %4001 = vmatprep.subr.mxu0 %v2795
        %4002 = vmatpush1.msra.mxu0 %v2794
        %4003 = vmatprep.subr.mxu0 %v2799
        %4004 = vmatpush1.msra.mxu0 %v2798
        %4005 = vmatprep.subr.mxu0 %v2803
        %4006 = vmatpush1.msra.mxu0 %v2802
        %4007 = vmatprep.subr.mxu0 %v2807
        %4008 = vmatpush1.msra.mxu0 %v2806
        %4009 = vmatprep.subr.mxu0 %v2811
        %4010 = vmatpush1.msra.mxu0 %v2810
        %4011 = vmatprep.subr.mxu0 %v2815
        %4012 = vmatpush1.msra.mxu0 %v2814
        %4013 = vmatprep.subr.mxu0 %v2819
        %4014 = vmatpush1.msra.mxu0 %v2818
        %4015 = vmatprep.subr.mxu0 %v2823
        %4016 = vmatpush1.msra.mxu0 %v2822
        %4017 = vmatprep.subr.mxu0 %v2827
        %4018 = vmatpush1.msra.mxu0 %v2826
        %4019 = vmatprep.subr.mxu0 %v2831
        %4020 = vmatpush1.msra.mxu0 %v2830
        %4021 = vmatprep.subr.mxu0 %v2835
        %4022 = vmatpush1.msra.mxu0 %v2834
        %4023 = vmatprep.subr.mxu0 %v2839
        %4024 = vmatpush1.msra.mxu0 %v2838
        %4025 = vmatprep.subr.mxu0 %v2843
        %4026 = vmatpush1.msra.mxu0 %v2842
        %4027 = vmatprep.subr.mxu0 %v2847
        %4028 = vmatpush1.msra.mxu0 %v2846
        %4029 = vmatprep.subr.mxu0 %v2851
        %4030 = vmatpush1.msra.mxu0 %v2850
        %4031 = vmatprep.subr.mxu0 %v2855
        %4032 = vmatpush1.msra.mxu0 %v2854
        %4033 = vmatprep.subr.mxu0 %v2859
        %4034 = vmatpush1.msra.mxu0 %v2858
        %4035 = vmatprep.subr.mxu0 %v2863
        %4036 = vmatpush1.msra.mxu0 %v2862
        %4037 = vmatprep.subr.mxu0 %v2867
        %4038 = vmatpush1.msra.mxu0 %v2866
        %4039 = vmatprep.subr.mxu0 %v2871
        %4040 = vmatpush1.msra.mxu0 %v2870
        %4041 = vmatprep.subr.mxu0 %v2875
        %4042 = vmatpush1.msra.mxu0 %v2874
        %4043 = vmatprep.subr.mxu0 %v2879
        %4044 = vmatpush1.msra.mxu0 %v2878
        %4045 = vmatprep.subr.mxu0 %v2883
        %4046 = vmatpush1.msra.mxu0 %v2882
        %4047 = vmatprep.subr.mxu0 %v2887
        %4048 = vmatpush1.msra.mxu0 %v2886
        %4049 = vmatprep.subr.mxu0 %v2891
        %4050 = vmatpush1.msra.mxu0 %v2890
        %4051 = vmatprep.subr.mxu0 %v2895
        %4052 = vmatpush1.msra.mxu0 %v2894
        %4053 = vmatprep.subr.mxu0 %v2899
        %4054 = vmatpush1.msra.mxu0 %v2898
        %4055 = vmatprep.subr.mxu0 %v2903
        %4056 = vmatpush1.msra.mxu0 %v2902
        %4057 = vmatprep.mubr.f32.mxu0 %v2919
        %4058 = vmatmul.mubr.f32.gmra.mrb[0].mxu0 %v1879
        %v4059 = vpop.f32.mrb[0].mxu0
        %v4060 = vadd.f32 %v3989, %v4059
        %v4061 = vpop.f32.mrb[0].mxu0
        %v4062 = vadd.f32 %v3991, %v4061
        %4063 = vdwg.mxu0
        %v4064 = vld [vmem:[%s432] sm:$0xf]
        %v4065 = vld [vmem:[%s441] sm:$0xf]
        %vm4066 = vcmask 1043456
        %v4067 = vsel %vm4066, %v3492, 0.0
        %v4068 = vrot.slane %v4067, 4
        %v4069 = vadd.f32 %v4067, %v4068
        %v4070 = vrot.slane %v4069, 2
        %v4071 = vadd.f32 %v4069, %v4070
        %v4072 = vrot.slane %v4071, 1
        %v4073 = vadd.f32 %v4071, %v4072
        %v4074 = vsel %vm4066, %v3494, 0.0
        %v4075 = vrot.slane %v4074, 4
        %v4076 = vadd.f32 %v4074, %v4075
        %v4077 = vrot.slane %v4076, 2
        %v4078 = vadd.f32 %v4076, %v4077
        %v4079 = vrot.slane %v4078, 1
        %v4080 = vadd.f32 %v4078, %v4079
        %v4081 = vsel %vm4066, %v4060, 0.0
        %v4082 = vrot.slane %v4081, 4
        %v4083 = vadd.f32 %v4081, %v4082
        %v4084 = vrot.slane %v4083, 2
        %v4085 = vadd.f32 %v4083, %v4084
        %v4086 = vrot.slane %v4085, 1
        %v4087 = vadd.f32 %v4085, %v4086
        %v4088 = vsel %vm4066, %v4062, 0.0
        %v4089 = vrot.slane %v4088, 4
        %v4090 = vadd.f32 %v4088, %v4089
        %v4091 = vrot.slane %v4090, 2
        %v4092 = vadd.f32 %v4090, %v4091
        %v4093 = vrot.slane %v4092, 1
        %v4094 = vadd.f32 %v4092, %v4093
        %v4095 = vrcp.pop 4.0
        %v4096 = vmul.f32 %v4073, %v4095
        %v4097 = vmul.f32 %v4080, %v4095
        %v4098 = vmul.f32 %v4087, %v4095
        %v4099 = vmul.f32 %v4094, %v4095
        %v4100 = vmul.f32 %v3492, %v3492
        %v4101 = vmul.f32 %v3494, %v3494
        %v4102 = vmul.f32 %v4060, %v4060
        %v4103 = vmul.f32 %v4062, %v4062
        %v4104 = vsel %vm4066, %v4100, 0.0
        %v4105 = vrot.slane %v4104, 4
        %v4106 = vadd.f32 %v4104, %v4105
        %v4107 = vrot.slane %v4106, 2
        %v4108 = vadd.f32 %v4106, %v4107
        %v4109 = vrot.slane %v4108, 1
        %v4110 = vadd.f32 %v4108, %v4109
        %v4111 = vsel %vm4066, %v4101, 0.0
        %v4112 = vrot.slane %v4111, 4
        %v4113 = vadd.f32 %v4111, %v4112
        %v4114 = vrot.slane %v4113, 2
        %v4115 = vadd.f32 %v4113, %v4114
        %v4116 = vrot.slane %v4115, 1
        %v4117 = vadd.f32 %v4115, %v4116
        %v4118 = vsel %vm4066, %v4102, 0.0
        %v4119 = vrot.slane %v4118, 4
        %v4120 = vadd.f32 %v4118, %v4119
        %v4121 = vrot.slane %v4120, 2
        %v4122 = vadd.f32 %v4120, %v4121
        %v4123 = vrot.slane %v4122, 1
        %v4124 = vadd.f32 %v4122, %v4123
        %v4125 = vsel %vm4066, %v4103, 0.0
        %v4126 = vrot.slane %v4125, 4
        %v4127 = vadd.f32 %v4125, %v4126
        %v4128 = vrot.slane %v4127, 2
        %v4129 = vadd.f32 %v4127, %v4128
        %v4130 = vrot.slane %v4129, 1
        %v4131 = vadd.f32 %v4129, %v4130
        %v4132 = vmul.f32 %v4110, %v4095
        %v4133 = vmul.f32 %v4117, %v4095
        %v4134 = vmul.f32 %v4124, %v4095
        %v4135 = vmul.f32 %v4131, %v4095
        %v4136 = vmul.f32 %v4096, %v4096
        %v4137 = vmul.f32 %v4097, %v4097
        %v4138 = vmul.f32 %v4098, %v4098
        %v4139 = vmul.f32 %v4099, %v4099
        %v4140 = vsub.f32 %v4132, %v4136
        %v4141 = vsub.f32 %v4133, %v4137
        %v4142 = vsub.f32 %v4134, %v4138
        %v4143 = vsub.f32 %v4135, %v4139
        %v4144 = vsub.f32 %v3492, %v4096
        %v4145 = vsub.f32 %v3494, %v4097
        %v4146 = vsub.f32 %v4060, %v4098
        %v4147 = vsub.f32 %v4062, %v4099
        %v4148 = vadd.f32 %v4140, 1e-05
        %v4149 = vadd.f32 %v4141, 1e-05
        %v4150 = vadd.f32 %v4142, 1e-05
        %v4151 = vadd.f32 %v4143, 1e-05
        %v4152 = vrsqrt.pop %v4148
        %v4153 = vrsqrt.pop %v4149
        %v4154 = vrsqrt.pop %v4150
        %v4155 = vrsqrt.pop %v4151
        %v4156 = vmul.f32 %v4144, %v4152
        %v4157 = vmul.f32 %v4145, %v4153
        %v4158 = vmul.f32 %v4146, %v4154
        %v4159 = vmul.f32 %v4147, %v4155
        %v4161 = vlaneseq
        %v4162 = vshrl.u32 %v4161, 7
        %v4163 = vsub.s32 0, %v4162
        %v4164 = vrot.slane %v4064, %v4163
        %v4165 = vlaneseq
        %v4166 = vshrl.u32 %v4165, 7
        %v4167 = vsub.s32 1, %v4166
        %v4168 = vrot.slane %v4064, %v4167
        %v4169 = vlaneseq
        %v4170 = vshrl.u32 %v4169, 7
        %v4171 = vsub.s32 2, %v4170
        %v4172 = vrot.slane %v4064, %v4171
        %v4173 = vlaneseq
        %v4174 = vshrl.u32 %v4173, 7
        %v4175 = vsub.s32 3, %v4174
        %v4176 = vrot.slane %v4064, %v4175
        %v4181 = vmul.f32 %v4156, %v4164
        %v4182 = vmul.f32 %v4157, %v4168
        %v4183 = vmul.f32 %v4158, %v4172
        %v4184 = vmul.f32 %v4159, %v4176
        %v4186 = vlaneseq
        %v4187 = vshrl.u32 %v4186, 7
        %v4188 = vsub.s32 0, %v4187
        %v4189 = vrot.slane %v4065, %v4188
        %v4190 = vlaneseq
        %v4191 = vshrl.u32 %v4190, 7
        %v4192 = vsub.s32 1, %v4191
        %v4193 = vrot.slane %v4065, %v4192
        %v4194 = vlaneseq
        %v4195 = vshrl.u32 %v4194, 7
        %v4196 = vsub.s32 2, %v4195
        %v4197 = vrot.slane %v4065, %v4196
        %v4198 = vlaneseq
        %v4199 = vshrl.u32 %v4198, 7
        %v4200 = vsub.s32 3, %v4199
        %v4201 = vrot.slane %v4065, %v4200
        %v4206 = vadd.f32 %v4181, %v4189
        %v4207 = vadd.f32 %v4182, %v4193
        %v4208 = vadd.f32 %v4183, %v4197
        %v4209 = vadd.f32 %v4184, %v4201
        %vm4210 = vcmp.ge.f32.partialorder %v4206, 0.0
        %vm4211 = vcmp.ge.f32.partialorder %v4207, 0.0
        %vm4212 = vcmp.ge.f32.partialorder %v4208, 0.0
        %vm4213 = vcmp.ge.f32.partialorder %v4209, 0.0
        %v4214 = vmul.f32 %v4206, 0.02
        %v4215 = vmul.f32 %v4207, 0.02
        %v4216 = vmul.f32 %v4208, 0.02
        %v4217 = vmul.f32 %v4209, 0.02
        %v4218 = vsel %vm4210, %v4206, %v4214
        %v4219 = vsel %vm4211, %v4207, %v4215
        %v4220 = vsel %vm4212, %v4208, %v4216
        %v4221 = vsel %vm4213, %v4209, %v4217
        %v4222 = vld [vmem:[%s9] sm:$0xf]
        %v4223 = vld [vmem:[%s450] sm:$0xf]
        %v4225 = vlaneseq
        %v4226 = vshrl.u32 %v4225, 7
        %v4227 = vsub.s32 0, %v4226
        %v4228 = vrot.slane %v4223, %v4227
        %v4229 = vlaneseq
        %v4230 = vshrl.u32 %v4229, 7
        %v4231 = vsub.s32 1, %v4230
        %v4232 = vrot.slane %v4223, %v4231
        %v4233 = vlaneseq
        %v4234 = vshrl.u32 %v4233, 7
        %v4235 = vsub.s32 2, %v4234
        %v4236 = vrot.slane %v4223, %v4235
        %v4237 = vlaneseq
        %v4238 = vshrl.u32 %v4237, 7
        %v4239 = vsub.s32 3, %v4238
        %v4240 = vrot.slane %v4223, %v4239
        %v4245 = vmul.f32 %v4218, %v4228
        %v4246 = vmul.f32 %v4219, %v4232
        %v4247 = vmul.f32 %v4220, %v4236
        %v4248 = vmul.f32 %v4221, %v4240
        %v4249 = vsel %vm4066, %v4245, 0.0
        %v4250 = vsel %vm4066, %v4246, 0.0
        %v4251 = vadd.f32 %v4249, %v4250
        %v4252 = vsel %vm4066, %v4247, 0.0
        %v4253 = vadd.f32 %v4251, %v4252
        %v4254 = vsel %vm4066, %v4248, 0.0
        %v4255 = vadd.f32 %v4253, %v4254
        %4256 = vadd.xlane.f32.xlu0 %v4255
        %v4257 = vpop.xlane.xlu0 %4256
        %v4258 = vadd.f32 %v4222, %v4257
        %vm4259 = vcmask 3072
        %4260 = vst.msk [vmem:[%s9] sm:$0xf] %vm4259, %v4258
        // Predicated region
        $region93: #{disc_high_fc_forward.1} parent=55 // pred_check
          %p4261 = pneg %p247
        $region94: #{disc_high_fc_forward.1} parent=55 // pred_check_branch
          %4263 = sbr.rel (%p4261) target = $region96
        $region95: #{disc_high_fc_forward.1} parent=55 // pred_region
          _
        $region96: #{disc_high_fc_forward.1} parent=55 // pred_fallthru
          _
        // Predicated region
        $region97: #{disc_high_fc_forward.1} parent=55 // pred_check
          %p4264 = pneg %p247
        $region98: #{disc_high_fc_forward.1} parent=55 // pred_check_branch
          %4266 = sbr.rel (%p4264) target = $region100
        $region99: #{disc_high_fc_forward.1} parent=55 // pred_region
          _
        $region100: #{disc_high_fc_forward.1} parent=55 // pred_fallthru
          _
      $region56: #{disc_high_fc_forward.1} parent=5 // pred_fallthru
        _
      %p4267 = scmp.le.s32.totalorder 2, %s20
      // Predicated region
      $region101: #{disc_high_fc_forward.1} parent=5 // pred_check
        %p4268 = pneg %p4267
      $region102: #{disc_high_fc_forward.1} parent=5 // pred_check_branch
        %4270 = sbr.rel (%p4268) target = $region104
      $region103: #{disc_high_fc_forward.1} parent=5 // pred_region
        %s4271 = ssub.s32 %s20, 2
      $region104: #{disc_high_fc_forward.1} parent=5 // pred_fallthru
        _
    $region6: #{disc_high_fc_forward.1} parent=1 // loop_footer
      %s24 = sadd.s32 1, %s20
    $region7: #{disc_high_fc_forward.1} parent=1 // loop_footer_branch
      %19 = sbr.rel target = $region3
    $region8: #{disc_high_fc_forward.1} parent=1 // loop_exit
      _
    %4272 = vsyncpa [#allocation5], 1
    %s4273 = scalar_lea.sflag [#allocation5], 1
    %4274 = vsyncpa %s4273, 1
    %4275 = vsyncpa [#allocation7], 1
    %4276 = vsyncpa [#allocation10], 1

</llo_original>
